<compile_context>
chip_gen: v7x
topology: tpu7x:2x2x1
jax: 0.10.0
libtpu: 0.0.40
codegen_flags: <defaults>
</compile_context>

<pallas_src>
import functools

import jax
import jax.numpy as jnp
from jax.experimental import pallas as pl
from jax.experimental.pallas import tpu as pltpu

KW = 4             # kernel_size = 4
PAD = 2            # int(ceil((4 - 1) / 2))
LEAKY = 0.2        # LeakyReLU negative slope
BN_EPS = 1e-5      # nn.BatchNorm2d default eps

MAX_TM = 512       # rows (N*Ho*Wo) tile, multiple of 16 (bf16 sublane packing)
MAX_TK = 1024      # reduction (kh*kw*Cin) tile
MAX_TN = 512       # output-channel tile (full padded Cout -> lane dense)
VMEM_LIMIT = 48 * 1024 * 1024   # fits v7x 64 MiB physical with headroom


def _round_up(x, m):
    return (x + m - 1) // m * m


# ----------------------------- Pallas kernel --------------------------------

def _conv_kernel(p_ref, w_ref, b_ref, o_ref, *rest,
                 alpha, m_valid, tm, tk, nk, with_stats):
    """Tiled matmul with K-reduction accumulator.

    out = [leaky_relu](patches @ W + bias); optionally also emits per-tile
    per-channel (sum, sum_of_squares) partials for BatchNorm.
    """
    if with_stats:
        stats_ref, acc_ref = rest
    else:
        (acc_ref,) = rest

    # program_id / num_programs only at top level (never inside pl.when).
    ii = pl.program_id(0)
    kk = pl.program_id(2)
    last_k = pl.num_programs(2) - 1

    @pl.when(kk == 0)
    def _():
        acc_ref[...] = jnp.zeros_like(acc_ref)

    # K-resident weight strip: slice the current K tile in-kernel.
    if nk == 1:
        w = w_ref[...]
    else:
        w = w_ref[pl.ds(kk * tk, tk), :]
    acc_ref[...] += jnp.dot(p_ref[...], w, preferred_element_type=jnp.float32)

    if with_stats:
        row = ii * tm + jax.lax.broadcasted_iota(jnp.int32, acc_ref.shape, 0)
        row_ok = row < m_valid        # mask padded rows out of the statistics

    @pl.when(kk == last_k)
    def _():
        acc = acc_ref[...] + b_ref[...]                 # (TM,TN) + (1,TN)
        if alpha != 1.0:                                # static guard
            acc = jnp.where(acc >= 0.0, acc, alpha * acc)
        o_ref[...] = acc.astype(o_ref.dtype)
        if with_stats:
            a = jnp.where(row_ok, acc, 0.0)
            s1 = jnp.sum(a, axis=0, keepdims=True)      # (1, TN)
            s2 = jnp.sum(a * a, axis=0, keepdims=True)  # (1, TN)
            stats_ref[...] = jnp.concatenate([s1, s2], axis=0)[None]


# ------------------------------- JAX glue ------------------------------------

def _im2col(x_nhwc, stride):
    """Extract 4x4 patches (bf16); flattened ordering is (kh, kw, cin)."""
    n, h, w, c = x_nhwc.shape
    xb = x_nhwc.astype(jnp.bfloat16)
    xp = jnp.pad(xb, ((0, 0), (PAD, PAD), (PAD, PAD), (0, 0)))
    ho = (h + 2 * PAD - KW) // stride + 1
    wo = (w + 2 * PAD - KW) // stride + 1
    cols = []
    for i in range(KW):
        for j in range(KW):
            cols.append(xp[:, i:i + stride * ho:stride, j:j + stride * wo:stride, :])
    patches = jnp.stack(cols, axis=3)                    # (N, Ho, Wo, 16, C)
    return patches.reshape(n * ho * wo, KW * KW * c), ho, wo


def _conv_layer(x_nhwc, pending, w, b, stride, alpha, with_stats, out_dtype):
    n = x_nhwc.shape[0]
    if pending is not None:
        # Fused BatchNorm (scale/shift) + LeakyReLU of the PREVIOUS layer,
        # applied before spatial zero-padding so padding stays exactly zero.
        scale, shift = pending
        xf = x_nhwc.astype(jnp.float32) * scale + shift
        x_nhwc = jnp.where(xf >= 0.0, xf, LEAKY * xf)

    patches, ho, wo = _im2col(x_nhwc, stride)
    m, k = patches.shape
    cin, cout = w.shape[2], w.shape[3]

    # --- tile sizes ----------------------------------------------------------
    if _round_up(m, 16) > MAX_TM:
        tm = MAX_TM
    else:
        tm = _round_up(m, 16)
        if m >= 256:                 # keep >=2 row tiles so both v7x TCs get work
            tm = _round_up((m + 1) // 2, 16)
    m_pad = _round_up(m, tm)

    if k <= MAX_TK:                  # no K padding: block dim == full array dim
        tk, k_pad = k, k
    else:
        tk = MAX_TK
        k_pad = _round_up(k, tk)
    nk = k_pad // tk

    n_pad = _round_up(cout, 128)     # lane-dense stores
    tn = n_pad if n_pad <= MAX_TN else MAX_TN
    n_pad = _round_up(n_pad, tn)

    # TODO(synk): the row-pad of the patch matrix is an extra XLA pass; a
    # ragged last M tile handled purely by the in-kernel mask would avoid it.
    p2d = jnp.pad(patches, ((0, m_pad - m), (0, k_pad - k)))              # bf16
    w2d = jnp.pad(w.reshape(KW * KW * cin, cout).astype(jnp.bfloat16),
                  ((0, k_pad - k), (0, n_pad - cout)))
    b2d = jnp.pad(b.astype(jnp.float32), (0, n_pad - cout)).reshape(1, n_pad)

    grid = (m_pad // tm, n_pad // tn, nk)
    in_specs = [
        pl.BlockSpec((tm, tk), lambda i, j, kk: (i, kk)),
        pl.BlockSpec((k_pad, tn), lambda i, j, kk: (0, j)),  # K-resident strip
        pl.BlockSpec((1, tn), lambda i, j, kk: (0, j)),
    ]
    out_shape = [jax.ShapeDtypeStruct((m_pad, n_pad), out_dtype)]
    out_specs = [pl.BlockSpec((tm, tn), lambda i, j, kk: (i, j))]
    if with_stats:
        out_shape.append(jax.ShapeDtypeStruct((grid[0], 2, n_pad), jnp.float32))
        out_specs.append(pl.BlockSpec((1, 2, tn), lambda i, j, kk: (i, 0, j)))

    res = pl.pallas_call(
        functools.partial(_conv_kernel, alpha=alpha, m_valid=m, tm=tm, tk=tk,
                          nk=nk, with_stats=with_stats),
        out_shape=tuple(out_shape),
        grid=grid,
        in_specs=in_specs,
        out_specs=tuple(out_specs),
        scratch_shapes=[pltpu.VMEM((tm, tn), jnp.float32)],
        compiler_params=pltpu.CompilerParams(
            dimension_semantics=("parallel", "parallel", "arbitrary"),
            vmem_limit_bytes=VMEM_LIMIT),
    )(p2d, w2d, b2d)

    y_pad = res[0]
    stats = res[1] if with_stats else None
    return y_pad, stats, (n, ho, wo, cout, m)


def _bn_scale_shift(stats, gamma, beta, m, cout):
    """Fold per-tile (sum, sum_sq) partials into training-mode BatchNorm
    (scale, shift); applied (with LeakyReLU) in the next layer's glue."""
    ssum = jnp.sum(stats[:, 0, :cout], axis=0)
    ssq = jnp.sum(stats[:, 1, :cout], axis=0)
    mean = ssum / float(m)
    var = jnp.maximum(ssq / float(m) - mean * mean, 0.0)   # biased variance
    inv = jax.lax.rsqrt(var + BN_EPS)
    scale = gamma.astype(jnp.float32) * inv
    shift = beta.astype(jnp.float32) - mean * scale
    return scale, shift


# ------------------------ parameter init / forward ---------------------------

def init_params(key, input_nc, ndf=64, n_layers=3):
    """Deterministic synthetic params; layer plan mirrors NLayerDiscriminator."""
    plan = [(input_nc, ndf, 2, False, True)]              # (cin,cout,stride,bn,act)
    nf_mult = 1
    for n in range(1, n_layers):
        nf_prev, nf_mult = nf_mult, min(2 ** n, 8)
        plan.append((ndf * nf_prev, ndf * nf_mult, 2, True, True))
    nf_prev, nf_mult = nf_mult, min(2 ** n_layers, 8)
    plan.append((ndf * nf_prev, ndf * nf_mult, 1, True, True))
    plan.append((ndf * nf_mult, 1, 1, False, False))       # final conv, no act

    params = []
    for (cin, cout, stride, use_bn, act) in plan:
        key, kw_, kb_ = jax.random.split(key, 3)
        params.append(dict(
            w=0.02 * jax.random.normal(kw_, (KW, KW, cin, cout), jnp.float32),
            b=0.02 * jax.random.normal(kb_, (cout,), jnp.float32),
            gamma=jnp.ones((cout,), jnp.float32) if use_bn else None,
            beta=jnp.zeros((cout,), jnp.float32) if use_bn else None,
            stride=stride, use_bn=use_bn, act=act))
    return params


def nlayer_discriminator(x_nchw, params):
    # NCHW in / NCHW out; NHWC internally.
    x = jnp.transpose(x_nchw, (0, 2, 3, 1)).astype(jnp.float32)
    pending = None                       # deferred BN scale/shift (+ LeakyReLU)
    n_total = len(params)
    for idx, p in enumerate(params):
        is_final = idx == n_total - 1
        with_stats = p["use_bn"]
        alpha = LEAKY if (p["act"] and not with_stats) else 1.0
        out_dtype = jnp.float32 if is_final else jnp.bfloat16
        y_pad, stats, (n, ho, wo, cout, m) = _conv_layer(
            x, pending, p["w"], p["b"], p["stride"], alpha, with_stats, out_dtype)
        pending = (_bn_scale_shift(stats, p["gamma"], p["beta"], m, cout)
                   if with_stats else None)
        x = y_pad[:m, :cout].reshape(n, ho, wo, cout)
    return jnp.transpose(x, (0, 3, 1, 2))


if __name__ == "__main__":
    key = jax.random.PRNGKey(0)
    kx, kp = jax.random.split(key)
    N, C, H, W = 2, 4, 16, 16
    x = jax.random.normal(kx, (N, C, H, W), jnp.float32)
    params = init_params(kp, input_nc=C, ndf=8, n_layers=3)

    out = jax.jit(lambda a: nlayer_discriminator(a, params))(x)
    out = jax.block_until_ready(out)
    # 16 -> 9 -> 5 -> 3 (stride 2) -> 4 -> 5 (stride 1), 1 output channel
    assert out.shape == (N, 1, 5, 5), out.shape
    print("KERNEL_OK")
</pallas_src>

<mosaic_0001>
module attributes {stable_mosaic.version = 11 : i64} {
  func.func @_conv_kernel(%arg0: i32, %arg1: i32, %arg2: i32, %arg3: memref<176x64xbf16, #tpu.memory_space<vmem>>, %arg4: memref<64x128xbf16, #tpu.memory_space<vmem>>, %arg5: memref<1x128xf32, #tpu.memory_space<vmem>>, %arg6: memref<176x128xbf16, #tpu.memory_space<vmem>>, %arg7: memref<176x128xf32, #tpu.memory_space<vmem>>) attributes {dimension_semantics = [#tpu.dimension_semantics<parallel>, #tpu.dimension_semantics<parallel>, #tpu.dimension_semantics<arbitrary>], iteration_bounds = array<i64: 1, 1, 1>, scalar_prefetch = 0 : i64, scratch_operands = 1 : i64, tpu.core_type = #tpu.core_type<tc>, window_params = [{transform_indices = @transform_0, window_bounds = array<i64: 176, 64>}, {transform_indices = @transform_1, window_bounds = array<i64: 64, 128>}, {transform_indices = @transform_2, window_bounds = array<i64: 1, 128>}, {transform_indices = @transform_3, window_bounds = array<i64: 176, 128>}]} {
    %c0_i32 = arith.constant 0 : i32
    %0 = arith.cmpi eq, %arg2, %c0_i32 : i32
    %1 = arith.extui %0 : i1 to i32
    %c0_i32_0 = arith.constant 0 : i32
    %2 = arith.cmpi ne, %1, %c0_i32_0 : i32
    scf.if %2 {
      %cst_10 = arith.constant 0.000000e+00 : f32
      %12 = vector.broadcast %cst_10 : f32 to vector<176x128xf32>
      %c0_11 = arith.constant 0 : index
      %c0_12 = arith.constant 0 : index
      %13 = vector.load %arg7[%c0_11, %c0_12] : memref<176x128xf32, #tpu.memory_space<vmem>>, vector<176x128xf32>
      tpu.vector_store %arg7[%c0_11, %c0_12], %12 {strides = array<i32>} : memref<176x128xf32, #tpu.memory_space<vmem>>, vector<176x128xf32>,
    } else {
    }
    %c0 = arith.constant 0 : index
    %c0_1 = arith.constant 0 : index
    %3 = vector.load %arg4[%c0, %c0_1] : memref<64x128xbf16, #tpu.memory_space<vmem>>, vector<64x128xbf16>
    %c0_2 = arith.constant 0 : index
    %c0_3 = arith.constant 0 : index
    %4 = vector.load %arg7[%c0_2, %c0_3] : memref<176x128xf32, #tpu.memory_space<vmem>>, vector<176x128xf32>
    %c0_4 = arith.constant 0 : index
    %c0_5 = arith.constant 0 : index
    %5 = vector.load %arg3[%c0_4, %c0_5] : memref<176x64xbf16, #tpu.memory_space<vmem>>, vector<176x64xbf16>
    %cst = arith.constant dense<0.000000e+00> : vector<176x128xf32>
    %6 = tpu.matmul %5, %3, %cst {dimension_numbers = #tpu.dot_dimension_numbers<[1], [0], [0], [1], [0, 0, 1, 1], [], []>} : vector<176x64xbf16>, vector<64x128xbf16>, vector<176x128xf32> -> vector<176x128xf32>
    %7 = arith.addf %4, %6 : vector<176x128xf32>
    %c0_6 = arith.constant 0 : index
    %c0_7 = arith.constant 0 : index
    %8 = vector.load %arg7[%c0_6, %c0_7] : memref<176x128xf32, #tpu.memory_space<vmem>>, vector<176x128xf32>
    tpu.vector_store %arg7[%c0_6, %c0_7], %7 {strides = array<i32>} : memref<176x128xf32, #tpu.memory_space<vmem>>, vector<176x128xf32>,
    %c0_i32_8 = arith.constant 0 : i32
    %9 = arith.cmpi eq, %arg2, %c0_i32_8 : i32
    %10 = arith.extui %9 : i1 to i32
    %c0_i32_9 = arith.constant 0 : i32
    %11 = arith.cmpi ne, %10, %c0_i32_9 : i32
    scf.if %11 {
      %c0_10 = arith.constant 0 : index
      %c0_11 = arith.constant 0 : index
      %12 = vector.load %arg7[%c0_10, %c0_11] : memref<176x128xf32, #tpu.memory_space<vmem>>, vector<176x128xf32>
      %c0_12 = arith.constant 0 : index
      %c0_13 = arith.constant 0 : index
      %13 = vector.load %arg5[%c0_12, %c0_13] : memref<1x128xf32, #tpu.memory_space<vmem>>, vector<1x128xf32>
      %14 = vector.broadcast %13 : vector<1x128xf32> to vector<176x128xf32>
      %15 = arith.addf %12, %14 : vector<176x128xf32>
      %cst_14 = arith.constant 0.000000e+00 : f32
      %16 = vector.broadcast %cst_14 : f32 to vector<176x128xf32>
      %17 = arith.cmpf oge, %15, %16 : vector<176x128xf32>
      %cst_15 = arith.constant 2.000000e-01 : f32
      %18 = vector.broadcast %cst_15 : f32 to vector<176x128xf32>
      %19 = arith.mulf %18, %15 : vector<176x128xf32>
      %20 = arith.select %17, %15, %19 : vector<176x128xi1>, vector<176x128xf32>
      %21 = arith.truncf %20 : vector<176x128xf32> to vector<176x128xbf16>
      %c0_16 = arith.constant 0 : index
      %c0_17 = arith.constant 0 : index
      %22 = vector.load %arg6[%c0_16, %c0_17] : memref<176x128xbf16, #tpu.memory_space<vmem>>, vector<176x128xbf16>
      tpu.vector_store %arg6[%c0_16, %c0_17], %21 {strides = array<i32>} : memref<176x128xbf16, #tpu.memory_space<vmem>>, vector<176x128xbf16>,
    } else {
    }
    return
  }
  func.func @transform_0(%arg0: i32, %arg1: i32, %arg2: i32) -> (i32, i32) {
    %c0_i32 = arith.constant 0 : i32
    return %arg0, %arg2 : i32, i32
  }
  func.func @transform_1(%arg0: i32, %arg1: i32, %arg2: i32) -> (i32, i32) {
    %c0_i32 = arith.constant 0 : i32
    %c0_i32_0 = arith.constant 0 : i32
    return %c0_i32, %arg1 : i32, i32
  }
  func.func @transform_2(%arg0: i32, %arg1: i32, %arg2: i32) -> (i32, i32) {
    %c0_i32 = arith.constant 0 : i32
    %c0_i32_0 = arith.constant 0 : i32
    return %c0_i32, %arg1 : i32, i32
  }
  func.func @transform_3(%arg0: i32, %arg1: i32, %arg2: i32) -> (i32, i32) {
    %c0_i32 = arith.constant 0 : i32
    return %arg0, %arg1 : i32, i32
  }
}

module attributes {stable_mosaic.version = 11 : i64} {
  func.func @_conv_kernel(%arg0: i32, %arg1: i32, %arg2: i32, %arg3: memref<64x128xbf16, #tpu.memory_space<vmem>>, %arg4: memref<128x128xbf16, #tpu.memory_space<vmem>>, %arg5: memref<1x128xf32, #tpu.memory_space<vmem>>, %arg6: memref<64x128xbf16, #tpu.memory_space<vmem>>, %arg7: memref<1x2x128xf32, #tpu.memory_space<vmem>>, %arg8: memref<64x128xf32, #tpu.memory_space<vmem>>) attributes {dimension_semantics = [#tpu.dimension_semantics<parallel>, #tpu.dimension_semantics<parallel>, #tpu.dimension_semantics<arbitrary>], iteration_bounds = array<i64: 1, 1, 1>, scalar_prefetch = 0 : i64, scratch_operands = 1 : i64, tpu.core_type = #tpu.core_type<tc>, window_params = [{transform_indices = @transform_0, window_bounds = array<i64: 64, 128>}, {transform_indices = @transform_1, window_bounds = array<i64: 128, 128>}, {transform_indices = @transform_2, window_bounds = array<i64: 1, 128>}, {transform_indices = @transform_3, window_bounds = array<i64: 64, 128>}, {transform_indices = @transform_4, window_bounds = array<i64: 1, 2, 128>}]} {
    %c0_i32 = arith.constant 0 : i32
    %0 = arith.cmpi eq, %arg2, %c0_i32 : i32
    %1 = arith.extui %0 : i1 to i32
    %c0_i32_0 = arith.constant 0 : i32
    %2 = arith.cmpi ne, %1, %c0_i32_0 : i32
    scf.if %2 {
      %cst_10 = arith.constant 0.000000e+00 : f32
      %18 = vector.broadcast %cst_10 : f32 to vector<64x128xf32>
      %c0_11 = arith.constant 0 : index
      %c0_12 = arith.constant 0 : index
      %19 = vector.load %arg8[%c0_11, %c0_12] : memref<64x128xf32, #tpu.memory_space<vmem>>, vector<64x128xf32>
      tpu.vector_store %arg8[%c0_11, %c0_12], %18 {strides = array<i32>} : memref<64x128xf32, #tpu.memory_space<vmem>>, vector<64x128xf32>,
    } else {
    }
    %c0 = arith.constant 0 : index
    %c0_1 = arith.constant 0 : index
    %3 = vector.load %arg4[%c0, %c0_1] : memref<128x128xbf16, #tpu.memory_space<vmem>>, vector<128x128xbf16>
    %c0_2 = arith.constant 0 : index
    %c0_3 = arith.constant 0 : index
    %4 = vector.load %arg8[%c0_2, %c0_3] : memref<64x128xf32, #tpu.memory_space<vmem>>, vector<64x128xf32>
    %c0_4 = arith.constant 0 : index
    %c0_5 = arith.constant 0 : index
    %5 = vector.load %arg3[%c0_4, %c0_5] : memref<64x128xbf16, #tpu.memory_space<vmem>>, vector<64x128xbf16>
    %cst = arith.constant dense<0.000000e+00> : vector<64x128xf32>
    %6 = tpu.matmul %5, %3, %cst {dimension_numbers = #tpu.dot_dimension_numbers<[1], [0], [0], [1], [0, 0, 1, 1], [], []>} : vector<64x128xbf16>, vector<128x128xbf16>, vector<64x128xf32> -> vector<64x128xf32>
    %7 = arith.addf %4, %6 : vector<64x128xf32>
    %c0_6 = arith.constant 0 : index
    %c0_7 = arith.constant 0 : index
    %8 = vector.load %arg8[%c0_6, %c0_7] : memref<64x128xf32, #tpu.memory_space<vmem>>, vector<64x128xf32>
    tpu.vector_store %arg8[%c0_6, %c0_7], %7 {strides = array<i32>} : memref<64x128xf32, #tpu.memory_space<vmem>>, vector<64x128xf32>,
    %c64_i32 = arith.constant 64 : i32
    %9 = arith.muli %arg0, %c64_i32 : i32
    %10 = tpu.iota {dimensions = array<i32: 0>} : vector<64x128xi32>
    %11 = vector.broadcast %9 : i32 to vector<64x128xi32>
    %12 = arith.addi %11, %10 : vector<64x128xi32>
    %c50_i32 = arith.constant 50 : i32
    %13 = vector.broadcast %c50_i32 : i32 to vector<64x128xi32>
    %14 = arith.cmpi slt, %12, %13 : vector<64x128xi32>
    %c0_i32_8 = arith.constant 0 : i32
    %15 = arith.cmpi eq, %arg2, %c0_i32_8 : i32
    %16 = arith.extui %15 : i1 to i32
    %c0_i32_9 = arith.constant 0 : i32
    %17 = arith.cmpi ne, %16, %c0_i32_9 : i32
    scf.if %17 {
      %c0_10 = arith.constant 0 : index
      %c0_11 = arith.constant 0 : index
      %18 = vector.load %arg8[%c0_10, %c0_11] : memref<64x128xf32, #tpu.memory_space<vmem>>, vector<64x128xf32>
      %c0_12 = arith.constant 0 : index
      %c0_13 = arith.constant 0 : index
      %19 = vector.load %arg5[%c0_12, %c0_13] : memref<1x128xf32, #tpu.memory_space<vmem>>, vector<1x128xf32>
      %20 = vector.broadcast %19 : vector<1x128xf32> to vector<64x128xf32>
      %21 = arith.addf %18, %20 : vector<64x128xf32>
      %22 = arith.truncf %21 : vector<64x128xf32> to vector<64x128xbf16>
      %c0_14 = arith.constant 0 : index
      %c0_15 = arith.constant 0 : index
      %23 = vector.load %arg6[%c0_14, %c0_15] : memref<64x128xbf16, #tpu.memory_space<vmem>>, vector<64x128xbf16>
      tpu.vector_store %arg6[%c0_14, %c0_15], %22 {strides = array<i32>} : memref<64x128xbf16, #tpu.memory_space<vmem>>, vector<64x128xbf16>,
      %cst_16 = arith.constant 0.000000e+00 : f32
      %24 = vector.broadcast %cst_16 : f32 to vector<64x128xf32>
      %25 = arith.select %14, %21, %24 : vector<64x128xi1>, vector<64x128xf32>
      %cst_17 = arith.constant dense<0.000000e+00> : vector<128xf32>
      %26 = vector.multi_reduction <add>, %25, %cst_17 [0] : vector<64x128xf32> to vector<128xf32>
      %27 = vector.shape_cast %26 : vector<128xf32> to vector<1x128xf32>
      %28 = arith.mulf %25, %25 : vector<64x128xf32>
      %cst_18 = arith.constant dense<0.000000e+00> : vector<128xf32>
      %29 = vector.multi_reduction <add>, %28, %cst_18 [0] : vector<64x128xf32> to vector<128xf32>
      %30 = vector.shape_cast %29 : vector<128xf32> to vector<1x128xf32>
      %31 = tpu.concatenate %27, %30 in 0 : vector<1x128xf32>, vector<1x128xf32> -> vector<2x128xf32>
      %32 = vector.shape_cast %31 : vector<2x128xf32> to vector<1x2x128xf32>
      %c0_19 = arith.constant 0 : index
      %c0_20 = arith.constant 0 : index
      %c0_21 = arith.constant 0 : index
      %33 = vector.load %arg7[%c0_19, %c0_20, %c0_21] : memref<1x2x128xf32, #tpu.memory_space<vmem>>, vector<1x2x128xf32>
      tpu.vector_store %arg7[%c0_19, %c0_20, %c0_21], %32 {strides = array<i32>} : memref<1x2x128xf32, #tpu.memory_space<vmem>>, vector<1x2x128xf32>,
    } else {
    }
    return
  }
  func.func @transform_0(%arg0: i32, %arg1: i32, %arg2: i32) -> (i32, i32) {
    %c0_i32 = arith.constant 0 : i32
    return %arg0, %arg2 : i32, i32
  }
  func.func @transform_1(%arg0: i32, %arg1: i32, %arg2: i32) -> (i32, i32) {
    %c0_i32 = arith.constant 0 : i32
    %c0_i32_0 = arith.constant 0 : i32
    return %c0_i32, %arg1 : i32, i32
  }
  func.func @transform_2(%arg0: i32, %arg1: i32, %arg2: i32) -> (i32, i32) {
    %c0_i32 = arith.constant 0 : i32
    %c0_i32_0 = arith.constant 0 : i32
    return %c0_i32, %arg1 : i32, i32
  }
  func.func @transform_3(%arg0: i32, %arg1: i32, %arg2: i32) -> (i32, i32) {
    %c0_i32 = arith.constant 0 : i32
    return %arg0, %arg1 : i32, i32
  }
  func.func @transform_4(%arg0: i32, %arg1: i32, %arg2: i32) -> (i32, i32, i32) {
    %c0_i32 = arith.constant 0 : i32
    %c0_i32_0 = arith.constant 0 : i32
    return %arg0, %c0_i32, %arg1 : i32, i32, i32
  }
}

module attributes {stable_mosaic.version = 11 : i64} {
  func.func @_conv_kernel(%arg0: i32, %arg1: i32, %arg2: i32, %arg3: memref<32x256xbf16, #tpu.memory_space<vmem>>, %arg4: memref<256x128xbf16, #tpu.memory_space<vmem>>, %arg5: memref<1x128xf32, #tpu.memory_space<vmem>>, %arg6: memref<32x128xbf16, #tpu.memory_space<vmem>>, %arg7: memref<1x2x128xf32, #tpu.memory_space<vmem>>, %arg8: memref<32x128xf32, #tpu.memory_space<vmem>>) attributes {dimension_semantics = [#tpu.dimension_semantics<parallel>, #tpu.dimension_semantics<parallel>, #tpu.dimension_semantics<arbitrary>], iteration_bounds = array<i64: 1, 1, 1>, scalar_prefetch = 0 : i64, scratch_operands = 1 : i64, tpu.core_type = #tpu.core_type<tc>, window_params = [{transform_indices = @transform_0, window_bounds = array<i64: 32, 256>}, {transform_indices = @transform_1, window_bounds = array<i64: 256, 128>}, {transform_indices = @transform_2, window_bounds = array<i64: 1, 128>}, {transform_indices = @transform_3, window_bounds = array<i64: 32, 128>}, {transform_indices = @transform_4, window_bounds = array<i64: 1, 2, 128>}]} {
    %c0_i32 = arith.constant 0 : i32
    %0 = arith.cmpi eq, %arg2, %c0_i32 : i32
    %1 = arith.extui %0 : i1 to i32
    %c0_i32_0 = arith.constant 0 : i32
    %2 = arith.cmpi ne, %1, %c0_i32_0 : i32
    scf.if %2 {
      %cst_10 = arith.constant 0.000000e+00 : f32
      %18 = vector.broadcast %cst_10 : f32 to vector<32x128xf32>
      %c0_11 = arith.constant 0 : index
      %c0_12 = arith.constant 0 : index
      %19 = vector.load %arg8[%c0_11, %c0_12] : memref<32x128xf32, #tpu.memory_space<vmem>>, vector<32x128xf32>
      tpu.vector_store %arg8[%c0_11, %c0_12], %18 {strides = array<i32>} : memref<32x128xf32, #tpu.memory_space<vmem>>, vector<32x128xf32>,
    } else {
    }
    %c0 = arith.constant 0 : index
    %c0_1 = arith.constant 0 : index
    %3 = vector.load %arg4[%c0, %c0_1] : memref<256x128xbf16, #tpu.memory_space<vmem>>, vector<256x128xbf16>
    %c0_2 = arith.constant 0 : index
    %c0_3 = arith.constant 0 : index
    %4 = vector.load %arg8[%c0_2, %c0_3] : memref<32x128xf32, #tpu.memory_space<vmem>>, vector<32x128xf32>
    %c0_4 = arith.constant 0 : index
    %c0_5 = arith.constant 0 : index
    %5 = vector.load %arg3[%c0_4, %c0_5] : memref<32x256xbf16, #tpu.memory_space<vmem>>, vector<32x256xbf16>
    %cst = arith.constant dense<0.000000e+00> : vector<32x128xf32>
    %6 = tpu.matmul %5, %3, %cst {dimension_numbers = #tpu.dot_dimension_numbers<[1], [0], [0], [1], [0, 0, 1, 1], [], []>} : vector<32x256xbf16>, vector<256x128xbf16>, vector<32x128xf32> -> vector<32x128xf32>
    %7 = arith.addf %4, %6 : vector<32x128xf32>
    %c0_6 = arith.constant 0 : index
    %c0_7 = arith.constant 0 : index
    %8 = vector.load %arg8[%c0_6, %c0_7] : memref<32x128xf32, #tpu.memory_space<vmem>>, vector<32x128xf32>
    tpu.vector_store %arg8[%c0_6, %c0_7], %7 {strides = array<i32>} : memref<32x128xf32, #tpu.memory_space<vmem>>, vector<32x128xf32>,
    %c32_i32 = arith.constant 32 : i32
    %9 = arith.muli %arg0, %c32_i32 : i32
    %10 = tpu.iota {dimensions = array<i32: 0>} : vector<32x128xi32>
    %11 = vector.broadcast %9 : i32 to vector<32x128xi32>
    %12 = arith.addi %11, %10 : vector<32x128xi32>
    %c18_i32 = arith.constant 18 : i32
    %13 = vector.broadcast %c18_i32 : i32 to vector<32x128xi32>
    %14 = arith.cmpi slt, %12, %13 : vector<32x128xi32>
    %c0_i32_8 = arith.constant 0 : i32
    %15 = arith.cmpi eq, %arg2, %c0_i32_8 : i32
    %16 = arith.extui %15 : i1 to i32
    %c0_i32_9 = arith.constant 0 : i32
    %17 = arith.cmpi ne, %16, %c0_i32_9 : i32
    scf.if %17 {
      %c0_10 = arith.constant 0 : index
      %c0_11 = arith.constant 0 : index
      %18 = vector.load %arg8[%c0_10, %c0_11] : memref<32x128xf32, #tpu.memory_space<vmem>>, vector<32x128xf32>
      %c0_12 = arith.constant 0 : index
      %c0_13 = arith.constant 0 : index
      %19 = vector.load %arg5[%c0_12, %c0_13] : memref<1x128xf32, #tpu.memory_space<vmem>>, vector<1x128xf32>
      %20 = vector.broadcast %19 : vector<1x128xf32> to vector<32x128xf32>
      %21 = arith.addf %18, %20 : vector<32x128xf32>
      %22 = arith.truncf %21 : vector<32x128xf32> to vector<32x128xbf16>
      %c0_14 = arith.constant 0 : index
      %c0_15 = arith.constant 0 : index
      %23 = vector.load %arg6[%c0_14, %c0_15] : memref<32x128xbf16, #tpu.memory_space<vmem>>, vector<32x128xbf16>
      tpu.vector_store %arg6[%c0_14, %c0_15], %22 {strides = array<i32>} : memref<32x128xbf16, #tpu.memory_space<vmem>>, vector<32x128xbf16>,
      %cst_16 = arith.constant 0.000000e+00 : f32
      %24 = vector.broadcast %cst_16 : f32 to vector<32x128xf32>
      %25 = arith.select %14, %21, %24 : vector<32x128xi1>, vector<32x128xf32>
      %cst_17 = arith.constant dense<0.000000e+00> : vector<128xf32>
      %26 = vector.multi_reduction <add>, %25, %cst_17 [0] : vector<32x128xf32> to vector<128xf32>
      %27 = vector.shape_cast %26 : vector<128xf32> to vector<1x128xf32>
      %28 = arith.mulf %25, %25 : vector<32x128xf32>
      %cst_18 = arith.constant dense<0.000000e+00> : vector<128xf32>
      %29 = vector.multi_reduction <add>, %28, %cst_18 [0] : vector<32x128xf32> to vector<128xf32>
      %30 = vector.shape_cast %29 : vector<128xf32> to vector<1x128xf32>
      %31 = tpu.concatenate %27, %30 in 0 : vector<1x128xf32>, vector<1x128xf32> -> vector<2x128xf32>
      %32 = vector.shape_cast %31 : vector<2x128xf32> to vector<1x2x128xf32>
      %c0_19 = arith.constant 0 : index
      %c0_20 = arith.constant 0 : index
      %c0_21 = arith.constant 0 : index
      %33 = vector.load %arg7[%c0_19, %c0_20, %c0_21] : memref<1x2x128xf32, #tpu.memory_space<vmem>>, vector<1x2x128xf32>
      tpu.vector_store %arg7[%c0_19, %c0_20, %c0_21], %32 {strides = array<i32>} : memref<1x2x128xf32, #tpu.memory_space<vmem>>, vector<1x2x128xf32>,
    } else {
    }
    return
  }
  func.func @transform_0(%arg0: i32, %arg1: i32, %arg2: i32) -> (i32, i32) {
    %c0_i32 = arith.constant 0 : i32
    return %arg0, %arg2 : i32, i32
  }
  func.func @transform_1(%arg0: i32, %arg1: i32, %arg2: i32) -> (i32, i32) {
    %c0_i32 = arith.constant 0 : i32
    %c0_i32_0 = arith.constant 0 : i32
    return %c0_i32, %arg1 : i32, i32
  }
  func.func @transform_2(%arg0: i32, %arg1: i32, %arg2: i32) -> (i32, i32) {
    %c0_i32 = arith.constant 0 : i32
    %c0_i32_0 = arith.constant 0 : i32
    return %c0_i32, %arg1 : i32, i32
  }
  func.func @transform_3(%arg0: i32, %arg1: i32, %arg2: i32) -> (i32, i32) {
    %c0_i32 = arith.constant 0 : i32
    return %arg0, %arg1 : i32, i32
  }
  func.func @transform_4(%arg0: i32, %arg1: i32, %arg2: i32) -> (i32, i32, i32) {
    %c0_i32 = arith.constant 0 : i32
    %c0_i32_0 = arith.constant 0 : i32
    return %arg0, %c0_i32, %arg1 : i32, i32, i32
  }
}

module attributes {stable_mosaic.version = 11 : i64} {
  func.func @_conv_kernel(%arg0: i32, %arg1: i32, %arg2: i32, %arg3: memref<32x512xbf16, #tpu.memory_space<vmem>>, %arg4: memref<512x128xbf16, #tpu.memory_space<vmem>>, %arg5: memref<1x128xf32, #tpu.memory_space<vmem>>, %arg6: memref<32x128xbf16, #tpu.memory_space<vmem>>, %arg7: memref<1x2x128xf32, #tpu.memory_space<vmem>>, %arg8: memref<32x128xf32, #tpu.memory_space<vmem>>) attributes {dimension_semantics = [#tpu.dimension_semantics<parallel>, #tpu.dimension_semantics<parallel>, #tpu.dimension_semantics<arbitrary>], iteration_bounds = array<i64: 1, 1, 1>, scalar_prefetch = 0 : i64, scratch_operands = 1 : i64, tpu.core_type = #tpu.core_type<tc>, window_params = [{transform_indices = @transform_0, window_bounds = array<i64: 32, 512>}, {transform_indices = @transform_1, window_bounds = array<i64: 512, 128>}, {transform_indices = @transform_2, window_bounds = array<i64: 1, 128>}, {transform_indices = @transform_3, window_bounds = array<i64: 32, 128>}, {transform_indices = @transform_4, window_bounds = array<i64: 1, 2, 128>}]} {
    %c0_i32 = arith.constant 0 : i32
    %0 = arith.cmpi eq, %arg2, %c0_i32 : i32
    %1 = arith.extui %0 : i1 to i32
    %c0_i32_0 = arith.constant 0 : i32
    %2 = arith.cmpi ne, %1, %c0_i32_0 : i32
    scf.if %2 {
      %cst_11 = arith.constant 0.000000e+00 : f32
      %18 = vector.broadcast %cst_11 : f32 to vector<32x128xf32>
      %c0_12 = arith.constant 0 : index
      %c0_13 = arith.constant 0 : index
      %19 = vector.load %arg8[%c0_12, %c0_13] : memref<32x128xf32, #tpu.memory_space<vmem>>, vector<32x128xf32>
      tpu.vector_store %arg8[%c0_12, %c0_13], %18 {strides = array<i32>} : memref<32x128xf32, #tpu.memory_space<vmem>>, vector<32x128xf32>,
    } else {
    }
    %c0 = arith.constant 0 : index
    %c0_1 = arith.constant 0 : index
    %3 = vector.load %arg4[%c0, %c0_1] : memref<512x128xbf16, #tpu.memory_space<vmem>>, vector<512x128xbf16>
    %c0_2 = arith.constant 0 : index
    %c0_3 = arith.constant 0 : index
    %4 = vector.load %arg8[%c0_2, %c0_3] : memref<32x128xf32, #tpu.memory_space<vmem>>, vector<32x128xf32>
    %c0_4 = arith.constant 0 : index
    %c0_5 = arith.constant 0 : index
    %5 = vector.load %arg3[%c0_4, %c0_5] : memref<32x512xbf16, #tpu.memory_space<vmem>>, vector<32x512xbf16>
    %cst = arith.constant dense<0.000000e+00> : vector<32x128xf32>
    %6 = tpu.matmul %5, %3, %cst {dimension_numbers = #tpu.dot_dimension_numbers<[1], [0], [0], [1], [0, 0, 1, 1], [], []>} : vector<32x512xbf16>, vector<512x128xbf16>, vector<32x128xf32> -> vector<32x128xf32>
    %7 = arith.addf %4, %6 : vector<32x128xf32>
    %c0_6 = arith.constant 0 : index
    %c0_7 = arith.constant 0 : index
    %8 = vector.load %arg8[%c0_6, %c0_7] : memref<32x128xf32, #tpu.memory_space<vmem>>, vector<32x128xf32>
    tpu.vector_store %arg8[%c0_6, %c0_7], %7 {strides = array<i32>} : memref<32x128xf32, #tpu.memory_space<vmem>>, vector<32x128xf32>,
    %c32_i32 = arith.constant 32 : i32
    %9 = arith.muli %arg0, %c32_i32 : i32
    %10 = tpu.iota {dimensions = array<i32: 0>} : vector<32x128xi32>
    %11 = vector.broadcast %9 : i32 to vector<32x128xi32>
    %12 = arith.addi %11, %10 : vector<32x128xi32>
    %c32_i32_8 = arith.constant 32 : i32
    %13 = vector.broadcast %c32_i32_8 : i32 to vector<32x128xi32>
    %14 = arith.cmpi slt, %12, %13 : vector<32x128xi32>
    %c0_i32_9 = arith.constant 0 : i32
    %15 = arith.cmpi eq, %arg2, %c0_i32_9 : i32
    %16 = arith.extui %15 : i1 to i32
    %c0_i32_10 = arith.constant 0 : i32
    %17 = arith.cmpi ne, %16, %c0_i32_10 : i32
    scf.if %17 {
      %c0_11 = arith.constant 0 : index
      %c0_12 = arith.constant 0 : index
      %18 = vector.load %arg8[%c0_11, %c0_12] : memref<32x128xf32, #tpu.memory_space<vmem>>, vector<32x128xf32>
      %c0_13 = arith.constant 0 : index
      %c0_14 = arith.constant 0 : index
      %19 = vector.load %arg5[%c0_13, %c0_14] : memref<1x128xf32, #tpu.memory_space<vmem>>, vector<1x128xf32>
      %20 = vector.broadcast %19 : vector<1x128xf32> to vector<32x128xf32>
      %21 = arith.addf %18, %20 : vector<32x128xf32>
      %22 = arith.truncf %21 : vector<32x128xf32> to vector<32x128xbf16>
      %c0_15 = arith.constant 0 : index
      %c0_16 = arith.constant 0 : index
      %23 = vector.load %arg6[%c0_15, %c0_16] : memref<32x128xbf16, #tpu.memory_space<vmem>>, vector<32x128xbf16>
      tpu.vector_store %arg6[%c0_15, %c0_16], %22 {strides = array<i32>} : memref<32x128xbf16, #tpu.memory_space<vmem>>, vector<32x128xbf16>,
      %cst_17 = arith.constant 0.000000e+00 : f32
      %24 = vector.broadcast %cst_17 : f32 to vector<32x128xf32>
      %25 = arith.select %14, %21, %24 : vector<32x128xi1>, vector<32x128xf32>
      %cst_18 = arith.constant dense<0.000000e+00> : vector<128xf32>
      %26 = vector.multi_reduction <add>, %25, %cst_18 [0] : vector<32x128xf32> to vector<128xf32>
      %27 = vector.shape_cast %26 : vector<128xf32> to vector<1x128xf32>
      %28 = arith.mulf %25, %25 : vector<32x128xf32>
      %cst_19 = arith.constant dense<0.000000e+00> : vector<128xf32>
      %29 = vector.multi_reduction <add>, %28, %cst_19 [0] : vector<32x128xf32> to vector<128xf32>
      %30 = vector.shape_cast %29 : vector<128xf32> to vector<1x128xf32>
      %31 = tpu.concatenate %27, %30 in 0 : vector<1x128xf32>, vector<1x128xf32> -> vector<2x128xf32>
      %32 = vector.shape_cast %31 : vector<2x128xf32> to vector<1x2x128xf32>
      %c0_20 = arith.constant 0 : index
      %c0_21 = arith.constant 0 : index
      %c0_22 = arith.constant 0 : index
      %33 = vector.load %arg7[%c0_20, %c0_21, %c0_22] : memref<1x2x128xf32, #tpu.memory_space<vmem>>, vector<1x2x128xf32>
      tpu.vector_store %arg7[%c0_20, %c0_21, %c0_22], %32 {strides = array<i32>} : memref<1x2x128xf32, #tpu.memory_space<vmem>>, vector<1x2x128xf32>,
    } else {
    }
    return
  }
  func.func @transform_0(%arg0: i32, %arg1: i32, %arg2: i32) -> (i32, i32) {
    %c0_i32 = arith.constant 0 : i32
    return %arg0, %arg2 : i32, i32
  }
  func.func @transform_1(%arg0: i32, %arg1: i32, %arg2: i32) -> (i32, i32) {
    %c0_i32 = arith.constant 0 : i32
    %c0_i32_0 = arith.constant 0 : i32
    return %c0_i32, %arg1 : i32, i32
  }
  func.func @transform_2(%arg0: i32, %arg1: i32, %arg2: i32) -> (i32, i32) {
    %c0_i32 = arith.constant 0 : i32
    %c0_i32_0 = arith.constant 0 : i32
    return %c0_i32, %arg1 : i32, i32
  }
  func.func @transform_3(%arg0: i32, %arg1: i32, %arg2: i32) -> (i32, i32) {
    %c0_i32 = arith.constant 0 : i32
    return %arg0, %arg1 : i32, i32
  }
  func.func @transform_4(%arg0: i32, %arg1: i32, %arg2: i32) -> (i32, i32, i32) {
    %c0_i32 = arith.constant 0 : i32
    %c0_i32_0 = arith.constant 0 : i32
    return %arg0, %c0_i32, %arg1 : i32, i32, i32
  }
}

module attributes {stable_mosaic.version = 11 : i64} {
  func.func @_conv_kernel(%arg0: i32, %arg1: i32, %arg2: i32, %arg3: memref<64x1024xbf16, #tpu.memory_space<vmem>>, %arg4: memref<1024x128xbf16, #tpu.memory_space<vmem>>, %arg5: memref<1x128xf32, #tpu.memory_space<vmem>>, %arg6: memref<64x128xf32, #tpu.memory_space<vmem>>, %arg7: memref<64x128xf32, #tpu.memory_space<vmem>>) attributes {dimension_semantics = [#tpu.dimension_semantics<parallel>, #tpu.dimension_semantics<parallel>, #tpu.dimension_semantics<arbitrary>], iteration_bounds = array<i64: 1, 1, 1>, scalar_prefetch = 0 : i64, scratch_operands = 1 : i64, tpu.core_type = #tpu.core_type<tc>, window_params = [{transform_indices = @transform_0, window_bounds = array<i64: 64, 1024>}, {transform_indices = @transform_1, window_bounds = array<i64: 1024, 128>}, {transform_indices = @transform_2, window_bounds = array<i64: 1, 128>}, {transform_indices = @transform_3, window_bounds = array<i64: 64, 128>}]} {
    %c0_i32 = arith.constant 0 : i32
    %0 = arith.cmpi eq, %arg2, %c0_i32 : i32
    %1 = arith.extui %0 : i1 to i32
    %c0_i32_0 = arith.constant 0 : i32
    %2 = arith.cmpi ne, %1, %c0_i32_0 : i32
    scf.if %2 {
      %cst_10 = arith.constant 0.000000e+00 : f32
      %12 = vector.broadcast %cst_10 : f32 to vector<64x128xf32>
      %c0_11 = arith.constant 0 : index
      %c0_12 = arith.constant 0 : index
      %13 = vector.load %arg7[%c0_11, %c0_12] : memref<64x128xf32, #tpu.memory_space<vmem>>, vector<64x128xf32>
      tpu.vector_store %arg7[%c0_11, %c0_12], %12 {strides = array<i32>} : memref<64x128xf32, #tpu.memory_space<vmem>>, vector<64x128xf32>,
    } else {
    }
    %c0 = arith.constant 0 : index
    %c0_1 = arith.constant 0 : index
    %3 = vector.load %arg4[%c0, %c0_1] : memref<1024x128xbf16, #tpu.memory_space<vmem>>, vector<1024x128xbf16>
    %c0_2 = arith.constant 0 : index
    %c0_3 = arith.constant 0 : index
    %4 = vector.load %arg7[%c0_2, %c0_3] : memref<64x128xf32, #tpu.memory_space<vmem>>, vector<64x128xf32>
    %c0_4 = arith.constant 0 : index
    %c0_5 = arith.constant 0 : index
    %5 = vector.load %arg3[%c0_4, %c0_5] : memref<64x1024xbf16, #tpu.memory_space<vmem>>, vector<64x1024xbf16>
    %cst = arith.constant dense<0.000000e+00> : vector<64x128xf32>
    %6 = tpu.matmul %5, %3, %cst {dimension_numbers = #tpu.dot_dimension_numbers<[1], [0], [0], [1], [0, 0, 1, 1], [], []>} : vector<64x1024xbf16>, vector<1024x128xbf16>, vector<64x128xf32> -> vector<64x128xf32>
    %7 = arith.addf %4, %6 : vector<64x128xf32>
    %c0_6 = arith.constant 0 : index
    %c0_7 = arith.constant 0 : index
    %8 = vector.load %arg7[%c0_6, %c0_7] : memref<64x128xf32, #tpu.memory_space<vmem>>, vector<64x128xf32>
    tpu.vector_store %arg7[%c0_6, %c0_7], %7 {strides = array<i32>} : memref<64x128xf32, #tpu.memory_space<vmem>>, vector<64x128xf32>,
    %c0_i32_8 = arith.constant 0 : i32
    %9 = arith.cmpi eq, %arg2, %c0_i32_8 : i32
    %10 = arith.extui %9 : i1 to i32
    %c0_i32_9 = arith.constant 0 : i32
    %11 = arith.cmpi ne, %10, %c0_i32_9 : i32
    scf.if %11 {
      %c0_10 = arith.constant 0 : index
      %c0_11 = arith.constant 0 : index
      %12 = vector.load %arg7[%c0_10, %c0_11] : memref<64x128xf32, #tpu.memory_space<vmem>>, vector<64x128xf32>
      %c0_12 = arith.constant 0 : index
      %c0_13 = arith.constant 0 : index
      %13 = vector.load %arg5[%c0_12, %c0_13] : memref<1x128xf32, #tpu.memory_space<vmem>>, vector<1x128xf32>
      %14 = vector.broadcast %13 : vector<1x128xf32> to vector<64x128xf32>
      %15 = arith.addf %12, %14 : vector<64x128xf32>
      %c0_14 = arith.constant 0 : index
      %c0_15 = arith.constant 0 : index
      %16 = vector.load %arg6[%c0_14, %c0_15] : memref<64x128xf32, #tpu.memory_space<vmem>>, vector<64x128xf32>
      tpu.vector_store %arg6[%c0_14, %c0_15], %15 {strides = array<i32>} : memref<64x128xf32, #tpu.memory_space<vmem>>, vector<64x128xf32>,
    } else {
    }
    return
  }
  func.func @transform_0(%arg0: i32, %arg1: i32, %arg2: i32) -> (i32, i32) {
    %c0_i32 = arith.constant 0 : i32
    return %arg0, %arg2 : i32, i32
  }
  func.func @transform_1(%arg0: i32, %arg1: i32, %arg2: i32) -> (i32, i32) {
    %c0_i32 = arith.constant 0 : i32
    %c0_i32_0 = arith.constant 0 : i32
    return %c0_i32, %arg1 : i32, i32
  }
  func.func @transform_2(%arg0: i32, %arg1: i32, %arg2: i32) -> (i32, i32) {
    %c0_i32 = arith.constant 0 : i32
    %c0_i32_0 = arith.constant 0 : i32
    return %c0_i32, %arg1 : i32, i32
  }
  func.func @transform_3(%arg0: i32, %arg1: i32, %arg2: i32) -> (i32, i32) {
    %c0_i32 = arith.constant 0 : i32
    return %arg0, %arg1 : i32, i32
  }
}

</mosaic_0001>

<llo_original>
// kernel: _lambda_.5
$region0: #{_lambda_.5}
  #allocation0 [shape = 'u32[]', space=smem, size = 0x4, offset = 0x4, fixed_abs, tag = 'smem constant byte address 0x4 - core index']
  #allocation1 [shape = 'u32[144,128]{1,0:T(1,128)}', space=vmem, size = 0x12000, scoped, tag = 'internal scratch']
  #allocation2 [shape = 'f32[176,128]{1,0:T(8,128)}', space=vmem, size = 0x16000, scoped, tag = 'scratch operand']
  %s0 = inlined_call_operand.vmem [shape: bf16[176,64], index: 0, kind: input, shape index: {}]
  %s1 = inlined_call_operand.vmem [shape: bf16[64,128], index: 1, kind: input, shape index: {}]
  %s2 = inlined_call_operand.vmem [shape: f32[1,128], index: 2, kind: input, shape index: {}]
  %s3 = inlined_call_operand.vmem [shape: bf16[176,128], index: 3, kind: output, shape index: {}]
  %s4 = sld [smem:[#allocation0]]
  $region30: #{_lambda_.5} parent=0
    _
  %s6 = ssub.s32 1, %s4
  %s7 = scalar_select 0, %s6, %s4
  // Predicated region
  $region2: #{_lambda_.5} parent=0 // pred_check
    _
  $region3: #{_lambda_.5} parent=0 // pred_check_branch
    %9 = sbr.rel (0) target = $region5
  $region4: #{_lambda_.5} parent=0 // pred_region
    _
  $region5: #{_lambda_.5} parent=0 // pred_fallthru
    _
  // Predicated region
  $region6: #{_lambda_.5} parent=0 // pred_check
    _
  $region7: #{_lambda_.5} parent=0 // pred_check_branch
    %11 = sbr.rel (0) target = $region9
  $region8: #{_lambda_.5} parent=0 // pred_region
    _
  $region9: #{_lambda_.5} parent=0 // pred_fallthru
    _
  // Predicated region
  $region10: #{_lambda_.5} parent=0 // pred_check
    _
  $region11: #{_lambda_.5} parent=0 // pred_check_branch
    %13 = sbr.rel (0) target = $region13
  $region12: #{_lambda_.5} parent=0 // pred_region
    _
  $region13: #{_lambda_.5} parent=0 // pred_fallthru
    _
  %p15 = scmp.eq.s32.totalorder 0, 0
  // Predicated region
  $region14: #{_lambda_.5} parent=0 // pred_check
    %p16 = pneg %p15
  $region15: #{_lambda_.5} parent=0 // pred_check_branch
    %18 = sbr.rel (%p16) target = $region17
  $region16: #{_lambda_.5} parent=0 // pred_region
    %19 = vst [vmem:[#allocation2] sm:$0xff] 0.0
    %20 = vst [vmem:[#allocation2 + $0x8] sm:$0xff] 0.0
    %21 = vst [vmem:[#allocation2 + $0x10] sm:$0xff] 0.0
    %22 = vst [vmem:[#allocation2 + $0x18] sm:$0xff] 0.0
    %23 = vst [vmem:[#allocation2 + $0x20] sm:$0xff] 0.0
    %24 = vst [vmem:[#allocation2 + $0x28] sm:$0xff] 0.0
    %25 = vst [vmem:[#allocation2 + $0x30] sm:$0xff] 0.0
    %26 = vst [vmem:[#allocation2 + $0x38] sm:$0xff] 0.0
    %27 = vst [vmem:[#allocation2 + $0x40] sm:$0xff] 0.0
    %28 = vst [vmem:[#allocation2 + $0x48] sm:$0xff] 0.0
    %29 = vst [vmem:[#allocation2 + $0x50] sm:$0xff] 0.0
    %30 = vst [vmem:[#allocation2 + $0x58] sm:$0xff] 0.0
    %31 = vst [vmem:[#allocation2 + $0x60] sm:$0xff] 0.0
    %32 = vst [vmem:[#allocation2 + $0x68] sm:$0xff] 0.0
    %33 = vst [vmem:[#allocation2 + $0x70] sm:$0xff] 0.0
    %34 = vst [vmem:[#allocation2 + $0x78] sm:$0xff] 0.0
    %35 = vst [vmem:[#allocation2 + $0x80] sm:$0xff] 0.0
    %36 = vst [vmem:[#allocation2 + $0x88] sm:$0xff] 0.0
    %37 = vst [vmem:[#allocation2 + $0x90] sm:$0xff] 0.0
    %38 = vst [vmem:[#allocation2 + $0x98] sm:$0xff] 0.0
    %39 = vst [vmem:[#allocation2 + $0xa0] sm:$0xff] 0.0
    %40 = vst [vmem:[#allocation2 + $0xa8] sm:$0xff] 0.0
  $region17: #{_lambda_.5} parent=0 // pred_fallthru
    _
  %v41 = vld [vmem:[%s1] sm:$0xf]
  %v42 = vld [vmem:[%s1 + $0x4] sm:$0xf]
  %v43 = vld [vmem:[%s1 + $0x8] sm:$0xf]
  %v44 = vld [vmem:[%s1 + $0xc] sm:$0xf]
  %v45 = vld [vmem:[%s1 + $0x10] sm:$0xf]
  %v46 = vld [vmem:[%s1 + $0x14] sm:$0xf]
  %v47 = vld [vmem:[%s1 + $0x18] sm:$0xf]
  %v48 = vld [vmem:[%s1 + $0x1c] sm:$0xf]
  %v49 = vld [vmem:[#allocation2] sm:$0xff]
  %v50 = vld [vmem:[#allocation2 + $0x8] sm:$0xff]
  %v51 = vld [vmem:[#allocation2 + $0x10] sm:$0xff]
  %v52 = vld [vmem:[#allocation2 + $0x18] sm:$0xff]
  %v53 = vld [vmem:[#allocation2 + $0x20] sm:$0xff]
  %v54 = vld [vmem:[#allocation2 + $0x28] sm:$0xff]
  %v55 = vld [vmem:[#allocation2 + $0x30] sm:$0xff]
  %v56 = vld [vmem:[#allocation2 + $0x38] sm:$0xff]
  %v57 = vld [vmem:[#allocation2 + $0x40] sm:$0xff]
  %v58 = vld [vmem:[#allocation2 + $0x48] sm:$0xff]
  %v59 = vld [vmem:[#allocation2 + $0x50] sm:$0xff]
  %v60 = vld [vmem:[#allocation2 + $0x58] sm:$0xff]
  %v61 = vld [vmem:[#allocation2 + $0x60] sm:$0xff]
  %v62 = vld [vmem:[#allocation2 + $0x68] sm:$0xff]
  %v63 = vld [vmem:[#allocation2 + $0x70] sm:$0xff]
  %v64 = vld [vmem:[#allocation2 + $0x78] sm:$0xff]
  %v65 = vld [vmem:[#allocation2 + $0x80] sm:$0xff]
  %v66 = vld [vmem:[#allocation2 + $0x88] sm:$0xff]
  %v67 = vld [vmem:[#allocation2 + $0x90] sm:$0xff]
  %v68 = vld [vmem:[#allocation2 + $0x98] sm:$0xff]
  %v69 = vld [vmem:[#allocation2 + $0xa0] sm:$0xff]
  %v70 = vld [vmem:[#allocation2 + $0xa8] sm:$0xff]
  %v71 = vld [vmem:[%s0] sm:$0xf]
  %v72 = vld [vmem:[%s0 + $0x4] sm:$0xf]
  %v73 = vld [vmem:[%s0 + $0x8] sm:$0xf]
  %v74 = vld [vmem:[%s0 + $0xc] sm:$0xf]
  %v75 = vld [vmem:[%s0 + $0x10] sm:$0xf]
  %v76 = vld [vmem:[%s0 + $0x14] sm:$0xf]
  %v77 = vld [vmem:[%s0 + $0x18] sm:$0xf]
  %v78 = vld [vmem:[%s0 + $0x1c] sm:$0xf]
  %v79 = vld [vmem:[%s0 + $0x20] sm:$0xf]
  %v80 = vld [vmem:[%s0 + $0x24] sm:$0xf]
  %v81 = vld [vmem:[%s0 + $0x28] sm:$0xf]
  %v82 = vld [vmem:[%s0 + $0x2c] sm:$0xf]
  %v83 = vld [vmem:[%s0 + $0x30] sm:$0xf]
  %v84 = vld [vmem:[%s0 + $0x34] sm:$0xf]
  %v85 = vld [vmem:[%s0 + $0x38] sm:$0xf]
  %v86 = vld [vmem:[%s0 + $0x3c] sm:$0xf]
  %v87 = vld [vmem:[%s0 + $0x40] sm:$0xf]
  %v88 = vld [vmem:[%s0 + $0x44] sm:$0xf]
  %v89 = vld [vmem:[%s0 + $0x48] sm:$0xf]
  %v90 = vld [vmem:[%s0 + $0x4c] sm:$0xf]
  %v91 = vld [vmem:[%s0 + $0x50] sm:$0xf]
  %v92 = vld [vmem:[%s0 + $0x54] sm:$0xf]
  %v115 = vunpack.c.l.b16 %v71
  %v116 = vunpack.c.l.b16 %v72
  %v117 = vunpack.c.l.b16 %v73
  %v118 = vunpack.c.l.b16 %v74
  %v119 = vunpack.c.l.b16 %v75
  %v120 = vunpack.c.l.b16 %v76
  %v121 = vunpack.c.l.b16 %v77
  %v122 = vunpack.c.l.b16 %v78
  %v123 = vunpack.c.l.b16 %v79
  %v124 = vunpack.c.l.b16 %v80
  %v125 = vunpack.c.l.b16 %v81
  %v126 = vunpack.c.l.b16 %v82
  %v127 = vunpack.c.l.b16 %v83
  %v128 = vunpack.c.l.b16 %v84
  %v129 = vunpack.c.l.b16 %v85
  %v130 = vunpack.c.l.b16 %v86
  %v131 = vunpack.c.l.b16 %v87
  %v132 = vunpack.c.l.b16 %v88
  %v133 = vunpack.c.l.b16 %v89
  %v134 = vunpack.c.l.b16 %v90
  %v135 = vunpack.c.l.b16 %v91
  %v136 = vunpack.c.l.b16 %v92
  %v137 = vpack.c.b16 %v116, %v115
  %v138 = vpack.c.b16 %v118, %v117
  %v139 = vpack.c.b16 %v120, %v119
  %v140 = vpack.c.b16 %v122, %v121
  %v141 = vpack.c.b16 %v124, %v123
  %v142 = vpack.c.b16 %v126, %v125
  %v143 = vpack.c.b16 %v128, %v127
  %v144 = vpack.c.b16 %v130, %v129
  %v145 = vpack.c.b16 %v132, %v131
  %v146 = vpack.c.b16 %v134, %v133
  %v147 = vpack.c.b16 %v136, %v135
  %v156 = vunpack.c.l.b16 %v41
  %v157 = vunpack.c.l.b16 %v42
  %v158 = vunpack.c.l.b16 %v43
  %v159 = vunpack.c.l.b16 %v44
  %v160 = vunpack.c.l.b16 %v45
  %v161 = vunpack.c.l.b16 %v46
  %v162 = vunpack.c.l.b16 %v47
  %v163 = vunpack.c.l.b16 %v48
  %v164 = vpack.c.b16 %v157, %v156
  %v165 = vpack.c.b16 %v159, %v158
  %v166 = vpack.c.b16 %v161, %v160
  %v167 = vpack.c.b16 %v163, %v162
  %vm172 = vcmask 523264
  %v174 = vsel %vm172, %v137, 0
  %v177 = vsel %vm172, %v138, 0
  %v180 = vsel %vm172, %v139, 0
  %v183 = vsel %vm172, %v140, 0
  %v186 = vsel %vm172, %v141, 0
  %v189 = vsel %vm172, %v142, 0
  %v192 = vsel %vm172, %v143, 0
  %v195 = vsel %vm172, %v144, 0
  %v198 = vsel %vm172, %v145, 0
  %v201 = vsel %vm172, %v146, 0
  %v204 = vsel %vm172, %v147, 0
  %206 = vmatprep.subr.bf16.mxu0 0
  %207 = vmatpush1.bf16.msra.mxu0 %v164
  %208 = vmatprep.subr.bf16.mxu0 0
  %209 = vmatpush1.bf16.msra.mxu0 %v165
  %210 = vmatprep.subr.bf16.mxu0 0
  %211 = vmatpush1.bf16.msra.mxu0 %v166
  %212 = vmatprep.subr.bf16.mxu0 0
  %213 = vmatpush1.bf16.msra.mxu0 %v167
  %214 = vmatprep.subr.bf16.mxu0 0
  %215 = vmatpush1.bf16.msra.mxu0 0
  %216 = vmatprep.subr.bf16.mxu0 0
  %217 = vmatpush1.bf16.msra.mxu0 0
  %218 = vmatprep.subr.bf16.mxu0 0
  %219 = vmatpush1.bf16.msra.mxu0 0
  %220 = vmatprep.subr.bf16.mxu0 0
  %221 = vmatpush1.bf16.msra.mxu0 0
  %222 = vmatprep.subr.bf16.mxu0 0
  %223 = vmatpush1.bf16.msra.mxu0 0
  %224 = vmatprep.subr.bf16.mxu0 0
  %225 = vmatpush1.bf16.msra.mxu0 0
  %226 = vmatprep.subr.bf16.mxu0 0
  %227 = vmatpush1.bf16.msra.mxu0 0
  %228 = vmatprep.subr.bf16.mxu0 0
  %229 = vmatpush1.bf16.msra.mxu0 0
  %230 = vmatprep.subr.bf16.mxu0 0
  %231 = vmatpush1.bf16.msra.mxu0 0
  %232 = vmatprep.subr.bf16.mxu0 0
  %233 = vmatpush1.bf16.msra.mxu0 0
  %234 = vmatprep.subr.bf16.mxu0 0
  %235 = vmatpush1.bf16.msra.mxu0 0
  %236 = vmatprep.subr.bf16.mxu0 0
  %237 = vmatpush1.bf16.msra.mxu0 0
  %238 = vmatprep.mubr.bf16.mxu0 0
  %239 = vmatmul.mubr.bf16.gmra.mrb[0].mxu0 %v174
  %v240 = vpop.f32.mrb[0].mxu0
  %v241 = vadd.f32 0.0, %v240
  %v242 = vpop.f32.mrb[0].mxu0
  %v243 = vpop.f32.mrb[0].mxu0
  %v244 = vadd.f32 0.0, %v243
  %v245 = vpop.f32.mrb[0].mxu0
  %246 = vmatprep.mubr.bf16.mxu0 0
  %247 = vmatmul.mubr.bf16.gmra.mrb[0].mxu0 %v177
  %v248 = vpop.f32.mrb[0].mxu0
  %v249 = vadd.f32 0.0, %v248
  %v250 = vpop.f32.mrb[0].mxu0
  %v251 = vpop.f32.mrb[0].mxu0
  %v252 = vadd.f32 0.0, %v251
  %v253 = vpop.f32.mrb[0].mxu0
  %254 = vmatprep.mubr.bf16.mxu0 0
  %255 = vmatmul.mubr.bf16.gmra.mrb[0].mxu0 %v180
  %v256 = vpop.f32.mrb[0].mxu0
  %v257 = vadd.f32 0.0, %v256
  %v258 = vpop.f32.mrb[0].mxu0
  %v259 = vpop.f32.mrb[0].mxu0
  %v260 = vadd.f32 0.0, %v259
  %v261 = vpop.f32.mrb[0].mxu0
  %262 = vmatprep.mubr.bf16.mxu0 0
  %263 = vmatmul.mubr.bf16.gmra.mrb[0].mxu0 %v183
  %v264 = vpop.f32.mrb[0].mxu0
  %v265 = vadd.f32 0.0, %v264
  %v266 = vpop.f32.mrb[0].mxu0
  %v267 = vpop.f32.mrb[0].mxu0
  %v268 = vadd.f32 0.0, %v267
  %v269 = vpop.f32.mrb[0].mxu0
  %270 = vmatprep.mubr.bf16.mxu0 0
  %271 = vmatmul.mubr.bf16.gmra.mrb[0].mxu0 %v186
  %v272 = vpop.f32.mrb[0].mxu0
  %v273 = vadd.f32 0.0, %v272
  %v274 = vpop.f32.mrb[0].mxu0
  %v275 = vpop.f32.mrb[0].mxu0
  %v276 = vadd.f32 0.0, %v275
  %v277 = vpop.f32.mrb[0].mxu0
  %278 = vmatprep.mubr.bf16.mxu0 0
  %279 = vmatmul.mubr.bf16.gmra.mrb[0].mxu0 %v189
  %v280 = vpop.f32.mrb[0].mxu0
  %v281 = vadd.f32 0.0, %v280
  %v282 = vpop.f32.mrb[0].mxu0
  %v283 = vpop.f32.mrb[0].mxu0
  %v284 = vadd.f32 0.0, %v283
  %v285 = vpop.f32.mrb[0].mxu0
  %286 = vmatprep.mubr.bf16.mxu0 0
  %287 = vmatmul.mubr.bf16.gmra.mrb[0].mxu0 %v192
  %v288 = vpop.f32.mrb[0].mxu0
  %v289 = vadd.f32 0.0, %v288
  %v290 = vpop.f32.mrb[0].mxu0
  %v291 = vpop.f32.mrb[0].mxu0
  %v292 = vadd.f32 0.0, %v291
  %v293 = vpop.f32.mrb[0].mxu0
  %294 = vmatprep.mubr.bf16.mxu0 0
  %295 = vmatmul.mubr.bf16.gmra.mrb[0].mxu0 %v195
  %v296 = vpop.f32.mrb[0].mxu0
  %v297 = vadd.f32 0.0, %v296
  %v298 = vpop.f32.mrb[0].mxu0
  %v299 = vpop.f32.mrb[0].mxu0
  %v300 = vadd.f32 0.0, %v299
  %v301 = vpop.f32.mrb[0].mxu0
  %302 = vmatprep.mubr.bf16.mxu0 0
  %303 = vmatmul.mubr.bf16.gmra.mrb[0].mxu0 %v198
  %v304 = vpop.f32.mrb[0].mxu0
  %v305 = vadd.f32 0.0, %v304
  %v306 = vpop.f32.mrb[0].mxu0
  %v307 = vpop.f32.mrb[0].mxu0
  %v308 = vadd.f32 0.0, %v307
  %v309 = vpop.f32.mrb[0].mxu0
  %310 = vmatprep.mubr.bf16.mxu0 0
  %311 = vmatmul.mubr.bf16.gmra.mrb[0].mxu0 %v201
  %v312 = vpop.f32.mrb[0].mxu0
  %v313 = vadd.f32 0.0, %v312
  %v314 = vpop.f32.mrb[0].mxu0
  %v315 = vpop.f32.mrb[0].mxu0
  %v316 = vadd.f32 0.0, %v315
  %v317 = vpop.f32.mrb[0].mxu0
  %318 = vmatprep.mubr.bf16.mxu0 0
  %319 = vmatmul.mubr.bf16.gmra.mrb[0].mxu0 %v204
  %v320 = vpop.f32.mrb[0].mxu0
  %v321 = vadd.f32 0.0, %v320
  %v322 = vpop.f32.mrb[0].mxu0
  %v323 = vpop.f32.mrb[0].mxu0
  %v324 = vadd.f32 0.0, %v323
  %v325 = vpop.f32.mrb[0].mxu0
  %326 = vdwg.mxu0
  %v327 = vadd.f32 %v49, %v241
  %v328 = vadd.f32 %v50, %v244
  %v329 = vadd.f32 %v51, %v249
  %v330 = vadd.f32 %v52, %v252
  %v331 = vadd.f32 %v53, %v257
  %v332 = vadd.f32 %v54, %v260
  %v333 = vadd.f32 %v55, %v265
  %v334 = vadd.f32 %v56, %v268
  %v335 = vadd.f32 %v57, %v273
  %v336 = vadd.f32 %v58, %v276
  %v337 = vadd.f32 %v59, %v281
  %v338 = vadd.f32 %v60, %v284
  %v339 = vadd.f32 %v61, %v289
  %v340 = vadd.f32 %v62, %v292
  %v341 = vadd.f32 %v63, %v297
  %v342 = vadd.f32 %v64, %v300
  %v343 = vadd.f32 %v65, %v305
  %v344 = vadd.f32 %v66, %v308
  %v345 = vadd.f32 %v67, %v313
  %v346 = vadd.f32 %v68, %v316
  %v347 = vadd.f32 %v69, %v321
  %v348 = vadd.f32 %v70, %v324
  %349 = vst [vmem:[#allocation2] sm:$0xff] %v327
  %350 = vst [vmem:[#allocation2 + $0x8] sm:$0xff] %v328
  %351 = vst [vmem:[#allocation2 + $0x10] sm:$0xff] %v329
  %352 = vst [vmem:[#allocation2 + $0x18] sm:$0xff] %v330
  %353 = vst [vmem:[#allocation2 + $0x20] sm:$0xff] %v331
  %354 = vst [vmem:[#allocation2 + $0x28] sm:$0xff] %v332
  %355 = vst [vmem:[#allocation2 + $0x30] sm:$0xff] %v333
  %356 = vst [vmem:[#allocation2 + $0x38] sm:$0xff] %v334
  %357 = vst [vmem:[#allocation2 + $0x40] sm:$0xff] %v335
  %358 = vst [vmem:[#allocation2 + $0x48] sm:$0xff] %v336
  %359 = vst [vmem:[#allocation2 + $0x50] sm:$0xff] %v337
  %360 = vst [vmem:[#allocation2 + $0x58] sm:$0xff] %v338
  %361 = vst [vmem:[#allocation2 + $0x60] sm:$0xff] %v339
  %362 = vst [vmem:[#allocation2 + $0x68] sm:$0xff] %v340
  %363 = vst [vmem:[#allocation2 + $0x70] sm:$0xff] %v341
  %364 = vst [vmem:[#allocation2 + $0x78] sm:$0xff] %v342
  %365 = vst [vmem:[#allocation2 + $0x80] sm:$0xff] %v343
  %366 = vst [vmem:[#allocation2 + $0x88] sm:$0xff] %v344
  %367 = vst [vmem:[#allocation2 + $0x90] sm:$0xff] %v345
  %368 = vst [vmem:[#allocation2 + $0x98] sm:$0xff] %v346
  %369 = vst [vmem:[#allocation2 + $0xa0] sm:$0xff] %v347
  %370 = vst [vmem:[#allocation2 + $0xa8] sm:$0xff] %v348
  // Predicated region
  $region18: #{_lambda_.5} parent=0 // pred_check
    %p371 = pneg %p15
  $region19: #{_lambda_.5} parent=0 // pred_check_branch
    %373 = sbr.rel (%p371) target = $region21
  $region20: #{_lambda_.5} parent=0 // pred_region
    %v374 = vld [vmem:[#allocation2] sm:$0xff]
    %v375 = vld [vmem:[#allocation2 + $0x8] sm:$0xff]
    %v376 = vld [vmem:[#allocation2 + $0x10] sm:$0xff]
    %v377 = vld [vmem:[#allocation2 + $0x18] sm:$0xff]
    %v378 = vld [vmem:[#allocation2 + $0x20] sm:$0xff]
    %v379 = vld [vmem:[#allocation2 + $0x28] sm:$0xff]
    %v380 = vld [vmem:[#allocation2 + $0x30] sm:$0xff]
    %v381 = vld [vmem:[#allocation2 + $0x38] sm:$0xff]
    %v382 = vld [vmem:[#allocation2 + $0x40] sm:$0xff]
    %v383 = vld [vmem:[#allocation2 + $0x48] sm:$0xff]
    %v384 = vld [vmem:[#allocation2 + $0x50] sm:$0xff]
    %v385 = vld [vmem:[#allocation2 + $0x58] sm:$0xff]
    %v386 = vld [vmem:[#allocation2 + $0x60] sm:$0xff]
    %v387 = vld [vmem:[#allocation2 + $0x68] sm:$0xff]
    %v388 = vld [vmem:[#allocation2 + $0x70] sm:$0xff]
    %v389 = vld [vmem:[#allocation2 + $0x78] sm:$0xff]
    %v390 = vld [vmem:[#allocation2 + $0x80] sm:$0xff]
    %v391 = vld [vmem:[#allocation2 + $0x88] sm:$0xff]
    %v392 = vld [vmem:[#allocation2 + $0x90] sm:$0xff]
    %v393 = vld [vmem:[#allocation2 + $0x98] sm:$0xff]
    %v394 = vld [vmem:[#allocation2 + $0xa0] sm:$0xff]
    %v395 = vld [vmem:[#allocation2 + $0xa8] sm:$0xff]
    %v396 = vld [vmem:[%s2] sm:$0x1]
    %v398 = vlaneseq
    %v399 = vshrl.u32 %v398, 7
    %v400 = vsub.s32 0, %v399
    %v401 = vrot.slane %v396, %v400
    %v403 = vadd.f32 %v374, %v401
    %v404 = vadd.f32 %v375, %v401
    %v405 = vadd.f32 %v376, %v401
    %v406 = vadd.f32 %v377, %v401
    %v407 = vadd.f32 %v378, %v401
    %v408 = vadd.f32 %v379, %v401
    %v409 = vadd.f32 %v380, %v401
    %v410 = vadd.f32 %v381, %v401
    %v411 = vadd.f32 %v382, %v401
    %v412 = vadd.f32 %v383, %v401
    %v413 = vadd.f32 %v384, %v401
    %v414 = vadd.f32 %v385, %v401
    %v415 = vadd.f32 %v386, %v401
    %v416 = vadd.f32 %v387, %v401
    %v417 = vadd.f32 %v388, %v401
    %v418 = vadd.f32 %v389, %v401
    %v419 = vadd.f32 %v390, %v401
    %v420 = vadd.f32 %v391, %v401
    %v421 = vadd.f32 %v392, %v401
    %v422 = vadd.f32 %v393, %v401
    %v423 = vadd.f32 %v394, %v401
    %v424 = vadd.f32 %v395, %v401
    %vm425 = vcmp.ge.f32.partialorder %v403, 0.0
    %vm426 = vcmp.ge.f32.partialorder %v404, 0.0
    %vm427 = vcmp.ge.f32.partialorder %v405, 0.0
    %vm428 = vcmp.ge.f32.partialorder %v406, 0.0
    %vm429 = vcmp.ge.f32.partialorder %v407, 0.0
    %vm430 = vcmp.ge.f32.partialorder %v408, 0.0
    %vm431 = vcmp.ge.f32.partialorder %v409, 0.0
    %vm432 = vcmp.ge.f32.partialorder %v410, 0.0
    %vm433 = vcmp.ge.f32.partialorder %v411, 0.0
    %vm434 = vcmp.ge.f32.partialorder %v412, 0.0
    %vm435 = vcmp.ge.f32.partialorder %v413, 0.0
    %vm436 = vcmp.ge.f32.partialorder %v414, 0.0
    %vm437 = vcmp.ge.f32.partialorder %v415, 0.0
    %vm438 = vcmp.ge.f32.partialorder %v416, 0.0
    %vm439 = vcmp.ge.f32.partialorder %v417, 0.0
    %vm440 = vcmp.ge.f32.partialorder %v418, 0.0
    %vm441 = vcmp.ge.f32.partialorder %v419, 0.0
    %vm442 = vcmp.ge.f32.partialorder %v420, 0.0
    %vm443 = vcmp.ge.f32.partialorder %v421, 0.0
    %vm444 = vcmp.ge.f32.partialorder %v422, 0.0
    %vm445 = vcmp.ge.f32.partialorder %v423, 0.0
    %vm446 = vcmp.ge.f32.partialorder %v424, 0.0
    %v447 = vmul.f32 %v403, 0.2
    %v448 = vmul.f32 %v404, 0.2
    %v449 = vmul.f32 %v405, 0.2
    %v450 = vmul.f32 %v406, 0.2
    %v451 = vmul.f32 %v407, 0.2
    %v452 = vmul.f32 %v408, 0.2
    %v453 = vmul.f32 %v409, 0.2
    %v454 = vmul.f32 %v410, 0.2
    %v455 = vmul.f32 %v411, 0.2
    %v456 = vmul.f32 %v412, 0.2
    %v457 = vmul.f32 %v413, 0.2
    %v458 = vmul.f32 %v414, 0.2
    %v459 = vmul.f32 %v415, 0.2
    %v460 = vmul.f32 %v416, 0.2
    %v461 = vmul.f32 %v417, 0.2
    %v462 = vmul.f32 %v418, 0.2
    %v463 = vmul.f32 %v419, 0.2
    %v464 = vmul.f32 %v420, 0.2
    %v465 = vmul.f32 %v421, 0.2
    %v466 = vmul.f32 %v422, 0.2
    %v467 = vmul.f32 %v423, 0.2
    %v468 = vmul.f32 %v424, 0.2
    %v469 = vsel %vm425, %v403, %v447
    %v470 = vsel %vm426, %v404, %v448
    %v471 = vsel %vm427, %v405, %v449
    %v472 = vsel %vm428, %v406, %v450
    %v473 = vsel %vm429, %v407, %v451
    %v474 = vsel %vm430, %v408, %v452
    %v475 = vsel %vm431, %v409, %v453
    %v476 = vsel %vm432, %v410, %v454
    %v477 = vsel %vm433, %v411, %v455
    %v478 = vsel %vm434, %v412, %v456
    %v479 = vsel %vm435, %v413, %v457
    %v480 = vsel %vm436, %v414, %v458
    %v481 = vsel %vm437, %v415, %v459
    %v482 = vsel %vm438, %v416, %v460
    %v483 = vsel %vm439, %v417, %v461
    %v484 = vsel %vm440, %v418, %v462
    %v485 = vsel %vm441, %v419, %v463
    %v486 = vsel %vm442, %v420, %v464
    %v487 = vsel %vm443, %v421, %v465
    %v488 = vsel %vm444, %v422, %v466
    %v489 = vsel %vm445, %v423, %v467
    %v490 = vsel %vm446, %v424, %v468
    %v491 = vpack.c.bf16 %v470, %v469
    %v492 = vpack.c.bf16 %v472, %v471
    %v493 = vpack.c.bf16 %v474, %v473
    %v494 = vpack.c.bf16 %v476, %v475
    %v495 = vpack.c.bf16 %v478, %v477
    %v496 = vpack.c.bf16 %v480, %v479
    %v497 = vpack.c.bf16 %v482, %v481
    %v498 = vpack.c.bf16 %v484, %v483
    %v499 = vpack.c.bf16 %v486, %v485
    %v500 = vpack.c.bf16 %v488, %v487
    %v501 = vpack.c.bf16 %v490, %v489
    %v513 = vunpack.c.l.b16 %v491
    %v514 = vunpack.c.h.b16 %v491
    %v515 = vunpack.c.l.b16 %v492
    %v516 = vunpack.c.h.b16 %v492
    %v517 = vunpack.c.l.b16 %v493
    %v518 = vunpack.c.h.b16 %v493
    %v519 = vunpack.c.l.b16 %v494
    %v520 = vunpack.c.h.b16 %v494
    %v521 = vunpack.c.l.b16 %v495
    %v522 = vunpack.c.h.b16 %v495
    %v523 = vunpack.c.l.b16 %v496
    %v524 = vunpack.c.h.b16 %v496
    %v525 = vunpack.c.l.b16 %v497
    %v526 = vunpack.c.h.b16 %v497
    %v527 = vunpack.c.l.b16 %v498
    %v528 = vunpack.c.h.b16 %v498
    %v529 = vunpack.c.l.b16 %v499
    %v530 = vunpack.c.h.b16 %v499
    %v531 = vunpack.c.l.b16 %v500
    %v532 = vunpack.c.h.b16 %v500
    %v533 = vunpack.c.l.b16 %v501
    %v534 = vunpack.c.h.b16 %v501
    %v535 = vpack.c.b16 %v513, %v513
    %v536 = vpack.c.b16 %v514, %v514
    %v537 = vpack.c.b16 %v515, %v515
    %v538 = vpack.c.b16 %v516, %v516
    %v539 = vpack.c.b16 %v517, %v517
    %v540 = vpack.c.b16 %v518, %v518
    %v541 = vpack.c.b16 %v519, %v519
    %v542 = vpack.c.b16 %v520, %v520
    %v543 = vpack.c.b16 %v521, %v521
    %v544 = vpack.c.b16 %v522, %v522
    %v545 = vpack.c.b16 %v523, %v523
    %v546 = vpack.c.b16 %v524, %v524
    %v547 = vpack.c.b16 %v525, %v525
    %v548 = vpack.c.b16 %v526, %v526
    %v549 = vpack.c.b16 %v527, %v527
    %v550 = vpack.c.b16 %v528, %v528
    %v551 = vpack.c.b16 %v529, %v529
    %v552 = vpack.c.b16 %v530, %v530
    %v553 = vpack.c.b16 %v531, %v531
    %v554 = vpack.c.b16 %v532, %v532
    %v555 = vpack.c.b16 %v533, %v533
    %v556 = vpack.c.b16 %v534, %v534
    %579 = vst [vmem:[%s3] sm:$0xf] %v535
    %580 = vst [vmem:[%s3 + $0x4] sm:$0xf] %v536
    %581 = vst [vmem:[%s3 + $0x8] sm:$0xf] %v537
    %582 = vst [vmem:[%s3 + $0xc] sm:$0xf] %v538
    %583 = vst [vmem:[%s3 + $0x10] sm:$0xf] %v539
    %584 = vst [vmem:[%s3 + $0x14] sm:$0xf] %v540
    %585 = vst [vmem:[%s3 + $0x18] sm:$0xf] %v541
    %586 = vst [vmem:[%s3 + $0x1c] sm:$0xf] %v542
    %587 = vst [vmem:[%s3 + $0x20] sm:$0xf] %v543
    %588 = vst [vmem:[%s3 + $0x24] sm:$0xf] %v544
    %589 = vst [vmem:[%s3 + $0x28] sm:$0xf] %v545
    %590 = vst [vmem:[%s3 + $0x2c] sm:$0xf] %v546
    %591 = vst [vmem:[%s3 + $0x30] sm:$0xf] %v547
    %592 = vst [vmem:[%s3 + $0x34] sm:$0xf] %v548
    %593 = vst [vmem:[%s3 + $0x38] sm:$0xf] %v549
    %594 = vst [vmem:[%s3 + $0x3c] sm:$0xf] %v550
    %595 = vst [vmem:[%s3 + $0x40] sm:$0xf] %v551
    %596 = vst [vmem:[%s3 + $0x44] sm:$0xf] %v552
    %597 = vst [vmem:[%s3 + $0x48] sm:$0xf] %v553
    %598 = vst [vmem:[%s3 + $0x4c] sm:$0xf] %v554
    %599 = vst [vmem:[%s3 + $0x50] sm:$0xf] %v555
    %600 = vst [vmem:[%s3 + $0x54] sm:$0xf] %v556
  $region21: #{_lambda_.5} parent=0 // pred_fallthru
    _
  // Predicated region
  $region22: #{_lambda_.5} parent=0 // pred_check
    _
  $region23: #{_lambda_.5} parent=0 // pred_check_branch
    %602 = sbr.rel (0) target = $region25
  $region24: #{_lambda_.5} parent=0 // pred_region
    _
  $region25: #{_lambda_.5} parent=0 // pred_fallthru
    _
  // Predicated region
  $region26: #{_lambda_.5} parent=0 // pred_check
    _
  $region27: #{_lambda_.5} parent=0 // pred_check_branch
    %604 = sbr.rel (0) target = $region29
  $region28: #{_lambda_.5} parent=0 // pred_region
    _
  $region29: #{_lambda_.5} parent=0 // pred_fallthru
    _

// kernel: _lambda_.6
$region0: #{_lambda_.6}
  #allocation0 [shape = 'u32[]', space=smem, size = 0x4, offset = 0x4, fixed_abs, tag = 'smem constant byte address 0x4 - core index']
  #allocation1 [shape = 'u32[144,128]{1,0:T(1,128)}', space=vmem, size = 0x12000, scoped, tag = 'internal scratch']
  #allocation2 [shape = 'f32[64,128]{1,0:T(8,128)}', space=vmem, size = 0x8000, scoped, tag = 'scratch operand']
  %s0 = inlined_call_operand.vmem [shape: bf16[64,128], index: 0, kind: input, shape index: {}]
  %s1 = inlined_call_operand.vmem [shape: bf16[128,128], index: 1, kind: input, shape index: {}]
  %s2 = inlined_call_operand.vmem [shape: f32[1,128], index: 2, kind: input, shape index: {}]
  %s3 = inlined_call_operand.vmem [shape: bf16[64,128], index: 3, kind: output, shape index: {0}]
  %s4 = inlined_call_operand.vmem [shape: f32[1,2,128], index: 4, kind: output, shape index: {1}]
  %5 = xla_tuple %s3, %s4
  %s6 = sld [smem:[#allocation0]]
  $region38: #{_lambda_.6} parent=0
    _
  %s8 = ssub.s32 1, %s6
  %s9 = scalar_select 0, %s8, %s6
  // Predicated region
  $region2: #{_lambda_.6} parent=0 // pred_check
    _
  $region3: #{_lambda_.6} parent=0 // pred_check_branch
    %11 = sbr.rel (0) target = $region5
  $region4: #{_lambda_.6} parent=0 // pred_region
    _
  $region5: #{_lambda_.6} parent=0 // pred_fallthru
    _
  // Predicated region
  $region6: #{_lambda_.6} parent=0 // pred_check
    _
  $region7: #{_lambda_.6} parent=0 // pred_check_branch
    %13 = sbr.rel (0) target = $region9
  $region8: #{_lambda_.6} parent=0 // pred_region
    _
  $region9: #{_lambda_.6} parent=0 // pred_fallthru
    _
  // Predicated region
  $region10: #{_lambda_.6} parent=0 // pred_check
    _
  $region11: #{_lambda_.6} parent=0 // pred_check_branch
    %15 = sbr.rel (0) target = $region13
  $region12: #{_lambda_.6} parent=0 // pred_region
    _
  $region13: #{_lambda_.6} parent=0 // pred_fallthru
    _
  %p17 = scmp.eq.s32.totalorder 0, 0
  // Predicated region
  $region14: #{_lambda_.6} parent=0 // pred_check
    %p18 = pneg %p17
  $region15: #{_lambda_.6} parent=0 // pred_check_branch
    %20 = sbr.rel (%p18) target = $region17
  $region16: #{_lambda_.6} parent=0 // pred_region
    %21 = vst [vmem:[#allocation2] sm:$0xff] 0.0
    %22 = vst [vmem:[#allocation2 + $0x8] sm:$0xff] 0.0
    %23 = vst [vmem:[#allocation2 + $0x10] sm:$0xff] 0.0
    %24 = vst [vmem:[#allocation2 + $0x18] sm:$0xff] 0.0
    %25 = vst [vmem:[#allocation2 + $0x20] sm:$0xff] 0.0
    %26 = vst [vmem:[#allocation2 + $0x28] sm:$0xff] 0.0
    %27 = vst [vmem:[#allocation2 + $0x30] sm:$0xff] 0.0
    %28 = vst [vmem:[#allocation2 + $0x38] sm:$0xff] 0.0
  $region17: #{_lambda_.6} parent=0 // pred_fallthru
    _
  %v29 = vld [vmem:[%s1] sm:$0xf]
  %v30 = vld [vmem:[%s1 + $0x4] sm:$0xf]
  %v31 = vld [vmem:[%s1 + $0x8] sm:$0xf]
  %v32 = vld [vmem:[%s1 + $0xc] sm:$0xf]
  %v33 = vld [vmem:[%s1 + $0x10] sm:$0xf]
  %v34 = vld [vmem:[%s1 + $0x14] sm:$0xf]
  %v35 = vld [vmem:[%s1 + $0x18] sm:$0xf]
  %v36 = vld [vmem:[%s1 + $0x1c] sm:$0xf]
  %v37 = vld [vmem:[%s1 + $0x20] sm:$0xf]
  %v38 = vld [vmem:[%s1 + $0x24] sm:$0xf]
  %v39 = vld [vmem:[%s1 + $0x28] sm:$0xf]
  %v40 = vld [vmem:[%s1 + $0x2c] sm:$0xf]
  %v41 = vld [vmem:[%s1 + $0x30] sm:$0xf]
  %v42 = vld [vmem:[%s1 + $0x34] sm:$0xf]
  %v43 = vld [vmem:[%s1 + $0x38] sm:$0xf]
  %v44 = vld [vmem:[%s1 + $0x3c] sm:$0xf]
  %v45 = vld [vmem:[#allocation2] sm:$0xff]
  %v46 = vld [vmem:[#allocation2 + $0x8] sm:$0xff]
  %v47 = vld [vmem:[#allocation2 + $0x10] sm:$0xff]
  %v48 = vld [vmem:[#allocation2 + $0x18] sm:$0xff]
  %v49 = vld [vmem:[#allocation2 + $0x20] sm:$0xff]
  %v50 = vld [vmem:[#allocation2 + $0x28] sm:$0xff]
  %v51 = vld [vmem:[#allocation2 + $0x30] sm:$0xff]
  %v52 = vld [vmem:[#allocation2 + $0x38] sm:$0xff]
  %v53 = vld [vmem:[%s0] sm:$0xf]
  %v54 = vld [vmem:[%s0 + $0x4] sm:$0xf]
  %v55 = vld [vmem:[%s0 + $0x8] sm:$0xf]
  %v56 = vld [vmem:[%s0 + $0xc] sm:$0xf]
  %v57 = vld [vmem:[%s0 + $0x10] sm:$0xf]
  %v58 = vld [vmem:[%s0 + $0x14] sm:$0xf]
  %v59 = vld [vmem:[%s0 + $0x18] sm:$0xf]
  %v60 = vld [vmem:[%s0 + $0x1c] sm:$0xf]
  %v69 = vunpack.c.l.b16 %v53
  %v70 = vunpack.c.l.b16 %v54
  %v71 = vunpack.c.l.b16 %v55
  %v72 = vunpack.c.l.b16 %v56
  %v73 = vunpack.c.l.b16 %v57
  %v74 = vunpack.c.l.b16 %v58
  %v75 = vunpack.c.l.b16 %v59
  %v76 = vunpack.c.l.b16 %v60
  %v77 = vpack.c.b16 %v70, %v69
  %v78 = vpack.c.b16 %v72, %v71
  %v79 = vpack.c.b16 %v74, %v73
  %v80 = vpack.c.b16 %v76, %v75
  %v101 = vunpack.c.l.b16 %v29
  %v102 = vunpack.c.l.b16 %v30
  %v103 = vunpack.c.l.b16 %v31
  %v104 = vunpack.c.l.b16 %v32
  %v105 = vunpack.c.l.b16 %v33
  %v106 = vunpack.c.l.b16 %v34
  %v107 = vunpack.c.l.b16 %v35
  %v108 = vunpack.c.l.b16 %v36
  %v109 = vunpack.c.l.b16 %v37
  %v110 = vunpack.c.l.b16 %v38
  %v111 = vunpack.c.l.b16 %v39
  %v112 = vunpack.c.l.b16 %v40
  %v113 = vunpack.c.l.b16 %v41
  %v114 = vunpack.c.l.b16 %v42
  %v115 = vunpack.c.l.b16 %v43
  %v116 = vunpack.c.l.b16 %v44
  %v117 = vpack.c.b16 %v102, %v101
  %v118 = vpack.c.b16 %v104, %v103
  %v119 = vpack.c.b16 %v106, %v105
  %v120 = vpack.c.b16 %v108, %v107
  %v121 = vpack.c.b16 %v110, %v109
  %v122 = vpack.c.b16 %v112, %v111
  %v123 = vpack.c.b16 %v114, %v113
  %v124 = vpack.c.b16 %v116, %v115
  %133 = vmatprep.subr.bf16.mxu0 0
  %134 = vmatpush1.bf16.msra.mxu0 %v117
  %135 = vmatprep.subr.bf16.mxu0 0
  %136 = vmatpush1.bf16.msra.mxu0 %v118
  %137 = vmatprep.subr.bf16.mxu0 0
  %138 = vmatpush1.bf16.msra.mxu0 %v119
  %139 = vmatprep.subr.bf16.mxu0 0
  %140 = vmatpush1.bf16.msra.mxu0 %v120
  %141 = vmatprep.subr.bf16.mxu0 0
  %142 = vmatpush1.bf16.msra.mxu0 %v121
  %143 = vmatprep.subr.bf16.mxu0 0
  %144 = vmatpush1.bf16.msra.mxu0 %v122
  %145 = vmatprep.subr.bf16.mxu0 0
  %146 = vmatpush1.bf16.msra.mxu0 %v123
  %147 = vmatprep.subr.bf16.mxu0 0
  %148 = vmatpush1.bf16.msra.mxu0 %v124
  %149 = vmatprep.subr.bf16.mxu0 0
  %150 = vmatpush1.bf16.msra.mxu0 0
  %151 = vmatprep.subr.bf16.mxu0 0
  %152 = vmatpush1.bf16.msra.mxu0 0
  %153 = vmatprep.subr.bf16.mxu0 0
  %154 = vmatpush1.bf16.msra.mxu0 0
  %155 = vmatprep.subr.bf16.mxu0 0
  %156 = vmatpush1.bf16.msra.mxu0 0
  %157 = vmatprep.subr.bf16.mxu0 0
  %158 = vmatpush1.bf16.msra.mxu0 0
  %159 = vmatprep.subr.bf16.mxu0 0
  %160 = vmatpush1.bf16.msra.mxu0 0
  %161 = vmatprep.subr.bf16.mxu0 0
  %162 = vmatpush1.bf16.msra.mxu0 0
  %163 = vmatprep.subr.bf16.mxu0 0
  %164 = vmatpush1.bf16.msra.mxu0 0
  %165 = vmatprep.mubr.bf16.mxu0 0
  %166 = vmatmul.mubr.bf16.gmra.mrb[0].mxu0 %v77
  %v167 = vpop.f32.mrb[0].mxu0
  %v168 = vadd.f32 0.0, %v167
  %v169 = vpop.f32.mrb[0].mxu0
  %v170 = vpop.f32.mrb[0].mxu0
  %v171 = vadd.f32 0.0, %v170
  %v172 = vpop.f32.mrb[0].mxu0
  %173 = vmatprep.mubr.bf16.mxu0 0
  %174 = vmatmul.mubr.bf16.gmra.mrb[0].mxu0 %v78
  %v175 = vpop.f32.mrb[0].mxu0
  %v176 = vadd.f32 0.0, %v175
  %v177 = vpop.f32.mrb[0].mxu0
  %v178 = vpop.f32.mrb[0].mxu0
  %v179 = vadd.f32 0.0, %v178
  %v180 = vpop.f32.mrb[0].mxu0
  %181 = vmatprep.mubr.bf16.mxu0 0
  %182 = vmatmul.mubr.bf16.gmra.mrb[0].mxu0 %v79
  %v183 = vpop.f32.mrb[0].mxu0
  %v184 = vadd.f32 0.0, %v183
  %v185 = vpop.f32.mrb[0].mxu0
  %v186 = vpop.f32.mrb[0].mxu0
  %v187 = vadd.f32 0.0, %v186
  %v188 = vpop.f32.mrb[0].mxu0
  %189 = vmatprep.mubr.bf16.mxu0 0
  %190 = vmatmul.mubr.bf16.gmra.mrb[0].mxu0 %v80
  %v191 = vpop.f32.mrb[0].mxu0
  %v192 = vadd.f32 0.0, %v191
  %v193 = vpop.f32.mrb[0].mxu0
  %v194 = vpop.f32.mrb[0].mxu0
  %v195 = vadd.f32 0.0, %v194
  %v196 = vpop.f32.mrb[0].mxu0
  %197 = vdwg.mxu0
  %v198 = vadd.f32 %v45, %v168
  %v199 = vadd.f32 %v46, %v171
  %v200 = vadd.f32 %v47, %v176
  %v201 = vadd.f32 %v48, %v179
  %v202 = vadd.f32 %v49, %v184
  %v203 = vadd.f32 %v50, %v187
  %v204 = vadd.f32 %v51, %v192
  %v205 = vadd.f32 %v52, %v195
  %206 = vst [vmem:[#allocation2] sm:$0xff] %v198
  %207 = vst [vmem:[#allocation2 + $0x8] sm:$0xff] %v199
  %208 = vst [vmem:[#allocation2 + $0x10] sm:$0xff] %v200
  %209 = vst [vmem:[#allocation2 + $0x18] sm:$0xff] %v201
  %210 = vst [vmem:[#allocation2 + $0x20] sm:$0xff] %v202
  %211 = vst [vmem:[#allocation2 + $0x28] sm:$0xff] %v203
  %212 = vst [vmem:[#allocation2 + $0x30] sm:$0xff] %v204
  %213 = vst [vmem:[#allocation2 + $0x38] sm:$0xff] %v205
  %s214 = smul.u32 0, 64
  %v215 = vlaneseq
  %v216 = vshrl.u32 %v215, 7
  %v217 = vadd.s32 %v216, 8
  %v218 = vadd.s32 %v216, 16
  %v219 = vadd.s32 %v216, 24
  %v220 = vadd.s32 %v216, 32
  %v221 = vadd.s32 %v216, 40
  %v222 = vadd.s32 %v216, 48
  %v223 = vadd.s32 %v216, 56
  %v224 = vstv %s214
  %v225 = vadd.s32 %v224, %v216
  %v226 = vadd.s32 %v224, %v217
  %v227 = vadd.s32 %v224, %v218
  %v228 = vadd.s32 %v224, %v219
  %v229 = vadd.s32 %v224, %v220
  %v230 = vadd.s32 %v224, %v221
  %v231 = vadd.s32 %v224, %v222
  %v232 = vadd.s32 %v224, %v223
  %vm233 = vcmp.lt.s32.totalorder %v225, 50
  %vm234 = vcmp.lt.s32.totalorder %v226, 50
  %vm235 = vcmp.lt.s32.totalorder %v227, 50
  %vm236 = vcmp.lt.s32.totalorder %v228, 50
  %vm237 = vcmp.lt.s32.totalorder %v229, 50
  %vm238 = vcmp.lt.s32.totalorder %v230, 50
  %vm239 = vcmp.lt.s32.totalorder %v231, 50
  %vm240 = vcmp.lt.s32.totalorder %v232, 50
  // Predicated region
  $region18: #{_lambda_.6} parent=0 // pred_check
    %p241 = pneg %p17
  $region19: #{_lambda_.6} parent=0 // pred_check_branch
    %243 = sbr.rel (%p241) target = $region21
  $region20: #{_lambda_.6} parent=0 // pred_region
    %v244 = vld [vmem:[#allocation2] sm:$0xff]
    %v245 = vld [vmem:[#allocation2 + $0x8] sm:$0xff]
    %v246 = vld [vmem:[#allocation2 + $0x10] sm:$0xff]
    %v247 = vld [vmem:[#allocation2 + $0x18] sm:$0xff]
    %v248 = vld [vmem:[#allocation2 + $0x20] sm:$0xff]
    %v249 = vld [vmem:[#allocation2 + $0x28] sm:$0xff]
    %v250 = vld [vmem:[#allocation2 + $0x30] sm:$0xff]
    %v251 = vld [vmem:[#allocation2 + $0x38] sm:$0xff]
    %v252 = vld [vmem:[%s2] sm:$0x1]
    %v254 = vlaneseq
    %v255 = vshrl.u32 %v254, 7
    %v256 = vsub.s32 0, %v255
    %v257 = vrot.slane %v252, %v256
    %v259 = vadd.f32 %v244, %v257
    %v260 = vadd.f32 %v245, %v257
    %v261 = vadd.f32 %v246, %v257
    %v262 = vadd.f32 %v247, %v257
    %v263 = vadd.f32 %v248, %v257
    %v264 = vadd.f32 %v249, %v257
    %v265 = vadd.f32 %v250, %v257
    %v266 = vadd.f32 %v251, %v257
    %v267 = vpack.c.bf16 %v260, %v259
    %v268 = vpack.c.bf16 %v262, %v261
    %v269 = vpack.c.bf16 %v264, %v263
    %v270 = vpack.c.bf16 %v266, %v265
    %v275 = vunpack.c.l.b16 %v267
    %v276 = vunpack.c.h.b16 %v267
    %v277 = vunpack.c.l.b16 %v268
    %v278 = vunpack.c.h.b16 %v268
    %v279 = vunpack.c.l.b16 %v269
    %v280 = vunpack.c.h.b16 %v269
    %v281 = vunpack.c.l.b16 %v270
    %v282 = vunpack.c.h.b16 %v270
    %v283 = vpack.c.b16 %v275, %v275
    %v284 = vpack.c.b16 %v276, %v276
    %v285 = vpack.c.b16 %v277, %v277
    %v286 = vpack.c.b16 %v278, %v278
    %v287 = vpack.c.b16 %v279, %v279
    %v288 = vpack.c.b16 %v280, %v280
    %v289 = vpack.c.b16 %v281, %v281
    %v290 = vpack.c.b16 %v282, %v282
    %299 = vst [vmem:[%s3] sm:$0xf] %v283
    %300 = vst [vmem:[%s3 + $0x4] sm:$0xf] %v284
    %301 = vst [vmem:[%s3 + $0x8] sm:$0xf] %v285
    %302 = vst [vmem:[%s3 + $0xc] sm:$0xf] %v286
    %303 = vst [vmem:[%s3 + $0x10] sm:$0xf] %v287
    %304 = vst [vmem:[%s3 + $0x14] sm:$0xf] %v288
    %305 = vst [vmem:[%s3 + $0x18] sm:$0xf] %v289
    %306 = vst [vmem:[%s3 + $0x1c] sm:$0xf] %v290
    %v307 = vsel %vm233, %v259, 0.0
    %v308 = vsel %vm234, %v260, 0.0
    %v309 = vsel %vm235, %v261, 0.0
    %v310 = vsel %vm236, %v262, 0.0
    %v311 = vsel %vm237, %v263, 0.0
    %v312 = vsel %vm238, %v264, 0.0
    %v313 = vsel %vm239, %v265, 0.0
    %v314 = vsel %vm240, %v266, 0.0
    %v315 = vadd.f32 %v307, %v308
    %v316 = vadd.f32 %v315, %v309
    %v317 = vadd.f32 %v316, %v310
    %v318 = vadd.f32 %v317, %v311
    %v319 = vadd.f32 %v318, %v312
    %v320 = vadd.f32 %v319, %v313
    %v321 = vadd.f32 %v320, %v314
    %v322 = vrot.slane %v321, 4
    %v323 = vadd.f32 %v321, %v322
    %v324 = vrot.slane %v323, 2
    %v325 = vadd.f32 %v323, %v324
    %v326 = vrot.slane %v325, 1
    %v327 = vadd.f32 %v325, %v326
    %v328 = vmul.f32 %v307, %v307
    %v329 = vmul.f32 %v308, %v308
    %v330 = vmul.f32 %v309, %v309
    %v331 = vmul.f32 %v310, %v310
    %v332 = vmul.f32 %v311, %v311
    %v333 = vmul.f32 %v312, %v312
    %v334 = vmul.f32 %v313, %v313
    %v335 = vmul.f32 %v314, %v314
    %v336 = vadd.f32 %v328, %v329
    %v337 = vadd.f32 %v336, %v330
    %v338 = vadd.f32 %v337, %v331
    %v339 = vadd.f32 %v338, %v332
    %v340 = vadd.f32 %v339, %v333
    %v341 = vadd.f32 %v340, %v334
    %v342 = vadd.f32 %v341, %v335
    %v343 = vrot.slane %v342, 4
    %v344 = vadd.f32 %v342, %v343
    %v345 = vrot.slane %v344, 2
    %v346 = vadd.f32 %v344, %v345
    %v347 = vrot.slane %v346, 1
    %v348 = vadd.f32 %v346, %v347
    %vm349 = vcmask 1040384
    %v350 = vsel %vm349, %v327, %v348
    %351 = vst [vmem:[%s4] sm:$0x3] %v350
  $region21: #{_lambda_.6} parent=0 // pred_fallthru
    _
  // Predicated region
  $region22: #{_lambda_.6} parent=0 // pred_check
    _
  $region23: #{_lambda_.6} parent=0 // pred_check_branch
    %353 = sbr.rel (0) target = $region25
  $region24: #{_lambda_.6} parent=0 // pred_region
    _
  $region25: #{_lambda_.6} parent=0 // pred_fallthru
    _
  // Predicated region
  $region26: #{_lambda_.6} parent=0 // pred_check
    _
  $region27: #{_lambda_.6} parent=0 // pred_check_branch
    %355 = sbr.rel (0) target = $region29
  $region28: #{_lambda_.6} parent=0 // pred_region
    _
  $region29: #{_lambda_.6} parent=0 // pred_fallthru
    _
  // Predicated region
  $region30: #{_lambda_.6} parent=0 // pred_check
    _
  $region31: #{_lambda_.6} parent=0 // pred_check_branch
    %357 = sbr.rel (0) target = $region33
  $region32: #{_lambda_.6} parent=0 // pred_region
    _
  $region33: #{_lambda_.6} parent=0 // pred_fallthru
    _
  // Predicated region
  $region34: #{_lambda_.6} parent=0 // pred_check
    _
  $region35: #{_lambda_.6} parent=0 // pred_check_branch
    %359 = sbr.rel (0) target = $region37
  $region36: #{_lambda_.6} parent=0 // pred_region
    _
  $region37: #{_lambda_.6} parent=0 // pred_fallthru
    _

// kernel: _lambda_.7
$region0: #{_lambda_.7}
  #allocation0 [shape = 'u32[]', space=smem, size = 0x4, offset = 0x4, fixed_abs, tag = 'smem constant byte address 0x4 - core index']
  #allocation1 [shape = 'u32[144,128]{1,0:T(1,128)}', space=vmem, size = 0x12000, scoped, tag = 'internal scratch']
  #allocation2 [shape = 'f32[32,128]{1,0:T(8,128)}', space=vmem, size = 0x4000, scoped, tag = 'scratch operand']
  %s0 = inlined_call_operand.vmem [shape: bf16[32,256], index: 0, kind: input, shape index: {}]
  %s1 = inlined_call_operand.vmem [shape: bf16[256,128], index: 1, kind: input, shape index: {}]
  %s2 = inlined_call_operand.vmem [shape: f32[1,128], index: 2, kind: input, shape index: {}]
  %s3 = inlined_call_operand.vmem [shape: bf16[32,128], index: 3, kind: output, shape index: {0}]
  %s4 = inlined_call_operand.vmem [shape: f32[1,2,128], index: 4, kind: output, shape index: {1}]
  %5 = xla_tuple %s3, %s4
  %s6 = sld [smem:[#allocation0]]
  $region38: #{_lambda_.7} parent=0
    _
  %s8 = ssub.s32 1, %s6
  %s9 = scalar_select 0, %s8, %s6
  // Predicated region
  $region2: #{_lambda_.7} parent=0 // pred_check
    _
  $region3: #{_lambda_.7} parent=0 // pred_check_branch
    %11 = sbr.rel (0) target = $region5
  $region4: #{_lambda_.7} parent=0 // pred_region
    _
  $region5: #{_lambda_.7} parent=0 // pred_fallthru
    _
  // Predicated region
  $region6: #{_lambda_.7} parent=0 // pred_check
    _
  $region7: #{_lambda_.7} parent=0 // pred_check_branch
    %13 = sbr.rel (0) target = $region9
  $region8: #{_lambda_.7} parent=0 // pred_region
    _
  $region9: #{_lambda_.7} parent=0 // pred_fallthru
    _
  // Predicated region
  $region10: #{_lambda_.7} parent=0 // pred_check
    _
  $region11: #{_lambda_.7} parent=0 // pred_check_branch
    %15 = sbr.rel (0) target = $region13
  $region12: #{_lambda_.7} parent=0 // pred_region
    _
  $region13: #{_lambda_.7} parent=0 // pred_fallthru
    _
  %p17 = scmp.eq.s32.totalorder 0, 0
  // Predicated region
  $region14: #{_lambda_.7} parent=0 // pred_check
    %p18 = pneg %p17
  $region15: #{_lambda_.7} parent=0 // pred_check_branch
    %20 = sbr.rel (%p18) target = $region17
  $region16: #{_lambda_.7} parent=0 // pred_region
    %21 = vst [vmem:[#allocation2] sm:$0xff] 0.0
    %22 = vst [vmem:[#allocation2 + $0x8] sm:$0xff] 0.0
    %23 = vst [vmem:[#allocation2 + $0x10] sm:$0xff] 0.0
    %24 = vst [vmem:[#allocation2 + $0x18] sm:$0xff] 0.0
  $region17: #{_lambda_.7} parent=0 // pred_fallthru
    _
  %v25 = vld [vmem:[%s1] sm:$0xf]
  %v26 = vld [vmem:[%s1 + $0x4] sm:$0xf]
  %v27 = vld [vmem:[%s1 + $0x8] sm:$0xf]
  %v28 = vld [vmem:[%s1 + $0xc] sm:$0xf]
  %v29 = vld [vmem:[%s1 + $0x10] sm:$0xf]
  %v30 = vld [vmem:[%s1 + $0x14] sm:$0xf]
  %v31 = vld [vmem:[%s1 + $0x18] sm:$0xf]
  %v32 = vld [vmem:[%s1 + $0x1c] sm:$0xf]
  %v33 = vld [vmem:[%s1 + $0x20] sm:$0xf]
  %v34 = vld [vmem:[%s1 + $0x24] sm:$0xf]
  %v35 = vld [vmem:[%s1 + $0x28] sm:$0xf]
  %v36 = vld [vmem:[%s1 + $0x2c] sm:$0xf]
  %v37 = vld [vmem:[%s1 + $0x30] sm:$0xf]
  %v38 = vld [vmem:[%s1 + $0x34] sm:$0xf]
  %v39 = vld [vmem:[%s1 + $0x38] sm:$0xf]
  %v40 = vld [vmem:[%s1 + $0x3c] sm:$0xf]
  %v41 = vld [vmem:[%s1 + $0x40] sm:$0xf]
  %v42 = vld [vmem:[%s1 + $0x44] sm:$0xf]
  %v43 = vld [vmem:[%s1 + $0x48] sm:$0xf]
  %v44 = vld [vmem:[%s1 + $0x4c] sm:$0xf]
  %v45 = vld [vmem:[%s1 + $0x50] sm:$0xf]
  %v46 = vld [vmem:[%s1 + $0x54] sm:$0xf]
  %v47 = vld [vmem:[%s1 + $0x58] sm:$0xf]
  %v48 = vld [vmem:[%s1 + $0x5c] sm:$0xf]
  %v49 = vld [vmem:[%s1 + $0x60] sm:$0xf]
  %v50 = vld [vmem:[%s1 + $0x64] sm:$0xf]
  %v51 = vld [vmem:[%s1 + $0x68] sm:$0xf]
  %v52 = vld [vmem:[%s1 + $0x6c] sm:$0xf]
  %v53 = vld [vmem:[%s1 + $0x70] sm:$0xf]
  %v54 = vld [vmem:[%s1 + $0x74] sm:$0xf]
  %v55 = vld [vmem:[%s1 + $0x78] sm:$0xf]
  %v56 = vld [vmem:[%s1 + $0x7c] sm:$0xf]
  %v57 = vld [vmem:[#allocation2] sm:$0xff]
  %v58 = vld [vmem:[#allocation2 + $0x8] sm:$0xff]
  %v59 = vld [vmem:[#allocation2 + $0x10] sm:$0xff]
  %v60 = vld [vmem:[#allocation2 + $0x18] sm:$0xff]
  %v61 = vld [vmem:[%s0] sm:$0xff]
  %v62 = vld [vmem:[%s0 + $0x8] sm:$0xff]
  %v63 = vld [vmem:[%s0 + $0x10] sm:$0xff]
  %v64 = vld [vmem:[%s0 + $0x18] sm:$0xff]
  %v69 = vunpack.c.l.b16 %v61
  %v70 = vunpack.c.h.b16 %v61
  %v71 = vunpack.c.l.b16 %v62
  %v72 = vunpack.c.h.b16 %v62
  %v73 = vunpack.c.l.b16 %v63
  %v74 = vunpack.c.h.b16 %v63
  %v75 = vunpack.c.l.b16 %v64
  %v76 = vunpack.c.h.b16 %v64
  %v77 = vpack.c.b16 %v71, %v69
  %v78 = vpack.c.b16 %v72, %v70
  %v79 = vpack.c.b16 %v75, %v73
  %v80 = vpack.c.b16 %v76, %v74
  %v117 = vunpack.c.l.b16 %v25
  %v118 = vunpack.c.l.b16 %v26
  %v119 = vunpack.c.l.b16 %v27
  %v120 = vunpack.c.l.b16 %v28
  %v121 = vunpack.c.l.b16 %v29
  %v122 = vunpack.c.l.b16 %v30
  %v123 = vunpack.c.l.b16 %v31
  %v124 = vunpack.c.l.b16 %v32
  %v125 = vunpack.c.l.b16 %v33
  %v126 = vunpack.c.l.b16 %v34
  %v127 = vunpack.c.l.b16 %v35
  %v128 = vunpack.c.l.b16 %v36
  %v129 = vunpack.c.l.b16 %v37
  %v130 = vunpack.c.l.b16 %v38
  %v131 = vunpack.c.l.b16 %v39
  %v132 = vunpack.c.l.b16 %v40
  %v133 = vunpack.c.l.b16 %v41
  %v134 = vunpack.c.l.b16 %v42
  %v135 = vunpack.c.l.b16 %v43
  %v136 = vunpack.c.l.b16 %v44
  %v137 = vunpack.c.l.b16 %v45
  %v138 = vunpack.c.l.b16 %v46
  %v139 = vunpack.c.l.b16 %v47
  %v140 = vunpack.c.l.b16 %v48
  %v141 = vunpack.c.l.b16 %v49
  %v142 = vunpack.c.l.b16 %v50
  %v143 = vunpack.c.l.b16 %v51
  %v144 = vunpack.c.l.b16 %v52
  %v145 = vunpack.c.l.b16 %v53
  %v146 = vunpack.c.l.b16 %v54
  %v147 = vunpack.c.l.b16 %v55
  %v148 = vunpack.c.l.b16 %v56
  %v149 = vpack.c.b16 %v118, %v117
  %v150 = vpack.c.b16 %v120, %v119
  %v151 = vpack.c.b16 %v122, %v121
  %v152 = vpack.c.b16 %v124, %v123
  %v153 = vpack.c.b16 %v126, %v125
  %v154 = vpack.c.b16 %v128, %v127
  %v155 = vpack.c.b16 %v130, %v129
  %v156 = vpack.c.b16 %v132, %v131
  %v157 = vpack.c.b16 %v134, %v133
  %v158 = vpack.c.b16 %v136, %v135
  %v159 = vpack.c.b16 %v138, %v137
  %v160 = vpack.c.b16 %v140, %v139
  %v161 = vpack.c.b16 %v142, %v141
  %v162 = vpack.c.b16 %v144, %v143
  %v163 = vpack.c.b16 %v146, %v145
  %v164 = vpack.c.b16 %v148, %v147
  %181 = vmatprep.subr.bf16.mxu0 0
  %182 = vmatpush1.bf16.msra.mxu0 %v149
  %183 = vmatprep.subr.bf16.mxu0 0
  %184 = vmatpush1.bf16.msra.mxu0 %v150
  %185 = vmatprep.subr.bf16.mxu0 0
  %186 = vmatpush1.bf16.msra.mxu0 %v151
  %187 = vmatprep.subr.bf16.mxu0 0
  %188 = vmatpush1.bf16.msra.mxu0 %v152
  %189 = vmatprep.subr.bf16.mxu0 0
  %190 = vmatpush1.bf16.msra.mxu0 %v153
  %191 = vmatprep.subr.bf16.mxu0 0
  %192 = vmatpush1.bf16.msra.mxu0 %v154
  %193 = vmatprep.subr.bf16.mxu0 0
  %194 = vmatpush1.bf16.msra.mxu0 %v155
  %195 = vmatprep.subr.bf16.mxu0 0
  %196 = vmatpush1.bf16.msra.mxu0 %v156
  %197 = vmatprep.subr.bf16.mxu0 0
  %198 = vmatpush1.bf16.msra.mxu0 %v157
  %199 = vmatprep.subr.bf16.mxu0 0
  %200 = vmatpush1.bf16.msra.mxu0 %v158
  %201 = vmatprep.subr.bf16.mxu0 0
  %202 = vmatpush1.bf16.msra.mxu0 %v159
  %203 = vmatprep.subr.bf16.mxu0 0
  %204 = vmatpush1.bf16.msra.mxu0 %v160
  %205 = vmatprep.subr.bf16.mxu0 0
  %206 = vmatpush1.bf16.msra.mxu0 %v161
  %207 = vmatprep.subr.bf16.mxu0 0
  %208 = vmatpush1.bf16.msra.mxu0 %v162
  %209 = vmatprep.subr.bf16.mxu0 0
  %210 = vmatpush1.bf16.msra.mxu0 %v163
  %211 = vmatprep.subr.bf16.mxu0 0
  %212 = vmatpush1.bf16.msra.mxu0 %v164
  %213 = vmatprep.mubr.bf16.mxu0 %v78
  %214 = vmatmul.mubr.bf16.gmra.mrb[0].mxu0 %v77
  %v215 = vpop.f32.mrb[0].mxu0
  %v216 = vadd.f32 0.0, %v215
  %v217 = vpop.f32.mrb[0].mxu0
  %v218 = vpop.f32.mrb[0].mxu0
  %v219 = vadd.f32 0.0, %v218
  %v220 = vpop.f32.mrb[0].mxu0
  %221 = vmatprep.mubr.bf16.mxu0 %v80
  %222 = vmatmul.mubr.bf16.gmra.mrb[0].mxu0 %v79
  %v223 = vpop.f32.mrb[0].mxu0
  %v224 = vadd.f32 0.0, %v223
  %v225 = vpop.f32.mrb[0].mxu0
  %v226 = vpop.f32.mrb[0].mxu0
  %v227 = vadd.f32 0.0, %v226
  %v228 = vpop.f32.mrb[0].mxu0
  %229 = vdwg.mxu0
  %v230 = vadd.f32 %v57, %v216
  %v231 = vadd.f32 %v58, %v219
  %v232 = vadd.f32 %v59, %v224
  %v233 = vadd.f32 %v60, %v227
  %234 = vst [vmem:[#allocation2] sm:$0xff] %v230
  %235 = vst [vmem:[#allocation2 + $0x8] sm:$0xff] %v231
  %236 = vst [vmem:[#allocation2 + $0x10] sm:$0xff] %v232
  %237 = vst [vmem:[#allocation2 + $0x18] sm:$0xff] %v233
  %s238 = smul.u32 0, 32
  %v239 = vlaneseq
  %v240 = vshrl.u32 %v239, 7
  %v241 = vadd.s32 %v240, 8
  %v242 = vadd.s32 %v240, 16
  %v243 = vadd.s32 %v240, 24
  %v244 = vstv %s238
  %v245 = vadd.s32 %v244, %v240
  %v246 = vadd.s32 %v244, %v241
  %v247 = vadd.s32 %v244, %v242
  %v248 = vadd.s32 %v244, %v243
  %vm249 = vcmp.lt.s32.totalorder %v245, 18
  %vm250 = vcmp.lt.s32.totalorder %v246, 18
  %vm251 = vcmp.lt.s32.totalorder %v247, 18
  %vm252 = vcmp.lt.s32.totalorder %v248, 18
  // Predicated region
  $region18: #{_lambda_.7} parent=0 // pred_check
    %p253 = pneg %p17
  $region19: #{_lambda_.7} parent=0 // pred_check_branch
    %255 = sbr.rel (%p253) target = $region21
  $region20: #{_lambda_.7} parent=0 // pred_region
    %v256 = vld [vmem:[#allocation2] sm:$0xff]
    %v257 = vld [vmem:[#allocation2 + $0x8] sm:$0xff]
    %v258 = vld [vmem:[#allocation2 + $0x10] sm:$0xff]
    %v259 = vld [vmem:[#allocation2 + $0x18] sm:$0xff]
    %v260 = vld [vmem:[%s2] sm:$0x1]
    %v262 = vlaneseq
    %v263 = vshrl.u32 %v262, 7
    %v264 = vsub.s32 0, %v263
    %v265 = vrot.slane %v260, %v264
    %v267 = vadd.f32 %v256, %v265
    %v268 = vadd.f32 %v257, %v265
    %v269 = vadd.f32 %v258, %v265
    %v270 = vadd.f32 %v259, %v265
    %v271 = vpack.c.bf16 %v268, %v267
    %v272 = vpack.c.bf16 %v270, %v269
    %v275 = vunpack.c.l.b16 %v271
    %v276 = vunpack.c.h.b16 %v271
    %v277 = vunpack.c.l.b16 %v272
    %v278 = vunpack.c.h.b16 %v272
    %v279 = vpack.c.b16 %v275, %v275
    %v280 = vpack.c.b16 %v276, %v276
    %v281 = vpack.c.b16 %v277, %v277
    %v282 = vpack.c.b16 %v278, %v278
    %287 = vst [vmem:[%s3] sm:$0xf] %v279
    %288 = vst [vmem:[%s3 + $0x4] sm:$0xf] %v280
    %289 = vst [vmem:[%s3 + $0x8] sm:$0xf] %v281
    %290 = vst [vmem:[%s3 + $0xc] sm:$0xf] %v282
    %v291 = vsel %vm249, %v267, 0.0
    %v292 = vsel %vm250, %v268, 0.0
    %v293 = vsel %vm251, %v269, 0.0
    %v294 = vsel %vm252, %v270, 0.0
    %v295 = vadd.f32 %v291, %v292
    %v296 = vadd.f32 %v295, %v293
    %v297 = vadd.f32 %v296, %v294
    %v298 = vrot.slane %v297, 4
    %v299 = vadd.f32 %v297, %v298
    %v300 = vrot.slane %v299, 2
    %v301 = vadd.f32 %v299, %v300
    %v302 = vrot.slane %v301, 1
    %v303 = vadd.f32 %v301, %v302
    %v304 = vmul.f32 %v291, %v291
    %v305 = vmul.f32 %v292, %v292
    %v306 = vmul.f32 %v293, %v293
    %v307 = vmul.f32 %v294, %v294
    %v308 = vadd.f32 %v304, %v305
    %v309 = vadd.f32 %v308, %v306
    %v310 = vadd.f32 %v309, %v307
    %v311 = vrot.slane %v310, 4
    %v312 = vadd.f32 %v310, %v311
    %v313 = vrot.slane %v312, 2
    %v314 = vadd.f32 %v312, %v313
    %v315 = vrot.slane %v314, 1
    %v316 = vadd.f32 %v314, %v315
    %vm317 = vcmask 1040384
    %v318 = vsel %vm317, %v303, %v316
    %319 = vst [vmem:[%s4] sm:$0x3] %v318
  $region21: #{_lambda_.7} parent=0 // pred_fallthru
    _
  // Predicated region
  $region22: #{_lambda_.7} parent=0 // pred_check
    _
  $region23: #{_lambda_.7} parent=0 // pred_check_branch
    %321 = sbr.rel (0) target = $region25
  $region24: #{_lambda_.7} parent=0 // pred_region
    _
  $region25: #{_lambda_.7} parent=0 // pred_fallthru
    _
  // Predicated region
  $region26: #{_lambda_.7} parent=0 // pred_check
    _
  $region27: #{_lambda_.7} parent=0 // pred_check_branch
    %323 = sbr.rel (0) target = $region29
  $region28: #{_lambda_.7} parent=0 // pred_region
    _
  $region29: #{_lambda_.7} parent=0 // pred_fallthru
    _
  // Predicated region
  $region30: #{_lambda_.7} parent=0 // pred_check
    _
  $region31: #{_lambda_.7} parent=0 // pred_check_branch
    %325 = sbr.rel (0) target = $region33
  $region32: #{_lambda_.7} parent=0 // pred_region
    _
  $region33: #{_lambda_.7} parent=0 // pred_fallthru
    _
  // Predicated region
  $region34: #{_lambda_.7} parent=0 // pred_check
    _
  $region35: #{_lambda_.7} parent=0 // pred_check_branch
    %327 = sbr.rel (0) target = $region37
  $region36: #{_lambda_.7} parent=0 // pred_region
    _
  $region37: #{_lambda_.7} parent=0 // pred_fallthru
    _

// kernel: _lambda_.8
$region0: #{_lambda_.8}
  #allocation0 [shape = 'u32[]', space=smem, size = 0x4, offset = 0x4, fixed_abs, tag = 'smem constant byte address 0x4 - core index']
  #allocation1 [shape = 'u32[144,128]{1,0:T(1,128)}', space=vmem, size = 0x12000, scoped, tag = 'internal scratch']
  #allocation2 [shape = 'f32[32,128]{1,0:T(8,128)}', space=vmem, size = 0x4000, scoped, tag = 'scratch operand']
  %s0 = inlined_call_operand.vmem [shape: bf16[32,512], index: 0, kind: input, shape index: {}]
  %s1 = inlined_call_operand.vmem [shape: bf16[512,128], index: 1, kind: input, shape index: {}]
  %s2 = inlined_call_operand.vmem [shape: f32[1,128], index: 2, kind: input, shape index: {}]
  %s3 = inlined_call_operand.vmem [shape: bf16[32,128], index: 3, kind: output, shape index: {0}]
  %s4 = inlined_call_operand.vmem [shape: f32[1,2,128], index: 4, kind: output, shape index: {1}]
  %5 = xla_tuple %s3, %s4
  %s6 = sld [smem:[#allocation0]]
  $region38: #{_lambda_.8} parent=0
    _
  %s8 = ssub.s32 1, %s6
  %s9 = scalar_select 0, %s8, %s6
  // Predicated region
  $region2: #{_lambda_.8} parent=0 // pred_check
    _
  $region3: #{_lambda_.8} parent=0 // pred_check_branch
    %11 = sbr.rel (0) target = $region5
  $region4: #{_lambda_.8} parent=0 // pred_region
    _
  $region5: #{_lambda_.8} parent=0 // pred_fallthru
    _
  // Predicated region
  $region6: #{_lambda_.8} parent=0 // pred_check
    _
  $region7: #{_lambda_.8} parent=0 // pred_check_branch
    %13 = sbr.rel (0) target = $region9
  $region8: #{_lambda_.8} parent=0 // pred_region
    _
  $region9: #{_lambda_.8} parent=0 // pred_fallthru
    _
  // Predicated region
  $region10: #{_lambda_.8} parent=0 // pred_check
    _
  $region11: #{_lambda_.8} parent=0 // pred_check_branch
    %15 = sbr.rel (0) target = $region13
  $region12: #{_lambda_.8} parent=0 // pred_region
    _
  $region13: #{_lambda_.8} parent=0 // pred_fallthru
    _
  %p17 = scmp.eq.s32.totalorder 0, 0
  // Predicated region
  $region14: #{_lambda_.8} parent=0 // pred_check
    %p18 = pneg %p17
  $region15: #{_lambda_.8} parent=0 // pred_check_branch
    %20 = sbr.rel (%p18) target = $region17
  $region16: #{_lambda_.8} parent=0 // pred_region
    %21 = vst [vmem:[#allocation2] sm:$0xff] 0.0
    %22 = vst [vmem:[#allocation2 + $0x8] sm:$0xff] 0.0
    %23 = vst [vmem:[#allocation2 + $0x10] sm:$0xff] 0.0
    %24 = vst [vmem:[#allocation2 + $0x18] sm:$0xff] 0.0
  $region17: #{_lambda_.8} parent=0 // pred_fallthru
    _
  %v25 = vld [vmem:[%s1] sm:$0xf]
  %v26 = vld [vmem:[%s1 + $0x4] sm:$0xf]
  %v27 = vld [vmem:[%s1 + $0x8] sm:$0xf]
  %v28 = vld [vmem:[%s1 + $0xc] sm:$0xf]
  %v29 = vld [vmem:[%s1 + $0x10] sm:$0xf]
  %v30 = vld [vmem:[%s1 + $0x14] sm:$0xf]
  %v31 = vld [vmem:[%s1 + $0x18] sm:$0xf]
  %v32 = vld [vmem:[%s1 + $0x1c] sm:$0xf]
  %v33 = vld [vmem:[%s1 + $0x20] sm:$0xf]
  %v34 = vld [vmem:[%s1 + $0x24] sm:$0xf]
  %v35 = vld [vmem:[%s1 + $0x28] sm:$0xf]
  %v36 = vld [vmem:[%s1 + $0x2c] sm:$0xf]
  %v37 = vld [vmem:[%s1 + $0x30] sm:$0xf]
  %v38 = vld [vmem:[%s1 + $0x34] sm:$0xf]
  %v39 = vld [vmem:[%s1 + $0x38] sm:$0xf]
  %v40 = vld [vmem:[%s1 + $0x3c] sm:$0xf]
  %v41 = vld [vmem:[%s1 + $0x40] sm:$0xf]
  %v42 = vld [vmem:[%s1 + $0x44] sm:$0xf]
  %v43 = vld [vmem:[%s1 + $0x48] sm:$0xf]
  %v44 = vld [vmem:[%s1 + $0x4c] sm:$0xf]
  %v45 = vld [vmem:[%s1 + $0x50] sm:$0xf]
  %v46 = vld [vmem:[%s1 + $0x54] sm:$0xf]
  %v47 = vld [vmem:[%s1 + $0x58] sm:$0xf]
  %v48 = vld [vmem:[%s1 + $0x5c] sm:$0xf]
  %v49 = vld [vmem:[%s1 + $0x60] sm:$0xf]
  %v50 = vld [vmem:[%s1 + $0x64] sm:$0xf]
  %v51 = vld [vmem:[%s1 + $0x68] sm:$0xf]
  %v52 = vld [vmem:[%s1 + $0x6c] sm:$0xf]
  %v53 = vld [vmem:[%s1 + $0x70] sm:$0xf]
  %v54 = vld [vmem:[%s1 + $0x74] sm:$0xf]
  %v55 = vld [vmem:[%s1 + $0x78] sm:$0xf]
  %v56 = vld [vmem:[%s1 + $0x7c] sm:$0xf]
  %v57 = vld [vmem:[%s1 + $0x80] sm:$0xf]
  %v58 = vld [vmem:[%s1 + $0x84] sm:$0xf]
  %v59 = vld [vmem:[%s1 + $0x88] sm:$0xf]
  %v60 = vld [vmem:[%s1 + $0x8c] sm:$0xf]
  %v61 = vld [vmem:[%s1 + $0x90] sm:$0xf]
  %v62 = vld [vmem:[%s1 + $0x94] sm:$0xf]
  %v63 = vld [vmem:[%s1 + $0x98] sm:$0xf]
  %v64 = vld [vmem:[%s1 + $0x9c] sm:$0xf]
  %v65 = vld [vmem:[%s1 + $0xa0] sm:$0xf]
  %v66 = vld [vmem:[%s1 + $0xa4] sm:$0xf]
  %v67 = vld [vmem:[%s1 + $0xa8] sm:$0xf]
  %v68 = vld [vmem:[%s1 + $0xac] sm:$0xf]
  %v69 = vld [vmem:[%s1 + $0xb0] sm:$0xf]
  %v70 = vld [vmem:[%s1 + $0xb4] sm:$0xf]
  %v71 = vld [vmem:[%s1 + $0xb8] sm:$0xf]
  %v72 = vld [vmem:[%s1 + $0xbc] sm:$0xf]
  %v73 = vld [vmem:[%s1 + $0xc0] sm:$0xf]
  %v74 = vld [vmem:[%s1 + $0xc4] sm:$0xf]
  %v75 = vld [vmem:[%s1 + $0xc8] sm:$0xf]
  %v76 = vld [vmem:[%s1 + $0xcc] sm:$0xf]
  %v77 = vld [vmem:[%s1 + $0xd0] sm:$0xf]
  %v78 = vld [vmem:[%s1 + $0xd4] sm:$0xf]
  %v79 = vld [vmem:[%s1 + $0xd8] sm:$0xf]
  %v80 = vld [vmem:[%s1 + $0xdc] sm:$0xf]
  %v81 = vld [vmem:[%s1 + $0xe0] sm:$0xf]
  %v82 = vld [vmem:[%s1 + $0xe4] sm:$0xf]
  %v83 = vld [vmem:[%s1 + $0xe8] sm:$0xf]
  %v84 = vld [vmem:[%s1 + $0xec] sm:$0xf]
  %v85 = vld [vmem:[%s1 + $0xf0] sm:$0xf]
  %v86 = vld [vmem:[%s1 + $0xf4] sm:$0xf]
  %v87 = vld [vmem:[%s1 + $0xf8] sm:$0xf]
  %v88 = vld [vmem:[%s1 + $0xfc] sm:$0xf]
  %v89 = vld [vmem:[#allocation2] sm:$0xff]
  %v90 = vld [vmem:[#allocation2 + $0x8] sm:$0xff]
  %v91 = vld [vmem:[#allocation2 + $0x10] sm:$0xff]
  %v92 = vld [vmem:[#allocation2 + $0x18] sm:$0xff]
  %v93 = vld [vmem:[%s0] sm:$0xff]
  %v94 = vld [vmem:[%s0 + $0x8] sm:$0xff]
  %v95 = vld [vmem:[%s0 + $0x10] sm:$0xff]
  %v96 = vld [vmem:[%s0 + $0x18] sm:$0xff]
  %v97 = vld [vmem:[%s0 + $0x20] sm:$0xff]
  %v98 = vld [vmem:[%s0 + $0x28] sm:$0xff]
  %v99 = vld [vmem:[%s0 + $0x30] sm:$0xff]
  %v100 = vld [vmem:[%s0 + $0x38] sm:$0xff]
  %v109 = vunpack.c.l.b16 %v93
  %v110 = vunpack.c.h.b16 %v93
  %v111 = vunpack.c.l.b16 %v94
  %v112 = vunpack.c.h.b16 %v94
  %v113 = vunpack.c.l.b16 %v95
  %v114 = vunpack.c.h.b16 %v95
  %v115 = vunpack.c.l.b16 %v96
  %v116 = vunpack.c.h.b16 %v96
  %v117 = vunpack.c.l.b16 %v97
  %v118 = vunpack.c.h.b16 %v97
  %v119 = vunpack.c.l.b16 %v98
  %v120 = vunpack.c.h.b16 %v98
  %v121 = vunpack.c.l.b16 %v99
  %v122 = vunpack.c.h.b16 %v99
  %v123 = vunpack.c.l.b16 %v100
  %v124 = vunpack.c.h.b16 %v100
  %v125 = vpack.c.b16 %v113, %v109
  %v126 = vpack.c.b16 %v114, %v110
  %v127 = vpack.c.b16 %v115, %v111
  %v128 = vpack.c.b16 %v116, %v112
  %v129 = vpack.c.b16 %v121, %v117
  %v130 = vpack.c.b16 %v122, %v118
  %v131 = vpack.c.b16 %v123, %v119
  %v132 = vpack.c.b16 %v124, %v120
  %v205 = vunpack.c.l.b16 %v25
  %v206 = vunpack.c.l.b16 %v26
  %v207 = vunpack.c.l.b16 %v27
  %v208 = vunpack.c.l.b16 %v28
  %v209 = vunpack.c.l.b16 %v29
  %v210 = vunpack.c.l.b16 %v30
  %v211 = vunpack.c.l.b16 %v31
  %v212 = vunpack.c.l.b16 %v32
  %v213 = vunpack.c.l.b16 %v33
  %v214 = vunpack.c.l.b16 %v34
  %v215 = vunpack.c.l.b16 %v35
  %v216 = vunpack.c.l.b16 %v36
  %v217 = vunpack.c.l.b16 %v37
  %v218 = vunpack.c.l.b16 %v38
  %v219 = vunpack.c.l.b16 %v39
  %v220 = vunpack.c.l.b16 %v40
  %v221 = vunpack.c.l.b16 %v41
  %v222 = vunpack.c.l.b16 %v42
  %v223 = vunpack.c.l.b16 %v43
  %v224 = vunpack.c.l.b16 %v44
  %v225 = vunpack.c.l.b16 %v45
  %v226 = vunpack.c.l.b16 %v46
  %v227 = vunpack.c.l.b16 %v47
  %v228 = vunpack.c.l.b16 %v48
  %v229 = vunpack.c.l.b16 %v49
  %v230 = vunpack.c.l.b16 %v50
  %v231 = vunpack.c.l.b16 %v51
  %v232 = vunpack.c.l.b16 %v52
  %v233 = vunpack.c.l.b16 %v53
  %v234 = vunpack.c.l.b16 %v54
  %v235 = vunpack.c.l.b16 %v55
  %v236 = vunpack.c.l.b16 %v56
  %v237 = vunpack.c.l.b16 %v57
  %v238 = vunpack.c.l.b16 %v58
  %v239 = vunpack.c.l.b16 %v59
  %v240 = vunpack.c.l.b16 %v60
  %v241 = vunpack.c.l.b16 %v61
  %v242 = vunpack.c.l.b16 %v62
  %v243 = vunpack.c.l.b16 %v63
  %v244 = vunpack.c.l.b16 %v64
  %v245 = vunpack.c.l.b16 %v65
  %v246 = vunpack.c.l.b16 %v66
  %v247 = vunpack.c.l.b16 %v67
  %v248 = vunpack.c.l.b16 %v68
  %v249 = vunpack.c.l.b16 %v69
  %v250 = vunpack.c.l.b16 %v70
  %v251 = vunpack.c.l.b16 %v71
  %v252 = vunpack.c.l.b16 %v72
  %v253 = vunpack.c.l.b16 %v73
  %v254 = vunpack.c.l.b16 %v74
  %v255 = vunpack.c.l.b16 %v75
  %v256 = vunpack.c.l.b16 %v76
  %v257 = vunpack.c.l.b16 %v77
  %v258 = vunpack.c.l.b16 %v78
  %v259 = vunpack.c.l.b16 %v79
  %v260 = vunpack.c.l.b16 %v80
  %v261 = vunpack.c.l.b16 %v81
  %v262 = vunpack.c.l.b16 %v82
  %v263 = vunpack.c.l.b16 %v83
  %v264 = vunpack.c.l.b16 %v84
  %v265 = vunpack.c.l.b16 %v85
  %v266 = vunpack.c.l.b16 %v86
  %v267 = vunpack.c.l.b16 %v87
  %v268 = vunpack.c.l.b16 %v88
  %v269 = vpack.c.b16 %v206, %v205
  %v270 = vpack.c.b16 %v208, %v207
  %v271 = vpack.c.b16 %v210, %v209
  %v272 = vpack.c.b16 %v212, %v211
  %v273 = vpack.c.b16 %v214, %v213
  %v274 = vpack.c.b16 %v216, %v215
  %v275 = vpack.c.b16 %v218, %v217
  %v276 = vpack.c.b16 %v220, %v219
  %v277 = vpack.c.b16 %v222, %v221
  %v278 = vpack.c.b16 %v224, %v223
  %v279 = vpack.c.b16 %v226, %v225
  %v280 = vpack.c.b16 %v228, %v227
  %v281 = vpack.c.b16 %v230, %v229
  %v282 = vpack.c.b16 %v232, %v231
  %v283 = vpack.c.b16 %v234, %v233
  %v284 = vpack.c.b16 %v236, %v235
  %v285 = vpack.c.b16 %v238, %v237
  %v286 = vpack.c.b16 %v240, %v239
  %v287 = vpack.c.b16 %v242, %v241
  %v288 = vpack.c.b16 %v244, %v243
  %v289 = vpack.c.b16 %v246, %v245
  %v290 = vpack.c.b16 %v248, %v247
  %v291 = vpack.c.b16 %v250, %v249
  %v292 = vpack.c.b16 %v252, %v251
  %v293 = vpack.c.b16 %v254, %v253
  %v294 = vpack.c.b16 %v256, %v255
  %v295 = vpack.c.b16 %v258, %v257
  %v296 = vpack.c.b16 %v260, %v259
  %v297 = vpack.c.b16 %v262, %v261
  %v298 = vpack.c.b16 %v264, %v263
  %v299 = vpack.c.b16 %v266, %v265
  %v300 = vpack.c.b16 %v268, %v267
  %333 = vmatprep.subr.bf16.mxu0 0
  %334 = vmatpush1.bf16.msra.mxu0 %v269
  %335 = vmatprep.subr.bf16.mxu0 0
  %336 = vmatpush1.bf16.msra.mxu0 %v270
  %337 = vmatprep.subr.bf16.mxu0 0
  %338 = vmatpush1.bf16.msra.mxu0 %v271
  %339 = vmatprep.subr.bf16.mxu0 0
  %340 = vmatpush1.bf16.msra.mxu0 %v272
  %341 = vmatprep.subr.bf16.mxu0 0
  %342 = vmatpush1.bf16.msra.mxu0 %v273
  %343 = vmatprep.subr.bf16.mxu0 0
  %344 = vmatpush1.bf16.msra.mxu0 %v274
  %345 = vmatprep.subr.bf16.mxu0 0
  %346 = vmatpush1.bf16.msra.mxu0 %v275
  %347 = vmatprep.subr.bf16.mxu0 0
  %348 = vmatpush1.bf16.msra.mxu0 %v276
  %349 = vmatprep.subr.bf16.mxu0 0
  %350 = vmatpush1.bf16.msra.mxu0 %v277
  %351 = vmatprep.subr.bf16.mxu0 0
  %352 = vmatpush1.bf16.msra.mxu0 %v278
  %353 = vmatprep.subr.bf16.mxu0 0
  %354 = vmatpush1.bf16.msra.mxu0 %v279
  %355 = vmatprep.subr.bf16.mxu0 0
  %356 = vmatpush1.bf16.msra.mxu0 %v280
  %357 = vmatprep.subr.bf16.mxu0 0
  %358 = vmatpush1.bf16.msra.mxu0 %v281
  %359 = vmatprep.subr.bf16.mxu0 0
  %360 = vmatpush1.bf16.msra.mxu0 %v282
  %361 = vmatprep.subr.bf16.mxu0 0
  %362 = vmatpush1.bf16.msra.mxu0 %v283
  %363 = vmatprep.subr.bf16.mxu0 0
  %364 = vmatpush1.bf16.msra.mxu0 %v284
  %365 = vmatprep.mubr.bf16.mxu0 %v126
  %366 = vmatmul.mubr.bf16.gmra.mrb[0].mxu0 %v125
  %v367 = vpop.f32.mrb[0].mxu0
  %v368 = vadd.f32 0.0, %v367
  %v369 = vpop.f32.mrb[0].mxu0
  %v370 = vpop.f32.mrb[0].mxu0
  %v371 = vadd.f32 0.0, %v370
  %v372 = vpop.f32.mrb[0].mxu0
  %373 = vmatprep.mubr.bf16.mxu0 %v130
  %374 = vmatmul.mubr.bf16.gmra.mrb[0].mxu0 %v129
  %v375 = vpop.f32.mrb[0].mxu0
  %v376 = vadd.f32 0.0, %v375
  %v377 = vpop.f32.mrb[0].mxu0
  %v378 = vpop.f32.mrb[0].mxu0
  %v379 = vadd.f32 0.0, %v378
  %v380 = vpop.f32.mrb[0].mxu0
  %381 = vdwg.mxu0
  %382 = vmatprep.subr.bf16.mxu0 0
  %383 = vmatpush1.bf16.msra.mxu0 %v285
  %384 = vmatprep.subr.bf16.mxu0 0
  %385 = vmatpush1.bf16.msra.mxu0 %v286
  %386 = vmatprep.subr.bf16.mxu0 0
  %387 = vmatpush1.bf16.msra.mxu0 %v287
  %388 = vmatprep.subr.bf16.mxu0 0
  %389 = vmatpush1.bf16.msra.mxu0 %v288
  %390 = vmatprep.subr.bf16.mxu0 0
  %391 = vmatpush1.bf16.msra.mxu0 %v289
  %392 = vmatprep.subr.bf16.mxu0 0
  %393 = vmatpush1.bf16.msra.mxu0 %v290
  %394 = vmatprep.subr.bf16.mxu0 0
  %395 = vmatpush1.bf16.msra.mxu0 %v291
  %396 = vmatprep.subr.bf16.mxu0 0
  %397 = vmatpush1.bf16.msra.mxu0 %v292
  %398 = vmatprep.subr.bf16.mxu0 0
  %399 = vmatpush1.bf16.msra.mxu0 %v293
  %400 = vmatprep.subr.bf16.mxu0 0
  %401 = vmatpush1.bf16.msra.mxu0 %v294
  %402 = vmatprep.subr.bf16.mxu0 0
  %403 = vmatpush1.bf16.msra.mxu0 %v295
  %404 = vmatprep.subr.bf16.mxu0 0
  %405 = vmatpush1.bf16.msra.mxu0 %v296
  %406 = vmatprep.subr.bf16.mxu0 0
  %407 = vmatpush1.bf16.msra.mxu0 %v297
  %408 = vmatprep.subr.bf16.mxu0 0
  %409 = vmatpush1.bf16.msra.mxu0 %v298
  %410 = vmatprep.subr.bf16.mxu0 0
  %411 = vmatpush1.bf16.msra.mxu0 %v299
  %412 = vmatprep.subr.bf16.mxu0 0
  %413 = vmatpush1.bf16.msra.mxu0 %v300
  %414 = vmatprep.mubr.bf16.mxu0 %v128
  %415 = vmatmul.mubr.bf16.gmra.mrb[0].mxu0 %v127
  %v416 = vpop.f32.mrb[0].mxu0
  %v417 = vadd.f32 %v368, %v416
  %v418 = vpop.f32.mrb[0].mxu0
  %v419 = vpop.f32.mrb[0].mxu0
  %v420 = vadd.f32 %v371, %v419
  %v421 = vpop.f32.mrb[0].mxu0
  %422 = vmatprep.mubr.bf16.mxu0 %v132
  %423 = vmatmul.mubr.bf16.gmra.mrb[0].mxu0 %v131
  %v424 = vpop.f32.mrb[0].mxu0
  %v425 = vadd.f32 %v376, %v424
  %v426 = vpop.f32.mrb[0].mxu0
  %v427 = vpop.f32.mrb[0].mxu0
  %v428 = vadd.f32 %v379, %v427
  %v429 = vpop.f32.mrb[0].mxu0
  %430 = vdwg.mxu0
  %v431 = vadd.f32 %v89, %v417
  %v432 = vadd.f32 %v90, %v420
  %v433 = vadd.f32 %v91, %v425
  %v434 = vadd.f32 %v92, %v428
  %435 = vst [vmem:[#allocation2] sm:$0xff] %v431
  %436 = vst [vmem:[#allocation2 + $0x8] sm:$0xff] %v432
  %437 = vst [vmem:[#allocation2 + $0x10] sm:$0xff] %v433
  %438 = vst [vmem:[#allocation2 + $0x18] sm:$0xff] %v434
  %s439 = smul.u32 0, 32
  %v440 = vlaneseq
  %v441 = vshrl.u32 %v440, 7
  %v442 = vadd.s32 %v441, 8
  %v443 = vadd.s32 %v441, 16
  %v444 = vadd.s32 %v441, 24
  %v445 = vstv %s439
  %v446 = vadd.s32 %v445, %v441
  %v447 = vadd.s32 %v445, %v442
  %v448 = vadd.s32 %v445, %v443
  %v449 = vadd.s32 %v445, %v444
  %vm450 = vcmp.lt.s32.totalorder %v446, 32
  %vm451 = vcmp.lt.s32.totalorder %v447, 32
  %vm452 = vcmp.lt.s32.totalorder %v448, 32
  %vm453 = vcmp.lt.s32.totalorder %v449, 32
  // Predicated region
  $region18: #{_lambda_.8} parent=0 // pred_check
    %p454 = pneg %p17
  $region19: #{_lambda_.8} parent=0 // pred_check_branch
    %456 = sbr.rel (%p454) target = $region21
  $region20: #{_lambda_.8} parent=0 // pred_region
    %v457 = vld [vmem:[#allocation2] sm:$0xff]
    %v458 = vld [vmem:[#allocation2 + $0x8] sm:$0xff]
    %v459 = vld [vmem:[#allocation2 + $0x10] sm:$0xff]
    %v460 = vld [vmem:[#allocation2 + $0x18] sm:$0xff]
    %v461 = vld [vmem:[%s2] sm:$0x1]
    %v463 = vlaneseq
    %v464 = vshrl.u32 %v463, 7
    %v465 = vsub.s32 0, %v464
    %v466 = vrot.slane %v461, %v465
    %v468 = vadd.f32 %v457, %v466
    %v469 = vadd.f32 %v458, %v466
    %v470 = vadd.f32 %v459, %v466
    %v471 = vadd.f32 %v460, %v466
    %v472 = vpack.c.bf16 %v469, %v468
    %v473 = vpack.c.bf16 %v471, %v470
    %v476 = vunpack.c.l.b16 %v472
    %v477 = vunpack.c.h.b16 %v472
    %v478 = vunpack.c.l.b16 %v473
    %v479 = vunpack.c.h.b16 %v473
    %v480 = vpack.c.b16 %v476, %v476
    %v481 = vpack.c.b16 %v477, %v477
    %v482 = vpack.c.b16 %v478, %v478
    %v483 = vpack.c.b16 %v479, %v479
    %488 = vst [vmem:[%s3] sm:$0xf] %v480
    %489 = vst [vmem:[%s3 + $0x4] sm:$0xf] %v481
    %490 = vst [vmem:[%s3 + $0x8] sm:$0xf] %v482
    %491 = vst [vmem:[%s3 + $0xc] sm:$0xf] %v483
    %v492 = vsel %vm450, %v468, 0.0
    %v493 = vsel %vm451, %v469, 0.0
    %v494 = vsel %vm452, %v470, 0.0
    %v495 = vsel %vm453, %v471, 0.0
    %v496 = vadd.f32 %v492, %v493
    %v497 = vadd.f32 %v496, %v494
    %v498 = vadd.f32 %v497, %v495
    %v499 = vrot.slane %v498, 4
    %v500 = vadd.f32 %v498, %v499
    %v501 = vrot.slane %v500, 2
    %v502 = vadd.f32 %v500, %v501
    %v503 = vrot.slane %v502, 1
    %v504 = vadd.f32 %v502, %v503
    %v505 = vmul.f32 %v492, %v492
    %v506 = vmul.f32 %v493, %v493
    %v507 = vmul.f32 %v494, %v494
    %v508 = vmul.f32 %v495, %v495
    %v509 = vadd.f32 %v505, %v506
    %v510 = vadd.f32 %v509, %v507
    %v511 = vadd.f32 %v510, %v508
    %v512 = vrot.slane %v511, 4
    %v513 = vadd.f32 %v511, %v512
    %v514 = vrot.slane %v513, 2
    %v515 = vadd.f32 %v513, %v514
    %v516 = vrot.slane %v515, 1
    %v517 = vadd.f32 %v515, %v516
    %vm518 = vcmask 1040384
    %v519 = vsel %vm518, %v504, %v517
    %520 = vst [vmem:[%s4] sm:$0x3] %v519
  $region21: #{_lambda_.8} parent=0 // pred_fallthru
    _
  // Predicated region
  $region22: #{_lambda_.8} parent=0 // pred_check
    _
  $region23: #{_lambda_.8} parent=0 // pred_check_branch
    %522 = sbr.rel (0) target = $region25
  $region24: #{_lambda_.8} parent=0 // pred_region
    _
  $region25: #{_lambda_.8} parent=0 // pred_fallthru
    _
  // Predicated region
  $region26: #{_lambda_.8} parent=0 // pred_check
    _
  $region27: #{_lambda_.8} parent=0 // pred_check_branch
    %524 = sbr.rel (0) target = $region29
  $region28: #{_lambda_.8} parent=0 // pred_region
    _
  $region29: #{_lambda_.8} parent=0 // pred_fallthru
    _
  // Predicated region
  $region30: #{_lambda_.8} parent=0 // pred_check
    _
  $region31: #{_lambda_.8} parent=0 // pred_check_branch
    %526 = sbr.rel (0) target = $region33
  $region32: #{_lambda_.8} parent=0 // pred_region
    _
  $region33: #{_lambda_.8} parent=0 // pred_fallthru
    _
  // Predicated region
  $region34: #{_lambda_.8} parent=0 // pred_check
    _
  $region35: #{_lambda_.8} parent=0 // pred_check_branch
    %528 = sbr.rel (0) target = $region37
  $region36: #{_lambda_.8} parent=0 // pred_region
    _
  $region37: #{_lambda_.8} parent=0 // pred_fallthru
    _

// kernel: _lambda_.9
$region0: #{_lambda_.9}
  #allocation0 [shape = 'u32[]', space=smem, size = 0x4, offset = 0x4, fixed_abs, tag = 'smem constant byte address 0x4 - core index']
  #allocation1 [shape = 'u32[144,128]{1,0:T(1,128)}', space=vmem, size = 0x12000, scoped, tag = 'internal scratch']
  #allocation2 [shape = 'f32[64,128]{1,0:T(8,128)}', space=vmem, size = 0x8000, scoped, tag = 'scratch operand']
  %s0 = inlined_call_operand.vmem [shape: bf16[64,1024], index: 0, kind: input, shape index: {}]
  %s1 = inlined_call_operand.vmem [shape: bf16[1024,128], index: 1, kind: input, shape index: {}]
  %s2 = inlined_call_operand.vmem [shape: f32[1,128], index: 2, kind: input, shape index: {}]
  %s3 = inlined_call_operand.vmem [shape: f32[64,128], index: 3, kind: output, shape index: {}]
  %s4 = sld [smem:[#allocation0]]
  $region30: #{_lambda_.9} parent=0
    _
  %s6 = ssub.s32 1, %s4
  %s7 = scalar_select 0, %s6, %s4
  // Predicated region
  $region2: #{_lambda_.9} parent=0 // pred_check
    _
  $region3: #{_lambda_.9} parent=0 // pred_check_branch
    %9 = sbr.rel (0) target = $region5
  $region4: #{_lambda_.9} parent=0 // pred_region
    _
  $region5: #{_lambda_.9} parent=0 // pred_fallthru
    _
  // Predicated region
  $region6: #{_lambda_.9} parent=0 // pred_check
    _
  $region7: #{_lambda_.9} parent=0 // pred_check_branch
    %11 = sbr.rel (0) target = $region9
  $region8: #{_lambda_.9} parent=0 // pred_region
    _
  $region9: #{_lambda_.9} parent=0 // pred_fallthru
    _
  // Predicated region
  $region10: #{_lambda_.9} parent=0 // pred_check
    _
  $region11: #{_lambda_.9} parent=0 // pred_check_branch
    %13 = sbr.rel (0) target = $region13
  $region12: #{_lambda_.9} parent=0 // pred_region
    _
  $region13: #{_lambda_.9} parent=0 // pred_fallthru
    _
  %p15 = scmp.eq.s32.totalorder 0, 0
  // Predicated region
  $region14: #{_lambda_.9} parent=0 // pred_check
    %p16 = pneg %p15
  $region15: #{_lambda_.9} parent=0 // pred_check_branch
    %18 = sbr.rel (%p16) target = $region17
  $region16: #{_lambda_.9} parent=0 // pred_region
    %19 = vst [vmem:[#allocation2] sm:$0xff] 0.0
    %20 = vst [vmem:[#allocation2 + $0x8] sm:$0xff] 0.0
    %21 = vst [vmem:[#allocation2 + $0x10] sm:$0xff] 0.0
    %22 = vst [vmem:[#allocation2 + $0x18] sm:$0xff] 0.0
    %23 = vst [vmem:[#allocation2 + $0x20] sm:$0xff] 0.0
    %24 = vst [vmem:[#allocation2 + $0x28] sm:$0xff] 0.0
    %25 = vst [vmem:[#allocation2 + $0x30] sm:$0xff] 0.0
    %26 = vst [vmem:[#allocation2 + $0x38] sm:$0xff] 0.0
  $region17: #{_lambda_.9} parent=0 // pred_fallthru
    _
  %v27 = vld [vmem:[%s1] sm:$0xf]
  %v28 = vld [vmem:[%s1 + $0x4] sm:$0xf]
  %v29 = vld [vmem:[%s1 + $0x8] sm:$0xf]
  %v30 = vld [vmem:[%s1 + $0xc] sm:$0xf]
  %v31 = vld [vmem:[%s1 + $0x10] sm:$0xf]
  %v32 = vld [vmem:[%s1 + $0x14] sm:$0xf]
  %v33 = vld [vmem:[%s1 + $0x18] sm:$0xf]
  %v34 = vld [vmem:[%s1 + $0x1c] sm:$0xf]
  %v35 = vld [vmem:[%s1 + $0x20] sm:$0xf]
  %v36 = vld [vmem:[%s1 + $0x24] sm:$0xf]
  %v37 = vld [vmem:[%s1 + $0x28] sm:$0xf]
  %v38 = vld [vmem:[%s1 + $0x2c] sm:$0xf]
  %v39 = vld [vmem:[%s1 + $0x30] sm:$0xf]
  %v40 = vld [vmem:[%s1 + $0x34] sm:$0xf]
  %v41 = vld [vmem:[%s1 + $0x38] sm:$0xf]
  %v42 = vld [vmem:[%s1 + $0x3c] sm:$0xf]
  %v43 = vld [vmem:[%s1 + $0x40] sm:$0xf]
  %v44 = vld [vmem:[%s1 + $0x44] sm:$0xf]
  %v45 = vld [vmem:[%s1 + $0x48] sm:$0xf]
  %v46 = vld [vmem:[%s1 + $0x4c] sm:$0xf]
  %v47 = vld [vmem:[%s1 + $0x50] sm:$0xf]
  %v48 = vld [vmem:[%s1 + $0x54] sm:$0xf]
  %v49 = vld [vmem:[%s1 + $0x58] sm:$0xf]
  %v50 = vld [vmem:[%s1 + $0x5c] sm:$0xf]
  %v51 = vld [vmem:[%s1 + $0x60] sm:$0xf]
  %v52 = vld [vmem:[%s1 + $0x64] sm:$0xf]
  %v53 = vld [vmem:[%s1 + $0x68] sm:$0xf]
  %v54 = vld [vmem:[%s1 + $0x6c] sm:$0xf]
  %v55 = vld [vmem:[%s1 + $0x70] sm:$0xf]
  %v56 = vld [vmem:[%s1 + $0x74] sm:$0xf]
  %v57 = vld [vmem:[%s1 + $0x78] sm:$0xf]
  %v58 = vld [vmem:[%s1 + $0x7c] sm:$0xf]
  %v59 = vld [vmem:[%s1 + $0x80] sm:$0xf]
  %v60 = vld [vmem:[%s1 + $0x84] sm:$0xf]
  %v61 = vld [vmem:[%s1 + $0x88] sm:$0xf]
  %v62 = vld [vmem:[%s1 + $0x8c] sm:$0xf]
  %v63 = vld [vmem:[%s1 + $0x90] sm:$0xf]
  %v64 = vld [vmem:[%s1 + $0x94] sm:$0xf]
  %v65 = vld [vmem:[%s1 + $0x98] sm:$0xf]
  %v66 = vld [vmem:[%s1 + $0x9c] sm:$0xf]
  %v67 = vld [vmem:[%s1 + $0xa0] sm:$0xf]
  %v68 = vld [vmem:[%s1 + $0xa4] sm:$0xf]
  %v69 = vld [vmem:[%s1 + $0xa8] sm:$0xf]
  %v70 = vld [vmem:[%s1 + $0xac] sm:$0xf]
  %v71 = vld [vmem:[%s1 + $0xb0] sm:$0xf]
  %v72 = vld [vmem:[%s1 + $0xb4] sm:$0xf]
  %v73 = vld [vmem:[%s1 + $0xb8] sm:$0xf]
  %v74 = vld [vmem:[%s1 + $0xbc] sm:$0xf]
  %v75 = vld [vmem:[%s1 + $0xc0] sm:$0xf]
  %v76 = vld [vmem:[%s1 + $0xc4] sm:$0xf]
  %v77 = vld [vmem:[%s1 + $0xc8] sm:$0xf]
  %v78 = vld [vmem:[%s1 + $0xcc] sm:$0xf]
  %v79 = vld [vmem:[%s1 + $0xd0] sm:$0xf]
  %v80 = vld [vmem:[%s1 + $0xd4] sm:$0xf]
  %v81 = vld [vmem:[%s1 + $0xd8] sm:$0xf]
  %v82 = vld [vmem:[%s1 + $0xdc] sm:$0xf]
  %v83 = vld [vmem:[%s1 + $0xe0] sm:$0xf]
  %v84 = vld [vmem:[%s1 + $0xe4] sm:$0xf]
  %v85 = vld [vmem:[%s1 + $0xe8] sm:$0xf]
  %v86 = vld [vmem:[%s1 + $0xec] sm:$0xf]
  %v87 = vld [vmem:[%s1 + $0xf0] sm:$0xf]
  %v88 = vld [vmem:[%s1 + $0xf4] sm:$0xf]
  %v89 = vld [vmem:[%s1 + $0xf8] sm:$0xf]
  %v90 = vld [vmem:[%s1 + $0xfc] sm:$0xf]
  %v91 = vld [vmem:[%s1 + $0x100] sm:$0xf]
  %v92 = vld [vmem:[%s1 + $0x104] sm:$0xf]
  %v93 = vld [vmem:[%s1 + $0x108] sm:$0xf]
  %v94 = vld [vmem:[%s1 + $0x10c] sm:$0xf]
  %v95 = vld [vmem:[%s1 + $0x110] sm:$0xf]
  %v96 = vld [vmem:[%s1 + $0x114] sm:$0xf]
  %v97 = vld [vmem:[%s1 + $0x118] sm:$0xf]
  %v98 = vld [vmem:[%s1 + $0x11c] sm:$0xf]
  %v99 = vld [vmem:[%s1 + $0x120] sm:$0xf]
  %v100 = vld [vmem:[%s1 + $0x124] sm:$0xf]
  %v101 = vld [vmem:[%s1 + $0x128] sm:$0xf]
  %v102 = vld [vmem:[%s1 + $0x12c] sm:$0xf]
  %v103 = vld [vmem:[%s1 + $0x130] sm:$0xf]
  %v104 = vld [vmem:[%s1 + $0x134] sm:$0xf]
  %v105 = vld [vmem:[%s1 + $0x138] sm:$0xf]
  %v106 = vld [vmem:[%s1 + $0x13c] sm:$0xf]
  %v107 = vld [vmem:[%s1 + $0x140] sm:$0xf]
  %v108 = vld [vmem:[%s1 + $0x144] sm:$0xf]
  %v109 = vld [vmem:[%s1 + $0x148] sm:$0xf]
  %v110 = vld [vmem:[%s1 + $0x14c] sm:$0xf]
  %v111 = vld [vmem:[%s1 + $0x150] sm:$0xf]
  %v112 = vld [vmem:[%s1 + $0x154] sm:$0xf]
  %v113 = vld [vmem:[%s1 + $0x158] sm:$0xf]
  %v114 = vld [vmem:[%s1 + $0x15c] sm:$0xf]
  %v115 = vld [vmem:[%s1 + $0x160] sm:$0xf]
  %v116 = vld [vmem:[%s1 + $0x164] sm:$0xf]
  %v117 = vld [vmem:[%s1 + $0x168] sm:$0xf]
  %v118 = vld [vmem:[%s1 + $0x16c] sm:$0xf]
  %v119 = vld [vmem:[%s1 + $0x170] sm:$0xf]
  %v120 = vld [vmem:[%s1 + $0x174] sm:$0xf]
  %v121 = vld [vmem:[%s1 + $0x178] sm:$0xf]
  %v122 = vld [vmem:[%s1 + $0x17c] sm:$0xf]
  %v123 = vld [vmem:[%s1 + $0x180] sm:$0xf]
  %v124 = vld [vmem:[%s1 + $0x184] sm:$0xf]
  %v125 = vld [vmem:[%s1 + $0x188] sm:$0xf]
  %v126 = vld [vmem:[%s1 + $0x18c] sm:$0xf]
  %v127 = vld [vmem:[%s1 + $0x190] sm:$0xf]
  %v128 = vld [vmem:[%s1 + $0x194] sm:$0xf]
  %v129 = vld [vmem:[%s1 + $0x198] sm:$0xf]
  %v130 = vld [vmem:[%s1 + $0x19c] sm:$0xf]
  %v131 = vld [vmem:[%s1 + $0x1a0] sm:$0xf]
  %v132 = vld [vmem:[%s1 + $0x1a4] sm:$0xf]
  %v133 = vld [vmem:[%s1 + $0x1a8] sm:$0xf]
  %v134 = vld [vmem:[%s1 + $0x1ac] sm:$0xf]
  %v135 = vld [vmem:[%s1 + $0x1b0] sm:$0xf]
  %v136 = vld [vmem:[%s1 + $0x1b4] sm:$0xf]
  %v137 = vld [vmem:[%s1 + $0x1b8] sm:$0xf]
  %v138 = vld [vmem:[%s1 + $0x1bc] sm:$0xf]
  %v139 = vld [vmem:[%s1 + $0x1c0] sm:$0xf]
  %v140 = vld [vmem:[%s1 + $0x1c4] sm:$0xf]
  %v141 = vld [vmem:[%s1 + $0x1c8] sm:$0xf]
  %v142 = vld [vmem:[%s1 + $0x1cc] sm:$0xf]
  %v143 = vld [vmem:[%s1 + $0x1d0] sm:$0xf]
  %v144 = vld [vmem:[%s1 + $0x1d4] sm:$0xf]
  %v145 = vld [vmem:[%s1 + $0x1d8] sm:$0xf]
  %v146 = vld [vmem:[%s1 + $0x1dc] sm:$0xf]
  %v147 = vld [vmem:[%s1 + $0x1e0] sm:$0xf]
  %v148 = vld [vmem:[%s1 + $0x1e4] sm:$0xf]
  %v149 = vld [vmem:[%s1 + $0x1e8] sm:$0xf]
  %v150 = vld [vmem:[%s1 + $0x1ec] sm:$0xf]
  %v151 = vld [vmem:[%s1 + $0x1f0] sm:$0xf]
  %v152 = vld [vmem:[%s1 + $0x1f4] sm:$0xf]
  %v153 = vld [vmem:[%s1 + $0x1f8] sm:$0xf]
  %v154 = vld [vmem:[%s1 + $0x1fc] sm:$0xf]
  %v155 = vld [vmem:[#allocation2] sm:$0xff]
  %v156 = vld [vmem:[#allocation2 + $0x8] sm:$0xff]
  %v157 = vld [vmem:[#allocation2 + $0x10] sm:$0xff]
  %v158 = vld [vmem:[#allocation2 + $0x18] sm:$0xff]
  %v159 = vld [vmem:[#allocation2 + $0x20] sm:$0xff]
  %v160 = vld [vmem:[#allocation2 + $0x28] sm:$0xff]
  %v161 = vld [vmem:[#allocation2 + $0x30] sm:$0xff]
  %v162 = vld [vmem:[#allocation2 + $0x38] sm:$0xff]
  %v163 = vld [vmem:[%s0] sm:$0xff]
  %v164 = vld [vmem:[%s0 + $0x8] sm:$0xff]
  %v165 = vld [vmem:[%s0 + $0x10] sm:$0xff]
  %v166 = vld [vmem:[%s0 + $0x18] sm:$0xff]
  %v167 = vld [vmem:[%s0 + $0x20] sm:$0xff]
  %v168 = vld [vmem:[%s0 + $0x28] sm:$0xff]
  %v169 = vld [vmem:[%s0 + $0x30] sm:$0xff]
  %v170 = vld [vmem:[%s0 + $0x38] sm:$0xff]
  %v171 = vld [vmem:[%s0 + $0x40] sm:$0xff]
  %v172 = vld [vmem:[%s0 + $0x48] sm:$0xff]
  %v173 = vld [vmem:[%s0 + $0x50] sm:$0xff]
  %v174 = vld [vmem:[%s0 + $0x58] sm:$0xff]
  %v175 = vld [vmem:[%s0 + $0x60] sm:$0xff]
  %v176 = vld [vmem:[%s0 + $0x68] sm:$0xff]
  %v177 = vld [vmem:[%s0 + $0x70] sm:$0xff]
  %v178 = vld [vmem:[%s0 + $0x78] sm:$0xff]
  %v179 = vld [vmem:[%s0 + $0x80] sm:$0xff]
  %v180 = vld [vmem:[%s0 + $0x88] sm:$0xff]
  %v181 = vld [vmem:[%s0 + $0x90] sm:$0xff]
  %v182 = vld [vmem:[%s0 + $0x98] sm:$0xff]
  %v183 = vld [vmem:[%s0 + $0xa0] sm:$0xff]
  %v184 = vld [vmem:[%s0 + $0xa8] sm:$0xff]
  %v185 = vld [vmem:[%s0 + $0xb0] sm:$0xff]
  %v186 = vld [vmem:[%s0 + $0xb8] sm:$0xff]
  %v187 = vld [vmem:[%s0 + $0xc0] sm:$0xff]
  %v188 = vld [vmem:[%s0 + $0xc8] sm:$0xff]
  %v189 = vld [vmem:[%s0 + $0xd0] sm:$0xff]
  %v190 = vld [vmem:[%s0 + $0xd8] sm:$0xff]
  %v191 = vld [vmem:[%s0 + $0xe0] sm:$0xff]
  %v192 = vld [vmem:[%s0 + $0xe8] sm:$0xff]
  %v193 = vld [vmem:[%s0 + $0xf0] sm:$0xff]
  %v194 = vld [vmem:[%s0 + $0xf8] sm:$0xff]
  %v227 = vunpack.c.l.b16 %v163
  %v228 = vunpack.c.h.b16 %v163
  %v229 = vunpack.c.l.b16 %v164
  %v230 = vunpack.c.h.b16 %v164
  %v231 = vunpack.c.l.b16 %v165
  %v232 = vunpack.c.h.b16 %v165
  %v233 = vunpack.c.l.b16 %v166
  %v234 = vunpack.c.h.b16 %v166
  %v235 = vunpack.c.l.b16 %v167
  %v236 = vunpack.c.h.b16 %v167
  %v237 = vunpack.c.l.b16 %v168
  %v238 = vunpack.c.h.b16 %v168
  %v239 = vunpack.c.l.b16 %v169
  %v240 = vunpack.c.h.b16 %v169
  %v241 = vunpack.c.l.b16 %v170
  %v242 = vunpack.c.h.b16 %v170
  %v243 = vunpack.c.l.b16 %v171
  %v244 = vunpack.c.h.b16 %v171
  %v245 = vunpack.c.l.b16 %v172
  %v246 = vunpack.c.h.b16 %v172
  %v247 = vunpack.c.l.b16 %v173
  %v248 = vunpack.c.h.b16 %v173
  %v249 = vunpack.c.l.b16 %v174
  %v250 = vunpack.c.h.b16 %v174
  %v251 = vunpack.c.l.b16 %v175
  %v252 = vunpack.c.h.b16 %v175
  %v253 = vunpack.c.l.b16 %v176
  %v254 = vunpack.c.h.b16 %v176
  %v255 = vunpack.c.l.b16 %v177
  %v256 = vunpack.c.h.b16 %v177
  %v257 = vunpack.c.l.b16 %v178
  %v258 = vunpack.c.h.b16 %v178
  %v259 = vunpack.c.l.b16 %v179
  %v260 = vunpack.c.h.b16 %v179
  %v261 = vunpack.c.l.b16 %v180
  %v262 = vunpack.c.h.b16 %v180
  %v263 = vunpack.c.l.b16 %v181
  %v264 = vunpack.c.h.b16 %v181
  %v265 = vunpack.c.l.b16 %v182
  %v266 = vunpack.c.h.b16 %v182
  %v267 = vunpack.c.l.b16 %v183
  %v268 = vunpack.c.h.b16 %v183
  %v269 = vunpack.c.l.b16 %v184
  %v270 = vunpack.c.h.b16 %v184
  %v271 = vunpack.c.l.b16 %v185
  %v272 = vunpack.c.h.b16 %v185
  %v273 = vunpack.c.l.b16 %v186
  %v274 = vunpack.c.h.b16 %v186
  %v275 = vunpack.c.l.b16 %v187
  %v276 = vunpack.c.h.b16 %v187
  %v277 = vunpack.c.l.b16 %v188
  %v278 = vunpack.c.h.b16 %v188
  %v279 = vunpack.c.l.b16 %v189
  %v280 = vunpack.c.h.b16 %v189
  %v281 = vunpack.c.l.b16 %v190
  %v282 = vunpack.c.h.b16 %v190
  %v283 = vunpack.c.l.b16 %v191
  %v284 = vunpack.c.h.b16 %v191
  %v285 = vunpack.c.l.b16 %v192
  %v286 = vunpack.c.h.b16 %v192
  %v287 = vunpack.c.l.b16 %v193
  %v288 = vunpack.c.h.b16 %v193
  %v289 = vunpack.c.l.b16 %v194
  %v290 = vunpack.c.h.b16 %v194
  %v291 = vpack.c.b16 %v235, %v227
  %v292 = vpack.c.b16 %v236, %v228
  %v293 = vpack.c.b16 %v237, %v229
  %v294 = vpack.c.b16 %v238, %v230
  %v295 = vpack.c.b16 %v239, %v231
  %v296 = vpack.c.b16 %v240, %v232
  %v297 = vpack.c.b16 %v241, %v233
  %v298 = vpack.c.b16 %v242, %v234
  %v299 = vpack.c.b16 %v251, %v243
  %v300 = vpack.c.b16 %v252, %v244
  %v301 = vpack.c.b16 %v253, %v245
  %v302 = vpack.c.b16 %v254, %v246
  %v303 = vpack.c.b16 %v255, %v247
  %v304 = vpack.c.b16 %v256, %v248
  %v305 = vpack.c.b16 %v257, %v249
  %v306 = vpack.c.b16 %v258, %v250
  %v307 = vpack.c.b16 %v267, %v259
  %v308 = vpack.c.b16 %v268, %v260
  %v309 = vpack.c.b16 %v269, %v261
  %v310 = vpack.c.b16 %v270, %v262
  %v311 = vpack.c.b16 %v271, %v263
  %v312 = vpack.c.b16 %v272, %v264
  %v313 = vpack.c.b16 %v273, %v265
  %v314 = vpack.c.b16 %v274, %v266
  %v315 = vpack.c.b16 %v283, %v275
  %v316 = vpack.c.b16 %v284, %v276
  %v317 = vpack.c.b16 %v285, %v277
  %v318 = vpack.c.b16 %v286, %v278
  %v319 = vpack.c.b16 %v287, %v279
  %v320 = vpack.c.b16 %v288, %v280
  %v321 = vpack.c.b16 %v289, %v281
  %v322 = vpack.c.b16 %v290, %v282
  %v483 = vunpack.c.l.b16 %v27
  %v484 = vunpack.c.l.b16 %v28
  %v485 = vunpack.c.l.b16 %v29
  %v486 = vunpack.c.l.b16 %v30
  %v487 = vunpack.c.l.b16 %v31
  %v488 = vunpack.c.l.b16 %v32
  %v489 = vunpack.c.l.b16 %v33
  %v490 = vunpack.c.l.b16 %v34
  %v491 = vunpack.c.l.b16 %v35
  %v492 = vunpack.c.l.b16 %v36
  %v493 = vunpack.c.l.b16 %v37
  %v494 = vunpack.c.l.b16 %v38
  %v495 = vunpack.c.l.b16 %v39
  %v496 = vunpack.c.l.b16 %v40
  %v497 = vunpack.c.l.b16 %v41
  %v498 = vunpack.c.l.b16 %v42
  %v499 = vunpack.c.l.b16 %v43
  %v500 = vunpack.c.l.b16 %v44
  %v501 = vunpack.c.l.b16 %v45
  %v502 = vunpack.c.l.b16 %v46
  %v503 = vunpack.c.l.b16 %v47
  %v504 = vunpack.c.l.b16 %v48
  %v505 = vunpack.c.l.b16 %v49
  %v506 = vunpack.c.l.b16 %v50
  %v507 = vunpack.c.l.b16 %v51
  %v508 = vunpack.c.l.b16 %v52
  %v509 = vunpack.c.l.b16 %v53
  %v510 = vunpack.c.l.b16 %v54
  %v511 = vunpack.c.l.b16 %v55
  %v512 = vunpack.c.l.b16 %v56
  %v513 = vunpack.c.l.b16 %v57
  %v514 = vunpack.c.l.b16 %v58
  %v515 = vunpack.c.l.b16 %v59
  %v516 = vunpack.c.l.b16 %v60
  %v517 = vunpack.c.l.b16 %v61
  %v518 = vunpack.c.l.b16 %v62
  %v519 = vunpack.c.l.b16 %v63
  %v520 = vunpack.c.l.b16 %v64
  %v521 = vunpack.c.l.b16 %v65
  %v522 = vunpack.c.l.b16 %v66
  %v523 = vunpack.c.l.b16 %v67
  %v524 = vunpack.c.l.b16 %v68
  %v525 = vunpack.c.l.b16 %v69
  %v526 = vunpack.c.l.b16 %v70
  %v527 = vunpack.c.l.b16 %v71
  %v528 = vunpack.c.l.b16 %v72
  %v529 = vunpack.c.l.b16 %v73
  %v530 = vunpack.c.l.b16 %v74
  %v531 = vunpack.c.l.b16 %v75
  %v532 = vunpack.c.l.b16 %v76
  %v533 = vunpack.c.l.b16 %v77
  %v534 = vunpack.c.l.b16 %v78
  %v535 = vunpack.c.l.b16 %v79
  %v536 = vunpack.c.l.b16 %v80
  %v537 = vunpack.c.l.b16 %v81
  %v538 = vunpack.c.l.b16 %v82
  %v539 = vunpack.c.l.b16 %v83
  %v540 = vunpack.c.l.b16 %v84
  %v541 = vunpack.c.l.b16 %v85
  %v542 = vunpack.c.l.b16 %v86
  %v543 = vunpack.c.l.b16 %v87
  %v544 = vunpack.c.l.b16 %v88
  %v545 = vunpack.c.l.b16 %v89
  %v546 = vunpack.c.l.b16 %v90
  %v547 = vunpack.c.l.b16 %v91
  %v548 = vunpack.c.l.b16 %v92
  %v549 = vunpack.c.l.b16 %v93
  %v550 = vunpack.c.l.b16 %v94
  %v551 = vunpack.c.l.b16 %v95
  %v552 = vunpack.c.l.b16 %v96
  %v553 = vunpack.c.l.b16 %v97
  %v554 = vunpack.c.l.b16 %v98
  %v555 = vunpack.c.l.b16 %v99
  %v556 = vunpack.c.l.b16 %v100
  %v557 = vunpack.c.l.b16 %v101
  %v558 = vunpack.c.l.b16 %v102
  %v559 = vunpack.c.l.b16 %v103
  %v560 = vunpack.c.l.b16 %v104
  %v561 = vunpack.c.l.b16 %v105
  %v562 = vunpack.c.l.b16 %v106
  %v563 = vunpack.c.l.b16 %v107
  %v564 = vunpack.c.l.b16 %v108
  %v565 = vunpack.c.l.b16 %v109
  %v566 = vunpack.c.l.b16 %v110
  %v567 = vunpack.c.l.b16 %v111
  %v568 = vunpack.c.l.b16 %v112
  %v569 = vunpack.c.l.b16 %v113
  %v570 = vunpack.c.l.b16 %v114
  %v571 = vunpack.c.l.b16 %v115
  %v572 = vunpack.c.l.b16 %v116
  %v573 = vunpack.c.l.b16 %v117
  %v574 = vunpack.c.l.b16 %v118
  %v575 = vunpack.c.l.b16 %v119
  %v576 = vunpack.c.l.b16 %v120
  %v577 = vunpack.c.l.b16 %v121
  %v578 = vunpack.c.l.b16 %v122
  %v579 = vunpack.c.l.b16 %v123
  %v580 = vunpack.c.l.b16 %v124
  %v581 = vunpack.c.l.b16 %v125
  %v582 = vunpack.c.l.b16 %v126
  %v583 = vunpack.c.l.b16 %v127
  %v584 = vunpack.c.l.b16 %v128
  %v585 = vunpack.c.l.b16 %v129
  %v586 = vunpack.c.l.b16 %v130
  %v587 = vunpack.c.l.b16 %v131
  %v588 = vunpack.c.l.b16 %v132
  %v589 = vunpack.c.l.b16 %v133
  %v590 = vunpack.c.l.b16 %v134
  %v591 = vunpack.c.l.b16 %v135
  %v592 = vunpack.c.l.b16 %v136
  %v593 = vunpack.c.l.b16 %v137
  %v594 = vunpack.c.l.b16 %v138
  %v595 = vunpack.c.l.b16 %v139
  %v596 = vunpack.c.l.b16 %v140
  %v597 = vunpack.c.l.b16 %v141
  %v598 = vunpack.c.l.b16 %v142
  %v599 = vunpack.c.l.b16 %v143
  %v600 = vunpack.c.l.b16 %v144
  %v601 = vunpack.c.l.b16 %v145
  %v602 = vunpack.c.l.b16 %v146
  %v603 = vunpack.c.l.b16 %v147
  %v604 = vunpack.c.l.b16 %v148
  %v605 = vunpack.c.l.b16 %v149
  %v606 = vunpack.c.l.b16 %v150
  %v607 = vunpack.c.l.b16 %v151
  %v608 = vunpack.c.l.b16 %v152
  %v609 = vunpack.c.l.b16 %v153
  %v610 = vunpack.c.l.b16 %v154
  %v611 = vpack.c.b16 %v484, %v483
  %v612 = vpack.c.b16 %v486, %v485
  %v613 = vpack.c.b16 %v488, %v487
  %v614 = vpack.c.b16 %v490, %v489
  %v615 = vpack.c.b16 %v492, %v491
  %v616 = vpack.c.b16 %v494, %v493
  %v617 = vpack.c.b16 %v496, %v495
  %v618 = vpack.c.b16 %v498, %v497
  %v619 = vpack.c.b16 %v500, %v499
  %v620 = vpack.c.b16 %v502, %v501
  %v621 = vpack.c.b16 %v504, %v503
  %v622 = vpack.c.b16 %v506, %v505
  %v623 = vpack.c.b16 %v508, %v507
  %v624 = vpack.c.b16 %v510, %v509
  %v625 = vpack.c.b16 %v512, %v511
  %v626 = vpack.c.b16 %v514, %v513
  %v627 = vpack.c.b16 %v516, %v515
  %v628 = vpack.c.b16 %v518, %v517
  %v629 = vpack.c.b16 %v520, %v519
  %v630 = vpack.c.b16 %v522, %v521
  %v631 = vpack.c.b16 %v524, %v523
  %v632 = vpack.c.b16 %v526, %v525
  %v633 = vpack.c.b16 %v528, %v527
  %v634 = vpack.c.b16 %v530, %v529
  %v635 = vpack.c.b16 %v532, %v531
  %v636 = vpack.c.b16 %v534, %v533
  %v637 = vpack.c.b16 %v536, %v535
  %v638 = vpack.c.b16 %v538, %v537
  %v639 = vpack.c.b16 %v540, %v539
  %v640 = vpack.c.b16 %v542, %v541
  %v641 = vpack.c.b16 %v544, %v543
  %v642 = vpack.c.b16 %v546, %v545
  %v643 = vpack.c.b16 %v548, %v547
  %v644 = vpack.c.b16 %v550, %v549
  %v645 = vpack.c.b16 %v552, %v551
  %v646 = vpack.c.b16 %v554, %v553
  %v647 = vpack.c.b16 %v556, %v555
  %v648 = vpack.c.b16 %v558, %v557
  %v649 = vpack.c.b16 %v560, %v559
  %v650 = vpack.c.b16 %v562, %v561
  %v651 = vpack.c.b16 %v564, %v563
  %v652 = vpack.c.b16 %v566, %v565
  %v653 = vpack.c.b16 %v568, %v567
  %v654 = vpack.c.b16 %v570, %v569
  %v655 = vpack.c.b16 %v572, %v571
  %v656 = vpack.c.b16 %v574, %v573
  %v657 = vpack.c.b16 %v576, %v575
  %v658 = vpack.c.b16 %v578, %v577
  %v659 = vpack.c.b16 %v580, %v579
  %v660 = vpack.c.b16 %v582, %v581
  %v661 = vpack.c.b16 %v584, %v583
  %v662 = vpack.c.b16 %v586, %v585
  %v663 = vpack.c.b16 %v588, %v587
  %v664 = vpack.c.b16 %v590, %v589
  %v665 = vpack.c.b16 %v592, %v591
  %v666 = vpack.c.b16 %v594, %v593
  %v667 = vpack.c.b16 %v596, %v595
  %v668 = vpack.c.b16 %v598, %v597
  %v669 = vpack.c.b16 %v600, %v599
  %v670 = vpack.c.b16 %v602, %v601
  %v671 = vpack.c.b16 %v604, %v603
  %v672 = vpack.c.b16 %v606, %v605
  %v673 = vpack.c.b16 %v608, %v607
  %v674 = vpack.c.b16 %v610, %v609
  %739 = vmatprep.subr.bf16.mxu0 0
  %740 = vmatpush1.bf16.msra.mxu0 %v611
  %741 = vmatprep.subr.bf16.mxu0 0
  %742 = vmatpush1.bf16.msra.mxu0 %v612
  %743 = vmatprep.subr.bf16.mxu0 0
  %744 = vmatpush1.bf16.msra.mxu0 %v613
  %745 = vmatprep.subr.bf16.mxu0 0
  %746 = vmatpush1.bf16.msra.mxu0 %v614
  %747 = vmatprep.subr.bf16.mxu0 0
  %748 = vmatpush1.bf16.msra.mxu0 %v615
  %749 = vmatprep.subr.bf16.mxu0 0
  %750 = vmatpush1.bf16.msra.mxu0 %v616
  %751 = vmatprep.subr.bf16.mxu0 0
  %752 = vmatpush1.bf16.msra.mxu0 %v617
  %753 = vmatprep.subr.bf16.mxu0 0
  %754 = vmatpush1.bf16.msra.mxu0 %v618
  %755 = vmatprep.subr.bf16.mxu0 0
  %756 = vmatpush1.bf16.msra.mxu0 %v619
  %757 = vmatprep.subr.bf16.mxu0 0
  %758 = vmatpush1.bf16.msra.mxu0 %v620
  %759 = vmatprep.subr.bf16.mxu0 0
  %760 = vmatpush1.bf16.msra.mxu0 %v621
  %761 = vmatprep.subr.bf16.mxu0 0
  %762 = vmatpush1.bf16.msra.mxu0 %v622
  %763 = vmatprep.subr.bf16.mxu0 0
  %764 = vmatpush1.bf16.msra.mxu0 %v623
  %765 = vmatprep.subr.bf16.mxu0 0
  %766 = vmatpush1.bf16.msra.mxu0 %v624
  %767 = vmatprep.subr.bf16.mxu0 0
  %768 = vmatpush1.bf16.msra.mxu0 %v625
  %769 = vmatprep.subr.bf16.mxu0 0
  %770 = vmatpush1.bf16.msra.mxu0 %v626
  %771 = vmatprep.mubr.bf16.mxu0 %v292
  %772 = vmatmul.mubr.bf16.gmra.mrb[0].mxu0 %v291
  %v773 = vpop.f32.mrb[0].mxu0
  %v774 = vadd.f32 0.0, %v773
  %v775 = vpop.f32.mrb[0].mxu0
  %v776 = vpop.f32.mrb[0].mxu0
  %v777 = vadd.f32 0.0, %v776
  %v778 = vpop.f32.mrb[0].mxu0
  %779 = vmatprep.mubr.bf16.mxu0 %v300
  %780 = vmatmul.mubr.bf16.gmra.mrb[0].mxu0 %v299
  %v781 = vpop.f32.mrb[0].mxu0
  %v782 = vadd.f32 0.0, %v781
  %v783 = vpop.f32.mrb[0].mxu0
  %v784 = vpop.f32.mrb[0].mxu0
  %v785 = vadd.f32 0.0, %v784
  %v786 = vpop.f32.mrb[0].mxu0
  %787 = vmatprep.mubr.bf16.mxu0 %v308
  %788 = vmatmul.mubr.bf16.gmra.mrb[0].mxu0 %v307
  %v789 = vpop.f32.mrb[0].mxu0
  %v790 = vadd.f32 0.0, %v789
  %v791 = vpop.f32.mrb[0].mxu0
  %v792 = vpop.f32.mrb[0].mxu0
  %v793 = vadd.f32 0.0, %v792
  %v794 = vpop.f32.mrb[0].mxu0
  %795 = vmatprep.mubr.bf16.mxu0 %v316
  %796 = vmatmul.mubr.bf16.gmra.mrb[0].mxu0 %v315
  %v797 = vpop.f32.mrb[0].mxu0
  %v798 = vadd.f32 0.0, %v797
  %v799 = vpop.f32.mrb[0].mxu0
  %v800 = vpop.f32.mrb[0].mxu0
  %v801 = vadd.f32 0.0, %v800
  %v802 = vpop.f32.mrb[0].mxu0
  %803 = vdwg.mxu0
  %804 = vmatprep.subr.bf16.mxu0 0
  %805 = vmatpush1.bf16.msra.mxu0 %v627
  %806 = vmatprep.subr.bf16.mxu0 0
  %807 = vmatpush1.bf16.msra.mxu0 %v628
  %808 = vmatprep.subr.bf16.mxu0 0
  %809 = vmatpush1.bf16.msra.mxu0 %v629
  %810 = vmatprep.subr.bf16.mxu0 0
  %811 = vmatpush1.bf16.msra.mxu0 %v630
  %812 = vmatprep.subr.bf16.mxu0 0
  %813 = vmatpush1.bf16.msra.mxu0 %v631
  %814 = vmatprep.subr.bf16.mxu0 0
  %815 = vmatpush1.bf16.msra.mxu0 %v632
  %816 = vmatprep.subr.bf16.mxu0 0
  %817 = vmatpush1.bf16.msra.mxu0 %v633
  %818 = vmatprep.subr.bf16.mxu0 0
  %819 = vmatpush1.bf16.msra.mxu0 %v634
  %820 = vmatprep.subr.bf16.mxu0 0
  %821 = vmatpush1.bf16.msra.mxu0 %v635
  %822 = vmatprep.subr.bf16.mxu0 0
  %823 = vmatpush1.bf16.msra.mxu0 %v636
  %824 = vmatprep.subr.bf16.mxu0 0
  %825 = vmatpush1.bf16.msra.mxu0 %v637
  %826 = vmatprep.subr.bf16.mxu0 0
  %827 = vmatpush1.bf16.msra.mxu0 %v638
  %828 = vmatprep.subr.bf16.mxu0 0
  %829 = vmatpush1.bf16.msra.mxu0 %v639
  %830 = vmatprep.subr.bf16.mxu0 0
  %831 = vmatpush1.bf16.msra.mxu0 %v640
  %832 = vmatprep.subr.bf16.mxu0 0
  %833 = vmatpush1.bf16.msra.mxu0 %v641
  %834 = vmatprep.subr.bf16.mxu0 0
  %835 = vmatpush1.bf16.msra.mxu0 %v642
  %836 = vmatprep.mubr.bf16.mxu0 %v294
  %837 = vmatmul.mubr.bf16.gmra.mrb[0].mxu0 %v293
  %v838 = vpop.f32.mrb[0].mxu0
  %v839 = vadd.f32 %v774, %v838
  %v840 = vpop.f32.mrb[0].mxu0
  %v841 = vpop.f32.mrb[0].mxu0
  %v842 = vadd.f32 %v777, %v841
  %v843 = vpop.f32.mrb[0].mxu0
  %844 = vmatprep.mubr.bf16.mxu0 %v302
  %845 = vmatmul.mubr.bf16.gmra.mrb[0].mxu0 %v301
  %v846 = vpop.f32.mrb[0].mxu0
  %v847 = vadd.f32 %v782, %v846
  %v848 = vpop.f32.mrb[0].mxu0
  %v849 = vpop.f32.mrb[0].mxu0
  %v850 = vadd.f32 %v785, %v849
  %v851 = vpop.f32.mrb[0].mxu0
  %852 = vmatprep.mubr.bf16.mxu0 %v310
  %853 = vmatmul.mubr.bf16.gmra.mrb[0].mxu0 %v309
  %v854 = vpop.f32.mrb[0].mxu0
  %v855 = vadd.f32 %v790, %v854
  %v856 = vpop.f32.mrb[0].mxu0
  %v857 = vpop.f32.mrb[0].mxu0
  %v858 = vadd.f32 %v793, %v857
  %v859 = vpop.f32.mrb[0].mxu0
  %860 = vmatprep.mubr.bf16.mxu0 %v318
  %861 = vmatmul.mubr.bf16.gmra.mrb[0].mxu0 %v317
  %v862 = vpop.f32.mrb[0].mxu0
  %v863 = vadd.f32 %v798, %v862
  %v864 = vpop.f32.mrb[0].mxu0
  %v865 = vpop.f32.mrb[0].mxu0
  %v866 = vadd.f32 %v801, %v865
  %v867 = vpop.f32.mrb[0].mxu0
  %868 = vdwg.mxu0
  %869 = vmatprep.subr.bf16.mxu0 0
  %870 = vmatpush1.bf16.msra.mxu0 %v643
  %871 = vmatprep.subr.bf16.mxu0 0
  %872 = vmatpush1.bf16.msra.mxu0 %v644
  %873 = vmatprep.subr.bf16.mxu0 0
  %874 = vmatpush1.bf16.msra.mxu0 %v645
  %875 = vmatprep.subr.bf16.mxu0 0
  %876 = vmatpush1.bf16.msra.mxu0 %v646
  %877 = vmatprep.subr.bf16.mxu0 0
  %878 = vmatpush1.bf16.msra.mxu0 %v647
  %879 = vmatprep.subr.bf16.mxu0 0
  %880 = vmatpush1.bf16.msra.mxu0 %v648
  %881 = vmatprep.subr.bf16.mxu0 0
  %882 = vmatpush1.bf16.msra.mxu0 %v649
  %883 = vmatprep.subr.bf16.mxu0 0
  %884 = vmatpush1.bf16.msra.mxu0 %v650
  %885 = vmatprep.subr.bf16.mxu0 0
  %886 = vmatpush1.bf16.msra.mxu0 %v651
  %887 = vmatprep.subr.bf16.mxu0 0
  %888 = vmatpush1.bf16.msra.mxu0 %v652
  %889 = vmatprep.subr.bf16.mxu0 0
  %890 = vmatpush1.bf16.msra.mxu0 %v653
  %891 = vmatprep.subr.bf16.mxu0 0
  %892 = vmatpush1.bf16.msra.mxu0 %v654
  %893 = vmatprep.subr.bf16.mxu0 0
  %894 = vmatpush1.bf16.msra.mxu0 %v655
  %895 = vmatprep.subr.bf16.mxu0 0
  %896 = vmatpush1.bf16.msra.mxu0 %v656
  %897 = vmatprep.subr.bf16.mxu0 0
  %898 = vmatpush1.bf16.msra.mxu0 %v657
  %899 = vmatprep.subr.bf16.mxu0 0
  %900 = vmatpush1.bf16.msra.mxu0 %v658
  %901 = vmatprep.mubr.bf16.mxu0 %v296
  %902 = vmatmul.mubr.bf16.gmra.mrb[0].mxu0 %v295
  %v903 = vpop.f32.mrb[0].mxu0
  %v904 = vadd.f32 %v839, %v903
  %v905 = vpop.f32.mrb[0].mxu0
  %v906 = vpop.f32.mrb[0].mxu0
  %v907 = vadd.f32 %v842, %v906
  %v908 = vpop.f32.mrb[0].mxu0
  %909 = vmatprep.mubr.bf16.mxu0 %v304
  %910 = vmatmul.mubr.bf16.gmra.mrb[0].mxu0 %v303
  %v911 = vpop.f32.mrb[0].mxu0
  %v912 = vadd.f32 %v847, %v911
  %v913 = vpop.f32.mrb[0].mxu0
  %v914 = vpop.f32.mrb[0].mxu0
  %v915 = vadd.f32 %v850, %v914
  %v916 = vpop.f32.mrb[0].mxu0
  %917 = vmatprep.mubr.bf16.mxu0 %v312
  %918 = vmatmul.mubr.bf16.gmra.mrb[0].mxu0 %v311
  %v919 = vpop.f32.mrb[0].mxu0
  %v920 = vadd.f32 %v855, %v919
  %v921 = vpop.f32.mrb[0].mxu0
  %v922 = vpop.f32.mrb[0].mxu0
  %v923 = vadd.f32 %v858, %v922
  %v924 = vpop.f32.mrb[0].mxu0
  %925 = vmatprep.mubr.bf16.mxu0 %v320
  %926 = vmatmul.mubr.bf16.gmra.mrb[0].mxu0 %v319
  %v927 = vpop.f32.mrb[0].mxu0
  %v928 = vadd.f32 %v863, %v927
  %v929 = vpop.f32.mrb[0].mxu0
  %v930 = vpop.f32.mrb[0].mxu0
  %v931 = vadd.f32 %v866, %v930
  %v932 = vpop.f32.mrb[0].mxu0
  %933 = vdwg.mxu0
  %934 = vmatprep.subr.bf16.mxu0 0
  %935 = vmatpush1.bf16.msra.mxu0 %v659
  %936 = vmatprep.subr.bf16.mxu0 0
  %937 = vmatpush1.bf16.msra.mxu0 %v660
  %938 = vmatprep.subr.bf16.mxu0 0
  %939 = vmatpush1.bf16.msra.mxu0 %v661
  %940 = vmatprep.subr.bf16.mxu0 0
  %941 = vmatpush1.bf16.msra.mxu0 %v662
  %942 = vmatprep.subr.bf16.mxu0 0
  %943 = vmatpush1.bf16.msra.mxu0 %v663
  %944 = vmatprep.subr.bf16.mxu0 0
  %945 = vmatpush1.bf16.msra.mxu0 %v664
  %946 = vmatprep.subr.bf16.mxu0 0
  %947 = vmatpush1.bf16.msra.mxu0 %v665
  %948 = vmatprep.subr.bf16.mxu0 0
  %949 = vmatpush1.bf16.msra.mxu0 %v666
  %950 = vmatprep.subr.bf16.mxu0 0
  %951 = vmatpush1.bf16.msra.mxu0 %v667
  %952 = vmatprep.subr.bf16.mxu0 0
  %953 = vmatpush1.bf16.msra.mxu0 %v668
  %954 = vmatprep.subr.bf16.mxu0 0
  %955 = vmatpush1.bf16.msra.mxu0 %v669
  %956 = vmatprep.subr.bf16.mxu0 0
  %957 = vmatpush1.bf16.msra.mxu0 %v670
  %958 = vmatprep.subr.bf16.mxu0 0
  %959 = vmatpush1.bf16.msra.mxu0 %v671
  %960 = vmatprep.subr.bf16.mxu0 0
  %961 = vmatpush1.bf16.msra.mxu0 %v672
  %962 = vmatprep.subr.bf16.mxu0 0
  %963 = vmatpush1.bf16.msra.mxu0 %v673
  %964 = vmatprep.subr.bf16.mxu0 0
  %965 = vmatpush1.bf16.msra.mxu0 %v674
  %966 = vmatprep.mubr.bf16.mxu0 %v298
  %967 = vmatmul.mubr.bf16.gmra.mrb[0].mxu0 %v297
  %v968 = vpop.f32.mrb[0].mxu0
  %v969 = vadd.f32 %v904, %v968
  %v970 = vpop.f32.mrb[0].mxu0
  %v971 = vpop.f32.mrb[0].mxu0
  %v972 = vadd.f32 %v907, %v971
  %v973 = vpop.f32.mrb[0].mxu0
  %974 = vmatprep.mubr.bf16.mxu0 %v306
  %975 = vmatmul.mubr.bf16.gmra.mrb[0].mxu0 %v305
  %v976 = vpop.f32.mrb[0].mxu0
  %v977 = vadd.f32 %v912, %v976
  %v978 = vpop.f32.mrb[0].mxu0
  %v979 = vpop.f32.mrb[0].mxu0
  %v980 = vadd.f32 %v915, %v979
  %v981 = vpop.f32.mrb[0].mxu0
  %982 = vmatprep.mubr.bf16.mxu0 %v314
  %983 = vmatmul.mubr.bf16.gmra.mrb[0].mxu0 %v313
  %v984 = vpop.f32.mrb[0].mxu0
  %v985 = vadd.f32 %v920, %v984
  %v986 = vpop.f32.mrb[0].mxu0
  %v987 = vpop.f32.mrb[0].mxu0
  %v988 = vadd.f32 %v923, %v987
  %v989 = vpop.f32.mrb[0].mxu0
  %990 = vmatprep.mubr.bf16.mxu0 %v322
  %991 = vmatmul.mubr.bf16.gmra.mrb[0].mxu0 %v321
  %v992 = vpop.f32.mrb[0].mxu0
  %v993 = vadd.f32 %v928, %v992
  %v994 = vpop.f32.mrb[0].mxu0
  %v995 = vpop.f32.mrb[0].mxu0
  %v996 = vadd.f32 %v931, %v995
  %v997 = vpop.f32.mrb[0].mxu0
  %998 = vdwg.mxu0
  %v999 = vadd.f32 %v155, %v969
  %v1000 = vadd.f32 %v156, %v972
  %v1001 = vadd.f32 %v157, %v977
  %v1002 = vadd.f32 %v158, %v980
  %v1003 = vadd.f32 %v159, %v985
  %v1004 = vadd.f32 %v160, %v988
  %v1005 = vadd.f32 %v161, %v993
  %v1006 = vadd.f32 %v162, %v996
  %1007 = vst [vmem:[#allocation2] sm:$0xff] %v999
  %1008 = vst [vmem:[#allocation2 + $0x8] sm:$0xff] %v1000
  %1009 = vst [vmem:[#allocation2 + $0x10] sm:$0xff] %v1001
  %1010 = vst [vmem:[#allocation2 + $0x18] sm:$0xff] %v1002
  %1011 = vst [vmem:[#allocation2 + $0x20] sm:$0xff] %v1003
  %1012 = vst [vmem:[#allocation2 + $0x28] sm:$0xff] %v1004
  %1013 = vst [vmem:[#allocation2 + $0x30] sm:$0xff] %v1005
  %1014 = vst [vmem:[#allocation2 + $0x38] sm:$0xff] %v1006
  // Predicated region
  $region18: #{_lambda_.9} parent=0 // pred_check
    %p1015 = pneg %p15
  $region19: #{_lambda_.9} parent=0 // pred_check_branch
    %1017 = sbr.rel (%p1015) target = $region21
  $region20: #{_lambda_.9} parent=0 // pred_region
    %v1018 = vld [vmem:[#allocation2] sm:$0xff]
    %v1019 = vld [vmem:[#allocation2 + $0x8] sm:$0xff]
    %v1020 = vld [vmem:[#allocation2 + $0x10] sm:$0xff]
    %v1021 = vld [vmem:[#allocation2 + $0x18] sm:$0xff]
    %v1022 = vld [vmem:[#allocation2 + $0x20] sm:$0xff]
    %v1023 = vld [vmem:[#allocation2 + $0x28] sm:$0xff]
    %v1024 = vld [vmem:[#allocation2 + $0x30] sm:$0xff]
    %v1025 = vld [vmem:[#allocation2 + $0x38] sm:$0xff]
    %v1026 = vld [vmem:[%s2] sm:$0x1]
    %v1028 = vlaneseq
    %v1029 = vshrl.u32 %v1028, 7
    %v1030 = vsub.s32 0, %v1029
    %v1031 = vrot.slane %v1026, %v1030
    %v1033 = vadd.f32 %v1018, %v1031
    %v1034 = vadd.f32 %v1019, %v1031
    %v1035 = vadd.f32 %v1020, %v1031
    %v1036 = vadd.f32 %v1021, %v1031
    %v1037 = vadd.f32 %v1022, %v1031
    %v1038 = vadd.f32 %v1023, %v1031
    %v1039 = vadd.f32 %v1024, %v1031
    %v1040 = vadd.f32 %v1025, %v1031
    %1041 = vst [vmem:[%s3] sm:$0xff] %v1033
    %1042 = vst [vmem:[%s3 + $0x8] sm:$0xff] %v1034
    %1043 = vst [vmem:[%s3 + $0x10] sm:$0xff] %v1035
    %1044 = vst [vmem:[%s3 + $0x18] sm:$0xff] %v1036
    %1045 = vst [vmem:[%s3 + $0x20] sm:$0xff] %v1037
    %1046 = vst [vmem:[%s3 + $0x28] sm:$0xff] %v1038
    %1047 = vst [vmem:[%s3 + $0x30] sm:$0xff] %v1039
    %1048 = vst [vmem:[%s3 + $0x38] sm:$0xff] %v1040
  $region21: #{_lambda_.9} parent=0 // pred_fallthru
    _
  // Predicated region
  $region22: #{_lambda_.9} parent=0 // pred_check
    _
  $region23: #{_lambda_.9} parent=0 // pred_check_branch
    %1050 = sbr.rel (0) target = $region25
  $region24: #{_lambda_.9} parent=0 // pred_region
    _
  $region25: #{_lambda_.9} parent=0 // pred_fallthru
    _
  // Predicated region
  $region26: #{_lambda_.9} parent=0 // pred_check
    _
  $region27: #{_lambda_.9} parent=0 // pred_check_branch
    %1052 = sbr.rel (0) target = $region29
  $region28: #{_lambda_.9} parent=0 // pred_region
    _
  $region29: #{_lambda_.9} parent=0 // pred_fallthru
    _

</llo_original>
